<compile_context>
chip_gen: v6e
topology: v6e:2x2x1
jax: 0.10.0
libtpu: 0.0.40
codegen_flags: <defaults>
</compile_context>

<pallas_src>
import functools

import jax
import jax.numpy as jnp
from jax.experimental import pallas as pl
from jax.experimental.pallas import tpu as pltpu

# --- model hyperparameters (small, consistent with the module) ---------------
LATENT_DIM = 32
CHANNELS = 1
IMG_SIZE = 16
IMG_FLAT = CHANNELS * IMG_SIZE * IMG_SIZE   # 256
HIDDEN = 512
BATCH = 256                                  # demo batch (multiple of TILE_M)
TILE_M = 128                                 # batch rows per grid step
BN_EPS = 1e-5
LRELU_SLOPE = 0.2
VMEM_LIMIT = 8 * 1024 * 1024                 # 8 MiB — plenty, safe on v7x


def _leaky_relu(x, slope=LRELU_SLOPE):
    return jnp.where(x > 0, x, slope * x)


# -----------------------------------------------------------------------------
# Pass 1: per-tile hidden activations + full-batch BN statistics (sum, sum-of-sq)
# -----------------------------------------------------------------------------
def _hidden_stats_kernel(z_ref, w1_ref, b1_ref, w2_ref,
                         h2_ref, sum_ref, sq_ref):
    # Zero the resident stat accumulators on the first batch tile.
    @pl.when(pl.program_id(0) == 0)
    def _():
        sum_ref[...] = jnp.zeros_like(sum_ref)
        sq_ref[...] = jnp.zeros_like(sq_ref)

    # Layer 1: Linear(latent -> 512) + LeakyReLU(0.2)   (bf16 MXU, f32 accumulate)
    z = z_ref[...].astype(jnp.bfloat16)
    h1 = jnp.dot(z, w1_ref[...], preferred_element_type=jnp.float32) + b1_ref[...]
    h1 = _leaky_relu(h1)

    # Layer 2: Linear(512 -> 512).  The b2 bias is dropped on purpose: it cancels
    # exactly under the training-mode BatchNorm mean subtraction that follows.
    h2 = jnp.dot(h1.astype(jnp.bfloat16), w2_ref[...],
                 preferred_element_type=jnp.float32)

    h2_ref[...] = h2
    sum_ref[...] += jnp.sum(h2, axis=0, keepdims=True)
    sq_ref[...] += jnp.sum(h2 * h2, axis=0, keepdims=True)


# -----------------------------------------------------------------------------
# Pass 2: BatchNorm (full-batch stats) + LeakyReLU + Linear(512 -> C*H*W) + Tanh
# -----------------------------------------------------------------------------
def _bn_out_kernel(inv_batch, h2_ref, sum_ref, sq_ref, gamma_ref, beta_ref,
                   w3_ref, b3_ref, out_ref):
    h2 = h2_ref[...]
    mean = sum_ref[...] * inv_batch
    var = sq_ref[...] * inv_batch - mean * mean       # biased variance (PyTorch BN train)
    inv_std = jax.lax.rsqrt(var + BN_EPS)

    h2n = (h2 - mean) * (inv_std * gamma_ref[...]) + beta_ref[...]
    h2n = _leaky_relu(h2n)

    h3 = jnp.dot(h2n.astype(jnp.bfloat16), w3_ref[...],
                 preferred_element_type=jnp.float32) + b3_ref[...]
    out_ref[...] = jnp.tanh(h3).astype(out_ref.dtype)


# -----------------------------------------------------------------------------
# Wrapper
# -----------------------------------------------------------------------------
@jax.jit
def decoder_forward(z, params):
    """z: (B, LATENT_DIM) float32 -> img: (B, CHANNELS, IMG_SIZE, IMG_SIZE)."""
    w1, b1, w2, gamma, beta, w3, b3 = params
    B = z.shape[0]
    tm = TILE_M if (B % TILE_M == 0) else B           # fall back to one tile
    n_tiles = B // tm

    def tiled(cols):
        return pl.BlockSpec((tm, cols), lambda t: (t, 0))

    def const(shape):
        return pl.BlockSpec(shape, lambda t: (0, 0))   # weights stay VMEM-resident

    # ---- Pass 1: hidden activations + batch statistics -----------------------
    h2, h_sum, h_sq = pl.pallas_call(
        _hidden_stats_kernel,
        grid=(n_tiles,),
        in_specs=[tiled(LATENT_DIM),
                  const((LATENT_DIM, HIDDEN)), const((1, HIDDEN)),
                  const((HIDDEN, HIDDEN))],
        out_specs=[tiled(HIDDEN), const((1, HIDDEN)), const((1, HIDDEN))],
        out_shape=[jax.ShapeDtypeStruct((B, HIDDEN), jnp.float32),
                   jax.ShapeDtypeStruct((1, HIDDEN), jnp.float32),
                   jax.ShapeDtypeStruct((1, HIDDEN), jnp.float32)],
        compiler_params=pltpu.CompilerParams(
            dimension_semantics=("arbitrary",),        # stats accumulate over tiles
            vmem_limit_bytes=VMEM_LIMIT),
    )(z, w1, b1, w2)

    # ---- Pass 2: BatchNorm + LeakyReLU + output projection + Tanh ------------
    img_flat = pl.pallas_call(
        functools.partial(_bn_out_kernel, 1.0 / B),
        grid=(n_tiles,),
        in_specs=[tiled(HIDDEN),
                  const((1, HIDDEN)), const((1, HIDDEN)),
                  const((1, HIDDEN)), const((1, HIDDEN)),
                  const((HIDDEN, IMG_FLAT)), const((1, IMG_FLAT))],
        out_specs=tiled(IMG_FLAT),
        out_shape=jax.ShapeDtypeStruct((B, IMG_FLAT), jnp.float32),
        compiler_params=pltpu.CompilerParams(
            dimension_semantics=("parallel",),         # tiles independent (v7x 2 TCs)
            vmem_limit_bytes=VMEM_LIMIT),
    )(h2, h_sum, h_sq, gamma, beta, w3, b3)

    # PyTorch: img_flat.view(B, *img_shape) -> NCHW
    return img_flat.reshape(B, CHANNELS, IMG_SIZE, IMG_SIZE)


# -----------------------------------------------------------------------------
# Parameters & pure-JAX reference
# -----------------------------------------------------------------------------
def init_params(key):
    """Deterministic PyTorch-style (uniform fan_in) initialization.
    Weights are stored in bfloat16 (halves the dominant HBM weight DMA);
    biases / BN affine stay float32."""
    ks = jax.random.split(key, 6)

    def linear_init(kw, kb, fan_in, fan_out):
        bound = 1.0 / (fan_in ** 0.5)
        w = jax.random.uniform(kw, (fan_in, fan_out), jnp.float32, -bound, bound)
        b = jax.random.uniform(kb, (1, fan_out), jnp.float32, -bound, bound)
        return w, b

    w1, b1 = linear_init(ks[0], ks[1], LATENT_DIM, HIDDEN)
    w2, _b2 = linear_init(ks[2], ks[3], HIDDEN, HIDDEN)  # b2 cancels under BN -> dropped
    w3, b3 = linear_init(ks[4], ks[5], HIDDEN, IMG_FLAT)
    gamma = jnp.ones((1, HIDDEN), jnp.float32)            # BatchNorm1d affine weight
    beta = jnp.zeros((1, HIDDEN), jnp.float32)            # BatchNorm1d affine bias
    return (w1.astype(jnp.bfloat16), b1,
            w2.astype(jnp.bfloat16),
            gamma, beta,
            w3.astype(jnp.bfloat16), b3)


def decoder_reference(z, params):
    """Pure-JAX f32 reference (weights up-cast) for a correctness check."""
    w1, b1, w2, gamma, beta, w3, b3 = params
    w1f, w2f, w3f = (w.astype(jnp.float32) for w in (w1, w2, w3))
    h1 = jnp.dot(z, w1f) + b1
    h1 = jnp.where(h1 > 0, h1, LRELU_SLOPE * h1)
    h2 = jnp.dot(h1, w2f)
    mean = jnp.mean(h2, axis=0, keepdims=True)
    var = jnp.mean((h2 - mean) ** 2, axis=0, keepdims=True)
    h2n = (h2 - mean) * jax.lax.rsqrt(var + BN_EPS) * gamma + beta
    h2n = jnp.where(h2n > 0, h2n, LRELU_SLOPE * h2n)
    h3 = jnp.dot(h2n, w3f) + b3
    return jnp.tanh(h3).reshape(z.shape[0], CHANNELS, IMG_SIZE, IMG_SIZE)


if __name__ == "__main__":
    key = jax.random.PRNGKey(0)
    k_params, k_z = jax.random.split(key)
    params = init_params(k_params)
    z = jax.random.normal(k_z, (BATCH, LATENT_DIM), jnp.float32)

    img = jax.block_until_ready(decoder_forward(z, params))

    assert img.shape == (BATCH, CHANNELS, IMG_SIZE, IMG_SIZE), img.shape
    assert bool(jnp.all(jnp.abs(img) <= 1.0)), "tanh output out of range"

    ref = jax.block_until_ready(decoder_reference(z, params))
    max_err = float(jnp.max(jnp.abs(img - ref)))
    assert max_err < 7.5e-2, f"kernel mismatch vs f32 reference: max_err={max_err}"

    print("KERNEL_OK")
</pallas_src>

<mosaic_0001>
module attributes {stable_mosaic.version = 11 : i64} {
  func.func @_hidden_stats_kernel(%arg0: i32, %arg1: memref<128x32xf32, #tpu.memory_space<vmem>>, %arg2: memref<32x512xbf16, #tpu.memory_space<vmem>>, %arg3: memref<1x512xf32, #tpu.memory_space<vmem>>, %arg4: memref<512x512xbf16, #tpu.memory_space<vmem>>, %arg5: memref<128x512xf32, #tpu.memory_space<vmem>>, %arg6: memref<1x512xf32, #tpu.memory_space<vmem>>, %arg7: memref<1x512xf32, #tpu.memory_space<vmem>>) attributes {dimension_semantics = [#tpu.dimension_semantics<arbitrary>], iteration_bounds = array<i64: 2>, scalar_prefetch = 0 : i64, scratch_operands = 0 : i64, tpu.core_type = #tpu.core_type<tc>, window_params = [{transform_indices = @transform_0, window_bounds = array<i64: 128, 32>}, {pipeline_mode = #tpu.pipeline_mode<synchronous>, transform_indices = @transform_1, window_bounds = array<i64: 32, 512>}, {pipeline_mode = #tpu.pipeline_mode<synchronous>, transform_indices = @transform_2, window_bounds = array<i64: 1, 512>}, {pipeline_mode = #tpu.pipeline_mode<synchronous>, transform_indices = @transform_3, window_bounds = array<i64: 512, 512>}, {transform_indices = @transform_4, window_bounds = array<i64: 128, 512>}, {pipeline_mode = #tpu.pipeline_mode<synchronous>, transform_indices = @transform_5, window_bounds = array<i64: 1, 512>}, {pipeline_mode = #tpu.pipeline_mode<synchronous>, transform_indices = @transform_6, window_bounds = array<i64: 1, 512>}]} {
    %c0_i32 = arith.constant 0 : i32
    %0 = arith.cmpi eq, %arg0, %c0_i32 : i32
    %1 = arith.extui %0 : i1 to i32
    %c0_i32_0 = arith.constant 0 : i32
    %2 = arith.cmpi ne, %1, %c0_i32_0 : i32
    scf.if %2 {
      %cst_23 = arith.constant 0.000000e+00 : f32
      %30 = vector.broadcast %cst_23 : f32 to vector<1x512xf32>
      %c0_24 = arith.constant 0 : index
      %c0_25 = arith.constant 0 : index
      %31 = vector.load %arg6[%c0_24, %c0_25] : memref<1x512xf32, #tpu.memory_space<vmem>>, vector<1x512xf32>
      tpu.vector_store %arg6[%c0_24, %c0_25], %30 {strides = array<i32>} : memref<1x512xf32, #tpu.memory_space<vmem>>, vector<1x512xf32>,
      %cst_26 = arith.constant 0.000000e+00 : f32
      %32 = vector.broadcast %cst_26 : f32 to vector<1x512xf32>
      %c0_27 = arith.constant 0 : index
      %c0_28 = arith.constant 0 : index
      %33 = vector.load %arg7[%c0_27, %c0_28] : memref<1x512xf32, #tpu.memory_space<vmem>>, vector<1x512xf32>
      tpu.vector_store %arg7[%c0_27, %c0_28], %32 {strides = array<i32>} : memref<1x512xf32, #tpu.memory_space<vmem>>, vector<1x512xf32>,
    } else {
    }
    %c0 = arith.constant 0 : index
    %c0_1 = arith.constant 0 : index
    %3 = vector.load %arg1[%c0, %c0_1] : memref<128x32xf32, #tpu.memory_space<vmem>>, vector<128x32xf32>
    %4 = arith.truncf %3 : vector<128x32xf32> to vector<128x32xbf16>
    %c0_2 = arith.constant 0 : index
    %c0_3 = arith.constant 0 : index
    %5 = vector.load %arg2[%c0_2, %c0_3] : memref<32x512xbf16, #tpu.memory_space<vmem>>, vector<32x512xbf16>
    %cst = arith.constant dense<0.000000e+00> : vector<128x512xf32>
    %6 = tpu.matmul %4, %5, %cst {dimension_numbers = #tpu.dot_dimension_numbers<[1], [0], [0], [1], [0, 0, 1, 1], [], []>} : vector<128x32xbf16>, vector<32x512xbf16>, vector<128x512xf32> -> vector<128x512xf32>
    %c0_4 = arith.constant 0 : index
    %c0_5 = arith.constant 0 : index
    %7 = vector.load %arg3[%c0_4, %c0_5] : memref<1x512xf32, #tpu.memory_space<vmem>>, vector<1x512xf32>
    %8 = vector.broadcast %7 : vector<1x512xf32> to vector<128x512xf32>
    %9 = arith.addf %6, %8 : vector<128x512xf32>
    %cst_6 = arith.constant 0.000000e+00 : f32
    %10 = vector.broadcast %cst_6 : f32 to vector<128x512xf32>
    %11 = arith.cmpf ogt, %9, %10 : vector<128x512xf32>
    %cst_7 = arith.constant 2.000000e-01 : f32
    %12 = vector.broadcast %cst_7 : f32 to vector<128x512xf32>
    %13 = arith.mulf %12, %9 : vector<128x512xf32>
    %14 = arith.select %11, %9, %13 : vector<128x512xi1>, vector<128x512xf32>
    %15 = arith.truncf %14 : vector<128x512xf32> to vector<128x512xbf16>
    %c0_8 = arith.constant 0 : index
    %c0_9 = arith.constant 0 : index
    %16 = vector.load %arg4[%c0_8, %c0_9] : memref<512x512xbf16, #tpu.memory_space<vmem>>, vector<512x512xbf16>
    %cst_10 = arith.constant dense<0.000000e+00> : vector<128x512xf32>
    %17 = tpu.matmul %15, %16, %cst_10 {dimension_numbers = #tpu.dot_dimension_numbers<[1], [0], [0], [1], [0, 0, 1, 1], [], []>} : vector<128x512xbf16>, vector<512x512xbf16>, vector<128x512xf32> -> vector<128x512xf32>
    %c0_11 = arith.constant 0 : index
    %c0_12 = arith.constant 0 : index
    %18 = vector.load %arg5[%c0_11, %c0_12] : memref<128x512xf32, #tpu.memory_space<vmem>>, vector<128x512xf32>
    tpu.vector_store %arg5[%c0_11, %c0_12], %17 {strides = array<i32>} : memref<128x512xf32, #tpu.memory_space<vmem>>, vector<128x512xf32>,
    %c0_13 = arith.constant 0 : index
    %c0_14 = arith.constant 0 : index
    %19 = vector.load %arg6[%c0_13, %c0_14] : memref<1x512xf32, #tpu.memory_space<vmem>>, vector<1x512xf32>
    %cst_15 = arith.constant dense<0.000000e+00> : vector<512xf32>
    %20 = vector.multi_reduction <add>, %17, %cst_15 [0] : vector<128x512xf32> to vector<512xf32>
    %21 = vector.shape_cast %20 : vector<512xf32> to vector<1x512xf32>
    %22 = arith.addf %19, %21 : vector<1x512xf32>
    %c0_16 = arith.constant 0 : index
    %c0_17 = arith.constant 0 : index
    %23 = vector.load %arg6[%c0_16, %c0_17] : memref<1x512xf32, #tpu.memory_space<vmem>>, vector<1x512xf32>
    tpu.vector_store %arg6[%c0_16, %c0_17], %22 {strides = array<i32>} : memref<1x512xf32, #tpu.memory_space<vmem>>, vector<1x512xf32>,
    %c0_18 = arith.constant 0 : index
    %c0_19 = arith.constant 0 : index
    %24 = vector.load %arg7[%c0_18, %c0_19] : memref<1x512xf32, #tpu.memory_space<vmem>>, vector<1x512xf32>
    %25 = arith.mulf %17, %17 : vector<128x512xf32>
    %cst_20 = arith.constant dense<0.000000e+00> : vector<512xf32>
    %26 = vector.multi_reduction <add>, %25, %cst_20 [0] : vector<128x512xf32> to vector<512xf32>
    %27 = vector.shape_cast %26 : vector<512xf32> to vector<1x512xf32>
    %28 = arith.addf %24, %27 : vector<1x512xf32>
    %c0_21 = arith.constant 0 : index
    %c0_22 = arith.constant 0 : index
    %29 = vector.load %arg7[%c0_21, %c0_22] : memref<1x512xf32, #tpu.memory_space<vmem>>, vector<1x512xf32>
    tpu.vector_store %arg7[%c0_21, %c0_22], %28 {strides = array<i32>} : memref<1x512xf32, #tpu.memory_space<vmem>>, vector<1x512xf32>,
    return
  }
  func.func @transform_0(%arg0: i32) -> (i32, i32) {
    %c0_i32 = arith.constant 0 : i32
    %c0_i32_0 = arith.constant 0 : i32
    return %arg0, %c0_i32 : i32, i32
  }
  func.func @transform_1(%arg0: i32) -> (i32, i32) {
    %c0_i32 = arith.constant 0 : i32
    %c0_i32_0 = arith.constant 0 : i32
    %c0_i32_1 = arith.constant 0 : i32
    return %c0_i32, %c0_i32_0 : i32, i32
  }
  func.func @transform_2(%arg0: i32) -> (i32, i32) {
    %c0_i32 = arith.constant 0 : i32
    %c0_i32_0 = arith.constant 0 : i32
    %c0_i32_1 = arith.constant 0 : i32
    return %c0_i32, %c0_i32_0 : i32, i32
  }
  func.func @transform_3(%arg0: i32) -> (i32, i32) {
    %c0_i32 = arith.constant 0 : i32
    %c0_i32_0 = arith.constant 0 : i32
    %c0_i32_1 = arith.constant 0 : i32
    return %c0_i32, %c0_i32_0 : i32, i32
  }
  func.func @transform_4(%arg0: i32) -> (i32, i32) {
    %c0_i32 = arith.constant 0 : i32
    %c0_i32_0 = arith.constant 0 : i32
    return %arg0, %c0_i32 : i32, i32
  }
  func.func @transform_5(%arg0: i32) -> (i32, i32) {
    %c0_i32 = arith.constant 0 : i32
    %c0_i32_0 = arith.constant 0 : i32
    %c0_i32_1 = arith.constant 0 : i32
    return %c0_i32, %c0_i32_0 : i32, i32
  }
  func.func @transform_6(%arg0: i32) -> (i32, i32) {
    %c0_i32 = arith.constant 0 : i32
    %c0_i32_0 = arith.constant 0 : i32
    %c0_i32_1 = arith.constant 0 : i32
    return %c0_i32, %c0_i32_0 : i32, i32
  }
}

module attributes {stable_mosaic.version = 11 : i64} {
  func.func @_bn_out_kernel(%arg0: i32, %arg1: memref<128x512xf32, #tpu.memory_space<vmem>>, %arg2: memref<1x512xf32, #tpu.memory_space<vmem>>, %arg3: memref<1x512xf32, #tpu.memory_space<vmem>>, %arg4: memref<1x512xf32, #tpu.memory_space<vmem>>, %arg5: memref<1x512xf32, #tpu.memory_space<vmem>>, %arg6: memref<512x256xbf16, #tpu.memory_space<vmem>>, %arg7: memref<1x256xf32, #tpu.memory_space<vmem>>, %arg8: memref<128x256xf32, #tpu.memory_space<vmem>>) attributes {dimension_semantics = [#tpu.dimension_semantics<parallel>], iteration_bounds = array<i64: 2>, scalar_prefetch = 0 : i64, scratch_operands = 0 : i64, tpu.core_type = #tpu.core_type<tc>, window_params = [{transform_indices = @transform_0, window_bounds = array<i64: 128, 512>}, {pipeline_mode = #tpu.pipeline_mode<synchronous>, transform_indices = @transform_1, window_bounds = array<i64: 1, 512>}, {pipeline_mode = #tpu.pipeline_mode<synchronous>, transform_indices = @transform_2, window_bounds = array<i64: 1, 512>}, {pipeline_mode = #tpu.pipeline_mode<synchronous>, transform_indices = @transform_3, window_bounds = array<i64: 1, 512>}, {pipeline_mode = #tpu.pipeline_mode<synchronous>, transform_indices = @transform_4, window_bounds = array<i64: 1, 512>}, {pipeline_mode = #tpu.pipeline_mode<synchronous>, transform_indices = @transform_5, window_bounds = array<i64: 512, 256>}, {pipeline_mode = #tpu.pipeline_mode<synchronous>, transform_indices = @transform_6, window_bounds = array<i64: 1, 256>}, {transform_indices = @transform_7, window_bounds = array<i64: 128, 256>}]} {
    %c0 = arith.constant 0 : index
    %c0_0 = arith.constant 0 : index
    %0 = vector.load %arg1[%c0, %c0_0] : memref<128x512xf32, #tpu.memory_space<vmem>>, vector<128x512xf32>
    %c0_1 = arith.constant 0 : index
    %c0_2 = arith.constant 0 : index
    %1 = vector.load %arg2[%c0_1, %c0_2] : memref<1x512xf32, #tpu.memory_space<vmem>>, vector<1x512xf32>
    %cst = arith.constant 3.906250e-03 : f32
    %2 = vector.broadcast %cst : f32 to vector<1x512xf32>
    %3 = arith.mulf %1, %2 : vector<1x512xf32>
    %c0_3 = arith.constant 0 : index
    %c0_4 = arith.constant 0 : index
    %4 = vector.load %arg3[%c0_3, %c0_4] : memref<1x512xf32, #tpu.memory_space<vmem>>, vector<1x512xf32>
    %cst_5 = arith.constant 3.906250e-03 : f32
    %5 = vector.broadcast %cst_5 : f32 to vector<1x512xf32>
    %6 = arith.mulf %4, %5 : vector<1x512xf32>
    %7 = arith.mulf %3, %3 : vector<1x512xf32>
    %8 = arith.subf %6, %7 : vector<1x512xf32>
    %cst_6 = arith.constant 9.99999974E-6 : f32
    %9 = vector.broadcast %cst_6 : f32 to vector<1x512xf32>
    %10 = arith.addf %8, %9 : vector<1x512xf32>
    %11 = math.rsqrt %10 : vector<1x512xf32>
    %12 = vector.broadcast %3 : vector<1x512xf32> to vector<128x512xf32>
    %13 = arith.subf %0, %12 : vector<128x512xf32>
    %c0_7 = arith.constant 0 : index
    %c0_8 = arith.constant 0 : index
    %14 = vector.load %arg4[%c0_7, %c0_8] : memref<1x512xf32, #tpu.memory_space<vmem>>, vector<1x512xf32>
    %15 = arith.mulf %11, %14 : vector<1x512xf32>
    %16 = vector.broadcast %15 : vector<1x512xf32> to vector<128x512xf32>
    %17 = arith.mulf %13, %16 : vector<128x512xf32>
    %c0_9 = arith.constant 0 : index
    %c0_10 = arith.constant 0 : index
    %18 = vector.load %arg5[%c0_9, %c0_10] : memref<1x512xf32, #tpu.memory_space<vmem>>, vector<1x512xf32>
    %19 = vector.broadcast %18 : vector<1x512xf32> to vector<128x512xf32>
    %20 = arith.addf %17, %19 : vector<128x512xf32>
    %cst_11 = arith.constant 0.000000e+00 : f32
    %21 = vector.broadcast %cst_11 : f32 to vector<128x512xf32>
    %22 = arith.cmpf ogt, %20, %21 : vector<128x512xf32>
    %cst_12 = arith.constant 2.000000e-01 : f32
    %23 = vector.broadcast %cst_12 : f32 to vector<128x512xf32>
    %24 = arith.mulf %23, %20 : vector<128x512xf32>
    %25 = arith.select %22, %20, %24 : vector<128x512xi1>, vector<128x512xf32>
    %26 = arith.truncf %25 : vector<128x512xf32> to vector<128x512xbf16>
    %c0_13 = arith.constant 0 : index
    %c0_14 = arith.constant 0 : index
    %27 = vector.load %arg6[%c0_13, %c0_14] : memref<512x256xbf16, #tpu.memory_space<vmem>>, vector<512x256xbf16>
    %cst_15 = arith.constant dense<0.000000e+00> : vector<128x256xf32>
    %28 = tpu.matmul %26, %27, %cst_15 {dimension_numbers = #tpu.dot_dimension_numbers<[1], [0], [0], [1], [0, 0, 1, 1], [], []>} : vector<128x512xbf16>, vector<512x256xbf16>, vector<128x256xf32> -> vector<128x256xf32>
    %c0_16 = arith.constant 0 : index
    %c0_17 = arith.constant 0 : index
    %29 = vector.load %arg7[%c0_16, %c0_17] : memref<1x256xf32, #tpu.memory_space<vmem>>, vector<1x256xf32>
    %30 = vector.broadcast %29 : vector<1x256xf32> to vector<128x256xf32>
    %31 = arith.addf %28, %30 : vector<128x256xf32>
    %32 = math.tanh %31 : vector<128x256xf32>
    %c0_18 = arith.constant 0 : index
    %c0_19 = arith.constant 0 : index
    %33 = vector.load %arg8[%c0_18, %c0_19] : memref<128x256xf32, #tpu.memory_space<vmem>>, vector<128x256xf32>
    tpu.vector_store %arg8[%c0_18, %c0_19], %32 {strides = array<i32>} : memref<128x256xf32, #tpu.memory_space<vmem>>, vector<128x256xf32>,
    return
  }
  func.func @transform_0(%arg0: i32) -> (i32, i32) {
    %c0_i32 = arith.constant 0 : i32
    %c0_i32_0 = arith.constant 0 : i32
    return %arg0, %c0_i32 : i32, i32
  }
  func.func @transform_1(%arg0: i32) -> (i32, i32) {
    %c0_i32 = arith.constant 0 : i32
    %c0_i32_0 = arith.constant 0 : i32
    %c0_i32_1 = arith.constant 0 : i32
    return %c0_i32, %c0_i32_0 : i32, i32
  }
  func.func @transform_2(%arg0: i32) -> (i32, i32) {
    %c0_i32 = arith.constant 0 : i32
    %c0_i32_0 = arith.constant 0 : i32
    %c0_i32_1 = arith.constant 0 : i32
    return %c0_i32, %c0_i32_0 : i32, i32
  }
  func.func @transform_3(%arg0: i32) -> (i32, i32) {
    %c0_i32 = arith.constant 0 : i32
    %c0_i32_0 = arith.constant 0 : i32
    %c0_i32_1 = arith.constant 0 : i32
    return %c0_i32, %c0_i32_0 : i32, i32
  }
  func.func @transform_4(%arg0: i32) -> (i32, i32) {
    %c0_i32 = arith.constant 0 : i32
    %c0_i32_0 = arith.constant 0 : i32
    %c0_i32_1 = arith.constant 0 : i32
    return %c0_i32, %c0_i32_0 : i32, i32
  }
  func.func @transform_5(%arg0: i32) -> (i32, i32) {
    %c0_i32 = arith.constant 0 : i32
    %c0_i32_0 = arith.constant 0 : i32
    %c0_i32_1 = arith.constant 0 : i32
    return %c0_i32, %c0_i32_0 : i32, i32
  }
  func.func @transform_6(%arg0: i32) -> (i32, i32) {
    %c0_i32 = arith.constant 0 : i32
    %c0_i32_0 = arith.constant 0 : i32
    %c0_i32_1 = arith.constant 0 : i32
    return %c0_i32, %c0_i32_0 : i32, i32
  }
  func.func @transform_7(%arg0: i32) -> (i32, i32) {
    %c0_i32 = arith.constant 0 : i32
    %c0_i32_0 = arith.constant 0 : i32
    return %arg0, %c0_i32 : i32, i32
  }
}

</mosaic_0001>

<llo_original>
// kernel: decoder_forward.3
$region0: #{decoder_forward.3}
  #allocation0 [shape = 'u32[]', space=smem, size = 0x4, offset = 0x4, fixed_abs, tag = 'smem constant byte address 0x4 - core index']
  #allocation1 [shape = 'u32[144,128]{1,0:T(1,128)}', space=vmem, size = 0x12000, scoped, tag = 'internal scratch']
  %s0 = inlined_call_operand.vmem [shape: f32[256,512], index: 0, kind: input, shape index: {}]
  %s1 = inlined_call_operand.vmem [shape: f32[1,512], index: 1, kind: input, shape index: {}]
  %s2 = inlined_call_operand.vmem [shape: f32[1,512], index: 2, kind: input, shape index: {}]
  %s3 = inlined_call_operand.vmem [shape: f32[1,512], index: 3, kind: input, shape index: {}]
  %s4 = inlined_call_operand.vmem [shape: f32[1,512], index: 4, kind: input, shape index: {}]
  %s5 = inlined_call_operand.vmem [shape: bf16[512,256], index: 5, kind: input, shape index: {}]
  %s6 = inlined_call_operand.vmem [shape: f32[1,256], index: 6, kind: input, shape index: {}]
  %s7 = inlined_call_operand.vmem [shape: f32[256,256], index: 7, kind: output, shape index: {}]
  %s8 = sld [smem:[#allocation0]]
  $region61: #{decoder_forward.3} parent=0
    _
  %s10 = ssub.s32 1, %s8
  %s11 = scalar_select 0, %s10, %s8
  loop: start=0, step=1, limit=4
  $region2: #{decoder_forward.3} parent=0 // loop_pre_header
    _
  $region3: #{decoder_forward.3} parent=0 // loop_header
    %s13 = sphi 0, %s17
    %p14 = scmp.ge.s32.totalorder %s13, 4
    %s23 = sphi 0, %s25
    %s26 = sphi 0, %s23
    %s27 = sphi 0, %s26
    %s43 = sphi 0, %s27
    %s47 = sphi 0, %s47
    %s49 = sphi 0, %s47
    %s50 = sphi 0, %s49
    %s64 = sphi 0, %s50
    %s68 = sphi 0, %s68
    %s70 = sphi 0, %s68
    %s71 = sphi 0, %s70
    %s85 = sphi 0, %s71
    %s89 = sphi 0, %s89
    %s91 = sphi 0, %s89
    %s92 = sphi 0, %s91
    %s106 = sphi 0, %s92
    %s110 = sphi 0, %s110
    %s112 = sphi 0, %s110
    %s113 = sphi 0, %s112
    %s127 = sphi 0, %s113
    %s131 = sphi 0, %s131
    %s133 = sphi 0, %s131
    %s134 = sphi 0, %s133
    %s148 = sphi 0, %s134
    %s152 = sphi 0, %s152
    %s154 = sphi 0, %s152
    %s155 = sphi 0, %s154
    %s169 = sphi 0, %s155
    %s175 = sphi 0, %s177
    %s178 = sphi 0, %s175
    %s179 = sphi 0, %s178
    %s195 = sphi 0, %s179
  $region4: #{decoder_forward.3} parent=0 // loop_header_branch
    %16 = sbr.rel (%p14) target = $region8
  $region5: #{decoder_forward.3} parent=0 // loop_body
    %s18 = ssub.s32 %s13, 1
    %s19 = ssub.s32 %s13, 2
    %s20 = sadd.s32 %s13, 1
    %s21 = ssub.s32 %s13, %s20
    %p22 = scmp.eq.s32.totalorder %s21, 0
    %s24 = sadd.s32 %s23, 1
    %s25 = scalar_select %p22, %s23, %s24
    %p28 = pneg %p22
    %p29 = scmp.eq.s32.totalorder %s13, 1
    %p30 = por %p28, %p29
    %p31 = scmp.ne.s32.totalorder %s23, %s26
    %p32 = scmp.eq.s32.totalorder %s13, 0
    %p33 = por %p31, %p32
    %p34 = scmp.ne.s32.totalorder %s23, %s26
    %p35 = scmp.eq.s32.totalorder %s18, 1
    %p36 = por %p34, %p35
    %p37 = scmp.ne.s32.totalorder %s26, %s27
    %p38 = scmp.eq.s32.totalorder %s18, 0
    %p39 = por %p37, %p38
    %p40 = scmp.ne.s32.totalorder %s26, %s27
    %p41 = scmp.eq.s32.totalorder %s19, 1
    %p42 = por %p40, %p41
    %p44 = scmp.ne.s32.totalorder %s27, %s43
    %p45 = scmp.eq.s32.totalorder %s19, 0
    %p46 = por %p44, %p45
    %s48 = sadd.s32 %s47, 1
    %p51 = scmp.eq.s32.totalorder %s13, 1
    %p52 = scmp.ne.s32.totalorder %s47, %s49
    %p53 = scmp.eq.s32.totalorder %s13, 0
    %p54 = por %p52, %p53
    %p55 = scmp.ne.s32.totalorder %s47, %s49
    %p56 = scmp.eq.s32.totalorder %s18, 1
    %p57 = por %p55, %p56
    %p58 = scmp.ne.s32.totalorder %s49, %s50
    %p59 = scmp.eq.s32.totalorder %s18, 0
    %p60 = por %p58, %p59
    %p61 = scmp.ne.s32.totalorder %s49, %s50
    %p62 = scmp.eq.s32.totalorder %s19, 1
    %p63 = por %p61, %p62
    %p65 = scmp.ne.s32.totalorder %s50, %s64
    %p66 = scmp.eq.s32.totalorder %s19, 0
    %p67 = por %p65, %p66
    %s69 = sadd.s32 %s68, 1
    %p72 = scmp.eq.s32.totalorder %s13, 1
    %p73 = scmp.ne.s32.totalorder %s68, %s70
    %p74 = scmp.eq.s32.totalorder %s13, 0
    %p75 = por %p73, %p74
    %p76 = scmp.ne.s32.totalorder %s68, %s70
    %p77 = scmp.eq.s32.totalorder %s18, 1
    %p78 = por %p76, %p77
    %p79 = scmp.ne.s32.totalorder %s70, %s71
    %p80 = scmp.eq.s32.totalorder %s18, 0
    %p81 = por %p79, %p80
    %p82 = scmp.ne.s32.totalorder %s70, %s71
    %p83 = scmp.eq.s32.totalorder %s19, 1
    %p84 = por %p82, %p83
    %p86 = scmp.ne.s32.totalorder %s71, %s85
    %p87 = scmp.eq.s32.totalorder %s19, 0
    %p88 = por %p86, %p87
    %s90 = sadd.s32 %s89, 1
    %p93 = scmp.eq.s32.totalorder %s13, 1
    %p94 = scmp.ne.s32.totalorder %s89, %s91
    %p95 = scmp.eq.s32.totalorder %s13, 0
    %p96 = por %p94, %p95
    %p97 = scmp.ne.s32.totalorder %s89, %s91
    %p98 = scmp.eq.s32.totalorder %s18, 1
    %p99 = por %p97, %p98
    %p100 = scmp.ne.s32.totalorder %s91, %s92
    %p101 = scmp.eq.s32.totalorder %s18, 0
    %p102 = por %p100, %p101
    %p103 = scmp.ne.s32.totalorder %s91, %s92
    %p104 = scmp.eq.s32.totalorder %s19, 1
    %p105 = por %p103, %p104
    %p107 = scmp.ne.s32.totalorder %s92, %s106
    %p108 = scmp.eq.s32.totalorder %s19, 0
    %p109 = por %p107, %p108
    %s111 = sadd.s32 %s110, 1
    %p114 = scmp.eq.s32.totalorder %s13, 1
    %p115 = scmp.ne.s32.totalorder %s110, %s112
    %p116 = scmp.eq.s32.totalorder %s13, 0
    %p117 = por %p115, %p116
    %p118 = scmp.ne.s32.totalorder %s110, %s112
    %p119 = scmp.eq.s32.totalorder %s18, 1
    %p120 = por %p118, %p119
    %p121 = scmp.ne.s32.totalorder %s112, %s113
    %p122 = scmp.eq.s32.totalorder %s18, 0
    %p123 = por %p121, %p122
    %p124 = scmp.ne.s32.totalorder %s112, %s113
    %p125 = scmp.eq.s32.totalorder %s19, 1
    %p126 = por %p124, %p125
    %p128 = scmp.ne.s32.totalorder %s113, %s127
    %p129 = scmp.eq.s32.totalorder %s19, 0
    %p130 = por %p128, %p129
    %s132 = sadd.s32 %s131, 1
    %p135 = scmp.eq.s32.totalorder %s13, 1
    %p136 = scmp.ne.s32.totalorder %s131, %s133
    %p137 = scmp.eq.s32.totalorder %s13, 0
    %p138 = por %p136, %p137
    %p139 = scmp.ne.s32.totalorder %s131, %s133
    %p140 = scmp.eq.s32.totalorder %s18, 1
    %p141 = por %p139, %p140
    %p142 = scmp.ne.s32.totalorder %s133, %s134
    %p143 = scmp.eq.s32.totalorder %s18, 0
    %p144 = por %p142, %p143
    %p145 = scmp.ne.s32.totalorder %s133, %s134
    %p146 = scmp.eq.s32.totalorder %s19, 1
    %p147 = por %p145, %p146
    %p149 = scmp.ne.s32.totalorder %s134, %s148
    %p150 = scmp.eq.s32.totalorder %s19, 0
    %p151 = por %p149, %p150
    %s153 = sadd.s32 %s152, 1
    %p156 = scmp.eq.s32.totalorder %s13, 1
    %p157 = scmp.ne.s32.totalorder %s152, %s154
    %p158 = scmp.eq.s32.totalorder %s13, 0
    %p159 = por %p157, %p158
    %p160 = scmp.ne.s32.totalorder %s152, %s154
    %p161 = scmp.eq.s32.totalorder %s18, 1
    %p162 = por %p160, %p161
    %p163 = scmp.ne.s32.totalorder %s154, %s155
    %p164 = scmp.eq.s32.totalorder %s18, 0
    %p165 = por %p163, %p164
    %p166 = scmp.ne.s32.totalorder %s154, %s155
    %p167 = scmp.eq.s32.totalorder %s19, 1
    %p168 = por %p166, %p167
    %p170 = scmp.ne.s32.totalorder %s155, %s169
    %p171 = scmp.eq.s32.totalorder %s19, 0
    %p172 = por %p170, %p171
    %s173 = ssub.s32 %s13, %s20
    %p174 = scmp.eq.s32.totalorder %s173, 0
    %s176 = sadd.s32 %s175, 1
    %s177 = scalar_select %p174, %s175, %s176
    %p180 = pneg %p174
    %p181 = scmp.eq.s32.totalorder %s13, 1
    %p182 = por %p180, %p181
    %p183 = scmp.ne.s32.totalorder %s175, %s178
    %p184 = scmp.eq.s32.totalorder %s13, 0
    %p185 = por %p183, %p184
    %p186 = scmp.ne.s32.totalorder %s175, %s178
    %p187 = scmp.eq.s32.totalorder %s18, 1
    %p188 = por %p186, %p187
    %p189 = scmp.ne.s32.totalorder %s178, %s179
    %p190 = scmp.eq.s32.totalorder %s18, 0
    %p191 = por %p189, %p190
    %p192 = scmp.ne.s32.totalorder %s178, %s179
    %p193 = scmp.eq.s32.totalorder %s19, 1
    %p194 = por %p192, %p193
    %p196 = scmp.ne.s32.totalorder %s179, %s195
    %p197 = scmp.eq.s32.totalorder %s19, 0
    %p198 = por %p196, %p197
    %p199 = scmp.le.s32.totalorder 1, %s13
    %p200 = scmp.lt.s32.totalorder %s13, 3
    %p201 = pnand %p199, %p200
    %p202 = pneg %p201
    // Predicated region
    $region9: #{decoder_forward.3} parent=5 // pred_check
      _
    $region10: #{decoder_forward.3} parent=5 // pred_check_branch
      %204 = sbr.rel (%p201) target = $region12
    $region11: #{decoder_forward.3} parent=5 // pred_region
      %s205 = ssub.s32 %s13, 1
      // Predicated region
      $region13: #{decoder_forward.3} parent=11 // pred_check
        %p206 = pneg %p60
      $region14: #{decoder_forward.3} parent=11 // pred_check_branch
        %208 = sbr.rel (%p206) target = $region16
      $region15: #{decoder_forward.3} parent=11 // pred_region
        _
      $region16: #{decoder_forward.3} parent=11 // pred_fallthru
        _
      // Predicated region
      $region17: #{decoder_forward.3} parent=11 // pred_check
        %p209 = pneg %p81
      $region18: #{decoder_forward.3} parent=11 // pred_check_branch
        %211 = sbr.rel (%p209) target = $region20
      $region19: #{decoder_forward.3} parent=11 // pred_region
        _
      $region20: #{decoder_forward.3} parent=11 // pred_fallthru
        _
      // Predicated region
      $region21: #{decoder_forward.3} parent=11 // pred_check
        %p212 = pneg %p102
      $region22: #{decoder_forward.3} parent=11 // pred_check_branch
        %214 = sbr.rel (%p212) target = $region24
      $region23: #{decoder_forward.3} parent=11 // pred_region
        _
      $region24: #{decoder_forward.3} parent=11 // pred_fallthru
        _
      // Predicated region
      $region25: #{decoder_forward.3} parent=11 // pred_check
        %p215 = pneg %p123
      $region26: #{decoder_forward.3} parent=11 // pred_check_branch
        %217 = sbr.rel (%p215) target = $region28
      $region27: #{decoder_forward.3} parent=11 // pred_region
        _
      $region28: #{decoder_forward.3} parent=11 // pred_fallthru
        _
      // Predicated region
      $region29: #{decoder_forward.3} parent=11 // pred_check
        %p218 = pneg %p144
      $region30: #{decoder_forward.3} parent=11 // pred_check_branch
        %220 = sbr.rel (%p218) target = $region32
      $region31: #{decoder_forward.3} parent=11 // pred_region
        _
      $region32: #{decoder_forward.3} parent=11 // pred_fallthru
        _
      // Predicated region
      $region33: #{decoder_forward.3} parent=11 // pred_check
        %p221 = pneg %p165
      $region34: #{decoder_forward.3} parent=11 // pred_check_branch
        %223 = sbr.rel (%p221) target = $region36
      $region35: #{decoder_forward.3} parent=11 // pred_region
        _
      $region36: #{decoder_forward.3} parent=11 // pred_fallthru
        _
    $region12: #{decoder_forward.3} parent=5 // pred_fallthru
      _
    %p224 = scmp.lt.s32.totalorder %s13, 2
    // Predicated region
    $region37: #{decoder_forward.3} parent=5 // pred_check
      %p225 = pneg %p224
    $region38: #{decoder_forward.3} parent=5 // pred_check_branch
      %227 = sbr.rel (%p225) target = $region40
    $region39: #{decoder_forward.3} parent=5 // pred_region
      // Predicated region
      $region41: #{decoder_forward.3} parent=39 // pred_check
        %p228 = pneg %p33
      $region42: #{decoder_forward.3} parent=39 // pred_check_branch
        %230 = sbr.rel (%p228) target = $region44
      $region43: #{decoder_forward.3} parent=39 // pred_region
        %s231 = smul.u32 16, %s13
        %p232 = scmp.lt.s32.totalorder %s231, 31
        %s233 = scalar_select %p232, %s231, 31
        %s234 = smul.addr %s233, 4
        %s235 = smul.addr %s234, 8
        %s236 = scalar_lea.vmem %s0, %s235
        %s237 = smul.u32 16, %s13
      $region44: #{decoder_forward.3} parent=39 // pred_fallthru
        _
    $region40: #{decoder_forward.3} parent=5 // pred_fallthru
      _
    %p238 = scmp.le.s32.totalorder 1, %s13
    %p239 = scmp.lt.s32.totalorder %s13, 3
    %p240 = pnand %p238, %p239
    %p241 = pneg %p240
    // Predicated region
    $region45: #{decoder_forward.3} parent=5 // pred_check
      _
    $region46: #{decoder_forward.3} parent=5 // pred_check_branch
      %243 = sbr.rel (%p240) target = $region48
    $region47: #{decoder_forward.3} parent=5 // pred_region
      %s244 = ssub.s32 %s13, 1
      %s245 = smul.u32 16, %s18
      %p246 = scmp.lt.s32.totalorder %s245, 31
      %s247 = scalar_select %p246, %s245, 31
      %s248 = smul.addr %s247, 4
      %s249 = smul.addr %s248, 8
      %s250 = scalar_lea.vmem %s0, %s249
      %p251 = pneg %p39
      %p252 = pneg %p36
      %p253 = pneg %p60
      %p254 = pneg %p57
      %p255 = pneg %p81
      %p256 = pneg %p78
      %p257 = pneg %p102
      %p258 = pneg %p99
      %p259 = pneg %p123
      %p260 = pneg %p120
      %p261 = pneg %p144
      %p262 = pneg %p141
      %p263 = pneg %p165
      %p264 = pneg %p162
      %p265 = pneg %p191
      %p266 = pneg %p188
      %s267 = smul.u32 16, %s18
      %p268 = scmp.lt.s32.totalorder %s267, 31
      %s269 = scalar_select %p268, %s267, 31
      %s270 = smul.addr %s269, 2
      %s271 = smul.addr %s270, 8
      %s272 = scalar_lea.vmem %s7, %s271
      %s273 = smul.u32 16, %s18
      %p274 = scmp.lt.s32.totalorder %s273, 31
      %s275 = scalar_select %p274, %s273, 31
      %s276 = smul.addr %s275, 4
      %s277 = smul.addr %s276, 8
      %s278 = scalar_lea.vmem %s0, %s277
      %s279 = smul.u32 16, %s18
      %s280 = smul.u32 16, %s18
      %p281 = scmp.lt.s32.totalorder %s280, 31
      %s282 = scalar_select %p281, %s280, 31
      %s283 = smul.addr %s282, 2
      %s284 = smul.addr %s283, 8
      %s285 = scalar_lea.vmem %s7, %s284
      %s286 = smul.u32 16, %s18
      %v287 = vld [vmem:[%s278] sm:$0xff]
      %v288 = vld [vmem:[%s278 + $0x8] sm:$0xff]
      %v289 = vld [vmem:[%s278 + $0x10] sm:$0xff]
      %v290 = vld [vmem:[%s278 + $0x18] sm:$0xff]
      %v291 = vld [vmem:[%s278 + $0x20] sm:$0xff]
      %v292 = vld [vmem:[%s278 + $0x28] sm:$0xff]
      %v293 = vld [vmem:[%s278 + $0x30] sm:$0xff]
      %v294 = vld [vmem:[%s278 + $0x38] sm:$0xff]
      %v295 = vld [vmem:[%s278 + $0x40] sm:$0xff]
      %v296 = vld [vmem:[%s278 + $0x48] sm:$0xff]
      %v297 = vld [vmem:[%s278 + $0x50] sm:$0xff]
      %v298 = vld [vmem:[%s278 + $0x58] sm:$0xff]
      %v299 = vld [vmem:[%s278 + $0x60] sm:$0xff]
      %v300 = vld [vmem:[%s278 + $0x68] sm:$0xff]
      %v301 = vld [vmem:[%s278 + $0x70] sm:$0xff]
      %v302 = vld [vmem:[%s278 + $0x78] sm:$0xff]
      %v303 = vld [vmem:[%s278 + $0x80] sm:$0xff]
      %v304 = vld [vmem:[%s278 + $0x88] sm:$0xff]
      %v305 = vld [vmem:[%s278 + $0x90] sm:$0xff]
      %v306 = vld [vmem:[%s278 + $0x98] sm:$0xff]
      %v307 = vld [vmem:[%s278 + $0xa0] sm:$0xff]
      %v308 = vld [vmem:[%s278 + $0xa8] sm:$0xff]
      %v309 = vld [vmem:[%s278 + $0xb0] sm:$0xff]
      %v310 = vld [vmem:[%s278 + $0xb8] sm:$0xff]
      %v311 = vld [vmem:[%s278 + $0xc0] sm:$0xff]
      %v312 = vld [vmem:[%s278 + $0xc8] sm:$0xff]
      %v313 = vld [vmem:[%s278 + $0xd0] sm:$0xff]
      %v314 = vld [vmem:[%s278 + $0xd8] sm:$0xff]
      %v315 = vld [vmem:[%s278 + $0xe0] sm:$0xff]
      %v316 = vld [vmem:[%s278 + $0xe8] sm:$0xff]
      %v317 = vld [vmem:[%s278 + $0xf0] sm:$0xff]
      %v318 = vld [vmem:[%s278 + $0xf8] sm:$0xff]
      %v319 = vld [vmem:[%s278 + $0x100] sm:$0xff]
      %v320 = vld [vmem:[%s278 + $0x108] sm:$0xff]
      %v321 = vld [vmem:[%s278 + $0x110] sm:$0xff]
      %v322 = vld [vmem:[%s278 + $0x118] sm:$0xff]
      %v323 = vld [vmem:[%s278 + $0x120] sm:$0xff]
      %v324 = vld [vmem:[%s278 + $0x128] sm:$0xff]
      %v325 = vld [vmem:[%s278 + $0x130] sm:$0xff]
      %v326 = vld [vmem:[%s278 + $0x138] sm:$0xff]
      %v327 = vld [vmem:[%s278 + $0x140] sm:$0xff]
      %v328 = vld [vmem:[%s278 + $0x148] sm:$0xff]
      %v329 = vld [vmem:[%s278 + $0x150] sm:$0xff]
      %v330 = vld [vmem:[%s278 + $0x158] sm:$0xff]
      %v331 = vld [vmem:[%s278 + $0x160] sm:$0xff]
      %v332 = vld [vmem:[%s278 + $0x168] sm:$0xff]
      %v333 = vld [vmem:[%s278 + $0x170] sm:$0xff]
      %v334 = vld [vmem:[%s278 + $0x178] sm:$0xff]
      %v335 = vld [vmem:[%s278 + $0x180] sm:$0xff]
      %v336 = vld [vmem:[%s278 + $0x188] sm:$0xff]
      %v337 = vld [vmem:[%s278 + $0x190] sm:$0xff]
      %v338 = vld [vmem:[%s278 + $0x198] sm:$0xff]
      %v339 = vld [vmem:[%s278 + $0x1a0] sm:$0xff]
      %v340 = vld [vmem:[%s278 + $0x1a8] sm:$0xff]
      %v341 = vld [vmem:[%s278 + $0x1b0] sm:$0xff]
      %v342 = vld [vmem:[%s278 + $0x1b8] sm:$0xff]
      %v343 = vld [vmem:[%s278 + $0x1c0] sm:$0xff]
      %v344 = vld [vmem:[%s278 + $0x1c8] sm:$0xff]
      %v345 = vld [vmem:[%s278 + $0x1d0] sm:$0xff]
      %v346 = vld [vmem:[%s278 + $0x1d8] sm:$0xff]
      %v347 = vld [vmem:[%s278 + $0x1e0] sm:$0xff]
      %v348 = vld [vmem:[%s278 + $0x1e8] sm:$0xff]
      %v349 = vld [vmem:[%s278 + $0x1f0] sm:$0xff]
      %v350 = vld [vmem:[%s278 + $0x1f8] sm:$0xff]
      %v351 = vld [vmem:[%s1] sm:$0xf]
      %v352 = vmul.f32 %v351, 0.00390625
      %v353 = vld [vmem:[%s2] sm:$0xf]
      %v354 = vmul.f32 %v353, 0.00390625
      %v355 = vmul.f32 %v352, %v352
      %v356 = vsub.f32 %v354, %v355
      %v357 = vadd.f32 %v356, 1e-05
      %v358 = vrsqrt.pop %v357
      %v360 = vlaneseq
      %v361 = vshrl.u32 %v360, 7
      %v362 = vsub.s32 0, %v361
      %v363 = vrot.slane %v352, %v362
      %v364 = vlaneseq
      %v365 = vshrl.u32 %v364, 7
      %v366 = vsub.s32 1, %v365
      %v367 = vrot.slane %v352, %v366
      %v368 = vlaneseq
      %v369 = vshrl.u32 %v368, 7
      %v370 = vsub.s32 2, %v369
      %v371 = vrot.slane %v352, %v370
      %v372 = vlaneseq
      %v373 = vshrl.u32 %v372, 7
      %v374 = vsub.s32 3, %v373
      %v375 = vrot.slane %v352, %v374
      %v380 = vsub.f32 %v287, %v363
      %v381 = vsub.f32 %v288, %v367
      %v382 = vsub.f32 %v289, %v371
      %v383 = vsub.f32 %v290, %v375
      %v384 = vsub.f32 %v291, %v363
      %v385 = vsub.f32 %v292, %v367
      %v386 = vsub.f32 %v293, %v371
      %v387 = vsub.f32 %v294, %v375
      %v388 = vsub.f32 %v295, %v363
      %v389 = vsub.f32 %v296, %v367
      %v390 = vsub.f32 %v297, %v371
      %v391 = vsub.f32 %v298, %v375
      %v392 = vsub.f32 %v299, %v363
      %v393 = vsub.f32 %v300, %v367
      %v394 = vsub.f32 %v301, %v371
      %v395 = vsub.f32 %v302, %v375
      %v396 = vsub.f32 %v303, %v363
      %v397 = vsub.f32 %v304, %v367
      %v398 = vsub.f32 %v305, %v371
      %v399 = vsub.f32 %v306, %v375
      %v400 = vsub.f32 %v307, %v363
      %v401 = vsub.f32 %v308, %v367
      %v402 = vsub.f32 %v309, %v371
      %v403 = vsub.f32 %v310, %v375
      %v404 = vsub.f32 %v311, %v363
      %v405 = vsub.f32 %v312, %v367
      %v406 = vsub.f32 %v313, %v371
      %v407 = vsub.f32 %v314, %v375
      %v408 = vsub.f32 %v315, %v363
      %v409 = vsub.f32 %v316, %v367
      %v410 = vsub.f32 %v317, %v371
      %v411 = vsub.f32 %v318, %v375
      %v412 = vsub.f32 %v319, %v363
      %v413 = vsub.f32 %v320, %v367
      %v414 = vsub.f32 %v321, %v371
      %v415 = vsub.f32 %v322, %v375
      %v416 = vsub.f32 %v323, %v363
      %v417 = vsub.f32 %v324, %v367
      %v418 = vsub.f32 %v325, %v371
      %v419 = vsub.f32 %v326, %v375
      %v420 = vsub.f32 %v327, %v363
      %v421 = vsub.f32 %v328, %v367
      %v422 = vsub.f32 %v329, %v371
      %v423 = vsub.f32 %v330, %v375
      %v424 = vsub.f32 %v331, %v363
      %v425 = vsub.f32 %v332, %v367
      %v426 = vsub.f32 %v333, %v371
      %v427 = vsub.f32 %v334, %v375
      %v428 = vsub.f32 %v335, %v363
      %v429 = vsub.f32 %v336, %v367
      %v430 = vsub.f32 %v337, %v371
      %v431 = vsub.f32 %v338, %v375
      %v432 = vsub.f32 %v339, %v363
      %v433 = vsub.f32 %v340, %v367
      %v434 = vsub.f32 %v341, %v371
      %v435 = vsub.f32 %v342, %v375
      %v436 = vsub.f32 %v343, %v363
      %v437 = vsub.f32 %v344, %v367
      %v438 = vsub.f32 %v345, %v371
      %v439 = vsub.f32 %v346, %v375
      %v440 = vsub.f32 %v347, %v363
      %v441 = vsub.f32 %v348, %v367
      %v442 = vsub.f32 %v349, %v371
      %v443 = vsub.f32 %v350, %v375
      %v444 = vld [vmem:[%s3] sm:$0xf]
      %v445 = vmul.f32 %v358, %v444
      %v447 = vlaneseq
      %v448 = vshrl.u32 %v447, 7
      %v449 = vsub.s32 0, %v448
      %v450 = vrot.slane %v445, %v449
      %v451 = vlaneseq
      %v452 = vshrl.u32 %v451, 7
      %v453 = vsub.s32 1, %v452
      %v454 = vrot.slane %v445, %v453
      %v455 = vlaneseq
      %v456 = vshrl.u32 %v455, 7
      %v457 = vsub.s32 2, %v456
      %v458 = vrot.slane %v445, %v457
      %v459 = vlaneseq
      %v460 = vshrl.u32 %v459, 7
      %v461 = vsub.s32 3, %v460
      %v462 = vrot.slane %v445, %v461
      %v467 = vmul.f32 %v380, %v450
      %v468 = vmul.f32 %v381, %v454
      %v469 = vmul.f32 %v382, %v458
      %v470 = vmul.f32 %v383, %v462
      %v471 = vmul.f32 %v384, %v450
      %v472 = vmul.f32 %v385, %v454
      %v473 = vmul.f32 %v386, %v458
      %v474 = vmul.f32 %v387, %v462
      %v475 = vmul.f32 %v388, %v450
      %v476 = vmul.f32 %v389, %v454
      %v477 = vmul.f32 %v390, %v458
      %v478 = vmul.f32 %v391, %v462
      %v479 = vmul.f32 %v392, %v450
      %v480 = vmul.f32 %v393, %v454
      %v481 = vmul.f32 %v394, %v458
      %v482 = vmul.f32 %v395, %v462
      %v483 = vmul.f32 %v396, %v450
      %v484 = vmul.f32 %v397, %v454
      %v485 = vmul.f32 %v398, %v458
      %v486 = vmul.f32 %v399, %v462
      %v487 = vmul.f32 %v400, %v450
      %v488 = vmul.f32 %v401, %v454
      %v489 = vmul.f32 %v402, %v458
      %v490 = vmul.f32 %v403, %v462
      %v491 = vmul.f32 %v404, %v450
      %v492 = vmul.f32 %v405, %v454
      %v493 = vmul.f32 %v406, %v458
      %v494 = vmul.f32 %v407, %v462
      %v495 = vmul.f32 %v408, %v450
      %v496 = vmul.f32 %v409, %v454
      %v497 = vmul.f32 %v410, %v458
      %v498 = vmul.f32 %v411, %v462
      %v499 = vmul.f32 %v412, %v450
      %v500 = vmul.f32 %v413, %v454
      %v501 = vmul.f32 %v414, %v458
      %v502 = vmul.f32 %v415, %v462
      %v503 = vmul.f32 %v416, %v450
      %v504 = vmul.f32 %v417, %v454
      %v505 = vmul.f32 %v418, %v458
      %v506 = vmul.f32 %v419, %v462
      %v507 = vmul.f32 %v420, %v450
      %v508 = vmul.f32 %v421, %v454
      %v509 = vmul.f32 %v422, %v458
      %v510 = vmul.f32 %v423, %v462
      %v511 = vmul.f32 %v424, %v450
      %v512 = vmul.f32 %v425, %v454
      %v513 = vmul.f32 %v426, %v458
      %v514 = vmul.f32 %v427, %v462
      %v515 = vmul.f32 %v428, %v450
      %v516 = vmul.f32 %v429, %v454
      %v517 = vmul.f32 %v430, %v458
      %v518 = vmul.f32 %v431, %v462
      %v519 = vmul.f32 %v432, %v450
      %v520 = vmul.f32 %v433, %v454
      %v521 = vmul.f32 %v434, %v458
      %v522 = vmul.f32 %v435, %v462
      %v523 = vmul.f32 %v436, %v450
      %v524 = vmul.f32 %v437, %v454
      %v525 = vmul.f32 %v438, %v458
      %v526 = vmul.f32 %v439, %v462
      %v527 = vmul.f32 %v440, %v450
      %v528 = vmul.f32 %v441, %v454
      %v529 = vmul.f32 %v442, %v458
      %v530 = vmul.f32 %v443, %v462
      %v531 = vld [vmem:[%s4] sm:$0xf]
      %v533 = vlaneseq
      %v534 = vshrl.u32 %v533, 7
      %v535 = vsub.s32 0, %v534
      %v536 = vrot.slane %v531, %v535
      %v537 = vlaneseq
      %v538 = vshrl.u32 %v537, 7
      %v539 = vsub.s32 1, %v538
      %v540 = vrot.slane %v531, %v539
      %v541 = vlaneseq
      %v542 = vshrl.u32 %v541, 7
      %v543 = vsub.s32 2, %v542
      %v544 = vrot.slane %v531, %v543
      %v545 = vlaneseq
      %v546 = vshrl.u32 %v545, 7
      %v547 = vsub.s32 3, %v546
      %v548 = vrot.slane %v531, %v547
      %v553 = vadd.f32 %v467, %v536
      %v554 = vadd.f32 %v468, %v540
      %v555 = vadd.f32 %v469, %v544
      %v556 = vadd.f32 %v470, %v548
      %v557 = vadd.f32 %v471, %v536
      %v558 = vadd.f32 %v472, %v540
      %v559 = vadd.f32 %v473, %v544
      %v560 = vadd.f32 %v474, %v548
      %v561 = vadd.f32 %v475, %v536
      %v562 = vadd.f32 %v476, %v540
      %v563 = vadd.f32 %v477, %v544
      %v564 = vadd.f32 %v478, %v548
      %v565 = vadd.f32 %v479, %v536
      %v566 = vadd.f32 %v480, %v540
      %v567 = vadd.f32 %v481, %v544
      %v568 = vadd.f32 %v482, %v548
      %v569 = vadd.f32 %v483, %v536
      %v570 = vadd.f32 %v484, %v540
      %v571 = vadd.f32 %v485, %v544
      %v572 = vadd.f32 %v486, %v548
      %v573 = vadd.f32 %v487, %v536
      %v574 = vadd.f32 %v488, %v540
      %v575 = vadd.f32 %v489, %v544
      %v576 = vadd.f32 %v490, %v548
      %v577 = vadd.f32 %v491, %v536
      %v578 = vadd.f32 %v492, %v540
      %v579 = vadd.f32 %v493, %v544
      %v580 = vadd.f32 %v494, %v548
      %v581 = vadd.f32 %v495, %v536
      %v582 = vadd.f32 %v496, %v540
      %v583 = vadd.f32 %v497, %v544
      %v584 = vadd.f32 %v498, %v548
      %v585 = vadd.f32 %v499, %v536
      %v586 = vadd.f32 %v500, %v540
      %v587 = vadd.f32 %v501, %v544
      %v588 = vadd.f32 %v502, %v548
      %v589 = vadd.f32 %v503, %v536
      %v590 = vadd.f32 %v504, %v540
      %v591 = vadd.f32 %v505, %v544
      %v592 = vadd.f32 %v506, %v548
      %v593 = vadd.f32 %v507, %v536
      %v594 = vadd.f32 %v508, %v540
      %v595 = vadd.f32 %v509, %v544
      %v596 = vadd.f32 %v510, %v548
      %v597 = vadd.f32 %v511, %v536
      %v598 = vadd.f32 %v512, %v540
      %v599 = vadd.f32 %v513, %v544
      %v600 = vadd.f32 %v514, %v548
      %v601 = vadd.f32 %v515, %v536
      %v602 = vadd.f32 %v516, %v540
      %v603 = vadd.f32 %v517, %v544
      %v604 = vadd.f32 %v518, %v548
      %v605 = vadd.f32 %v519, %v536
      %v606 = vadd.f32 %v520, %v540
      %v607 = vadd.f32 %v521, %v544
      %v608 = vadd.f32 %v522, %v548
      %v609 = vadd.f32 %v523, %v536
      %v610 = vadd.f32 %v524, %v540
      %v611 = vadd.f32 %v525, %v544
      %v612 = vadd.f32 %v526, %v548
      %v613 = vadd.f32 %v527, %v536
      %v614 = vadd.f32 %v528, %v540
      %v615 = vadd.f32 %v529, %v544
      %v616 = vadd.f32 %v530, %v548
      %vm617 = vcmp.gt.f32.partialorder %v553, 0.0
      %vm618 = vcmp.gt.f32.partialorder %v554, 0.0
      %vm619 = vcmp.gt.f32.partialorder %v555, 0.0
      %vm620 = vcmp.gt.f32.partialorder %v556, 0.0
      %vm621 = vcmp.gt.f32.partialorder %v557, 0.0
      %vm622 = vcmp.gt.f32.partialorder %v558, 0.0
      %vm623 = vcmp.gt.f32.partialorder %v559, 0.0
      %vm624 = vcmp.gt.f32.partialorder %v560, 0.0
      %vm625 = vcmp.gt.f32.partialorder %v561, 0.0
      %vm626 = vcmp.gt.f32.partialorder %v562, 0.0
      %vm627 = vcmp.gt.f32.partialorder %v563, 0.0
      %vm628 = vcmp.gt.f32.partialorder %v564, 0.0
      %vm629 = vcmp.gt.f32.partialorder %v565, 0.0
      %vm630 = vcmp.gt.f32.partialorder %v566, 0.0
      %vm631 = vcmp.gt.f32.partialorder %v567, 0.0
      %vm632 = vcmp.gt.f32.partialorder %v568, 0.0
      %vm633 = vcmp.gt.f32.partialorder %v569, 0.0
      %vm634 = vcmp.gt.f32.partialorder %v570, 0.0
      %vm635 = vcmp.gt.f32.partialorder %v571, 0.0
      %vm636 = vcmp.gt.f32.partialorder %v572, 0.0
      %vm637 = vcmp.gt.f32.partialorder %v573, 0.0
      %vm638 = vcmp.gt.f32.partialorder %v574, 0.0
      %vm639 = vcmp.gt.f32.partialorder %v575, 0.0
      %vm640 = vcmp.gt.f32.partialorder %v576, 0.0
      %vm641 = vcmp.gt.f32.partialorder %v577, 0.0
      %vm642 = vcmp.gt.f32.partialorder %v578, 0.0
      %vm643 = vcmp.gt.f32.partialorder %v579, 0.0
      %vm644 = vcmp.gt.f32.partialorder %v580, 0.0
      %vm645 = vcmp.gt.f32.partialorder %v581, 0.0
      %vm646 = vcmp.gt.f32.partialorder %v582, 0.0
      %vm647 = vcmp.gt.f32.partialorder %v583, 0.0
      %vm648 = vcmp.gt.f32.partialorder %v584, 0.0
      %vm649 = vcmp.gt.f32.partialorder %v585, 0.0
      %vm650 = vcmp.gt.f32.partialorder %v586, 0.0
      %vm651 = vcmp.gt.f32.partialorder %v587, 0.0
      %vm652 = vcmp.gt.f32.partialorder %v588, 0.0
      %vm653 = vcmp.gt.f32.partialorder %v589, 0.0
      %vm654 = vcmp.gt.f32.partialorder %v590, 0.0
      %vm655 = vcmp.gt.f32.partialorder %v591, 0.0
      %vm656 = vcmp.gt.f32.partialorder %v592, 0.0
      %vm657 = vcmp.gt.f32.partialorder %v593, 0.0
      %vm658 = vcmp.gt.f32.partialorder %v594, 0.0
      %vm659 = vcmp.gt.f32.partialorder %v595, 0.0
      %vm660 = vcmp.gt.f32.partialorder %v596, 0.0
      %vm661 = vcmp.gt.f32.partialorder %v597, 0.0
      %vm662 = vcmp.gt.f32.partialorder %v598, 0.0
      %vm663 = vcmp.gt.f32.partialorder %v599, 0.0
      %vm664 = vcmp.gt.f32.partialorder %v600, 0.0
      %vm665 = vcmp.gt.f32.partialorder %v601, 0.0
      %vm666 = vcmp.gt.f32.partialorder %v602, 0.0
      %vm667 = vcmp.gt.f32.partialorder %v603, 0.0
      %vm668 = vcmp.gt.f32.partialorder %v604, 0.0
      %vm669 = vcmp.gt.f32.partialorder %v605, 0.0
      %vm670 = vcmp.gt.f32.partialorder %v606, 0.0
      %vm671 = vcmp.gt.f32.partialorder %v607, 0.0
      %vm672 = vcmp.gt.f32.partialorder %v608, 0.0
      %vm673 = vcmp.gt.f32.partialorder %v609, 0.0
      %vm674 = vcmp.gt.f32.partialorder %v610, 0.0
      %vm675 = vcmp.gt.f32.partialorder %v611, 0.0
      %vm676 = vcmp.gt.f32.partialorder %v612, 0.0
      %vm677 = vcmp.gt.f32.partialorder %v613, 0.0
      %vm678 = vcmp.gt.f32.partialorder %v614, 0.0
      %vm679 = vcmp.gt.f32.partialorder %v615, 0.0
      %vm680 = vcmp.gt.f32.partialorder %v616, 0.0
      %v681 = vmul.f32 %v553, 0.2
      %v682 = vmul.f32 %v554, 0.2
      %v683 = vmul.f32 %v555, 0.2
      %v684 = vmul.f32 %v556, 0.2
      %v685 = vmul.f32 %v557, 0.2
      %v686 = vmul.f32 %v558, 0.2
      %v687 = vmul.f32 %v559, 0.2
      %v688 = vmul.f32 %v560, 0.2
      %v689 = vmul.f32 %v561, 0.2
      %v690 = vmul.f32 %v562, 0.2
      %v691 = vmul.f32 %v563, 0.2
      %v692 = vmul.f32 %v564, 0.2
      %v693 = vmul.f32 %v565, 0.2
      %v694 = vmul.f32 %v566, 0.2
      %v695 = vmul.f32 %v567, 0.2
      %v696 = vmul.f32 %v568, 0.2
      %v697 = vmul.f32 %v569, 0.2
      %v698 = vmul.f32 %v570, 0.2
      %v699 = vmul.f32 %v571, 0.2
      %v700 = vmul.f32 %v572, 0.2
      %v701 = vmul.f32 %v573, 0.2
      %v702 = vmul.f32 %v574, 0.2
      %v703 = vmul.f32 %v575, 0.2
      %v704 = vmul.f32 %v576, 0.2
      %v705 = vmul.f32 %v577, 0.2
      %v706 = vmul.f32 %v578, 0.2
      %v707 = vmul.f32 %v579, 0.2
      %v708 = vmul.f32 %v580, 0.2
      %v709 = vmul.f32 %v581, 0.2
      %v710 = vmul.f32 %v582, 0.2
      %v711 = vmul.f32 %v583, 0.2
      %v712 = vmul.f32 %v584, 0.2
      %v713 = vmul.f32 %v585, 0.2
      %v714 = vmul.f32 %v586, 0.2
      %v715 = vmul.f32 %v587, 0.2
      %v716 = vmul.f32 %v588, 0.2
      %v717 = vmul.f32 %v589, 0.2
      %v718 = vmul.f32 %v590, 0.2
      %v719 = vmul.f32 %v591, 0.2
      %v720 = vmul.f32 %v592, 0.2
      %v721 = vmul.f32 %v593, 0.2
      %v722 = vmul.f32 %v594, 0.2
      %v723 = vmul.f32 %v595, 0.2
      %v724 = vmul.f32 %v596, 0.2
      %v725 = vmul.f32 %v597, 0.2
      %v726 = vmul.f32 %v598, 0.2
      %v727 = vmul.f32 %v599, 0.2
      %v728 = vmul.f32 %v600, 0.2
      %v729 = vmul.f32 %v601, 0.2
      %v730 = vmul.f32 %v602, 0.2
      %v731 = vmul.f32 %v603, 0.2
      %v732 = vmul.f32 %v604, 0.2
      %v733 = vmul.f32 %v605, 0.2
      %v734 = vmul.f32 %v606, 0.2
      %v735 = vmul.f32 %v607, 0.2
      %v736 = vmul.f32 %v608, 0.2
      %v737 = vmul.f32 %v609, 0.2
      %v738 = vmul.f32 %v610, 0.2
      %v739 = vmul.f32 %v611, 0.2
      %v740 = vmul.f32 %v612, 0.2
      %v741 = vmul.f32 %v613, 0.2
      %v742 = vmul.f32 %v614, 0.2
      %v743 = vmul.f32 %v615, 0.2
      %v744 = vmul.f32 %v616, 0.2
      %v745 = vsel %vm617, %v553, %v681
      %v746 = vsel %vm618, %v554, %v682
      %v747 = vsel %vm619, %v555, %v683
      %v748 = vsel %vm620, %v556, %v684
      %v749 = vsel %vm621, %v557, %v685
      %v750 = vsel %vm622, %v558, %v686
      %v751 = vsel %vm623, %v559, %v687
      %v752 = vsel %vm624, %v560, %v688
      %v753 = vsel %vm625, %v561, %v689
      %v754 = vsel %vm626, %v562, %v690
      %v755 = vsel %vm627, %v563, %v691
      %v756 = vsel %vm628, %v564, %v692
      %v757 = vsel %vm629, %v565, %v693
      %v758 = vsel %vm630, %v566, %v694
      %v759 = vsel %vm631, %v567, %v695
      %v760 = vsel %vm632, %v568, %v696
      %v761 = vsel %vm633, %v569, %v697
      %v762 = vsel %vm634, %v570, %v698
      %v763 = vsel %vm635, %v571, %v699
      %v764 = vsel %vm636, %v572, %v700
      %v765 = vsel %vm637, %v573, %v701
      %v766 = vsel %vm638, %v574, %v702
      %v767 = vsel %vm639, %v575, %v703
      %v768 = vsel %vm640, %v576, %v704
      %v769 = vsel %vm641, %v577, %v705
      %v770 = vsel %vm642, %v578, %v706
      %v771 = vsel %vm643, %v579, %v707
      %v772 = vsel %vm644, %v580, %v708
      %v773 = vsel %vm645, %v581, %v709
      %v774 = vsel %vm646, %v582, %v710
      %v775 = vsel %vm647, %v583, %v711
      %v776 = vsel %vm648, %v584, %v712
      %v777 = vsel %vm649, %v585, %v713
      %v778 = vsel %vm650, %v586, %v714
      %v779 = vsel %vm651, %v587, %v715
      %v780 = vsel %vm652, %v588, %v716
      %v781 = vsel %vm653, %v589, %v717
      %v782 = vsel %vm654, %v590, %v718
      %v783 = vsel %vm655, %v591, %v719
      %v784 = vsel %vm656, %v592, %v720
      %v785 = vsel %vm657, %v593, %v721
      %v786 = vsel %vm658, %v594, %v722
      %v787 = vsel %vm659, %v595, %v723
      %v788 = vsel %vm660, %v596, %v724
      %v789 = vsel %vm661, %v597, %v725
      %v790 = vsel %vm662, %v598, %v726
      %v791 = vsel %vm663, %v599, %v727
      %v792 = vsel %vm664, %v600, %v728
      %v793 = vsel %vm665, %v601, %v729
      %v794 = vsel %vm666, %v602, %v730
      %v795 = vsel %vm667, %v603, %v731
      %v796 = vsel %vm668, %v604, %v732
      %v797 = vsel %vm669, %v605, %v733
      %v798 = vsel %vm670, %v606, %v734
      %v799 = vsel %vm671, %v607, %v735
      %v800 = vsel %vm672, %v608, %v736
      %v801 = vsel %vm673, %v609, %v737
      %v802 = vsel %vm674, %v610, %v738
      %v803 = vsel %vm675, %v611, %v739
      %v804 = vsel %vm676, %v612, %v740
      %v805 = vsel %vm677, %v613, %v741
      %v806 = vsel %vm678, %v614, %v742
      %v807 = vsel %vm679, %v615, %v743
      %v808 = vsel %vm680, %v616, %v744
      %v809 = vpack.c.bf16 %v749, %v745
      %v810 = vpack.c.bf16 %v750, %v746
      %v811 = vpack.c.bf16 %v751, %v747
      %v812 = vpack.c.bf16 %v752, %v748
      %v813 = vpack.c.bf16 %v757, %v753
      %v814 = vpack.c.bf16 %v758, %v754
      %v815 = vpack.c.bf16 %v759, %v755
      %v816 = vpack.c.bf16 %v760, %v756
      %v817 = vpack.c.bf16 %v765, %v761
      %v818 = vpack.c.bf16 %v766, %v762
      %v819 = vpack.c.bf16 %v767, %v763
      %v820 = vpack.c.bf16 %v768, %v764
      %v821 = vpack.c.bf16 %v773, %v769
      %v822 = vpack.c.bf16 %v774, %v770
      %v823 = vpack.c.bf16 %v775, %v771
      %v824 = vpack.c.bf16 %v776, %v772
      %v825 = vpack.c.bf16 %v781, %v777
      %v826 = vpack.c.bf16 %v782, %v778
      %v827 = vpack.c.bf16 %v783, %v779
      %v828 = vpack.c.bf16 %v784, %v780
      %v829 = vpack.c.bf16 %v789, %v785
      %v830 = vpack.c.bf16 %v790, %v786
      %v831 = vpack.c.bf16 %v791, %v787
      %v832 = vpack.c.bf16 %v792, %v788
      %v833 = vpack.c.bf16 %v797, %v793
      %v834 = vpack.c.bf16 %v798, %v794
      %v835 = vpack.c.bf16 %v799, %v795
      %v836 = vpack.c.bf16 %v800, %v796
      %v837 = vpack.c.bf16 %v805, %v801
      %v838 = vpack.c.bf16 %v806, %v802
      %v839 = vpack.c.bf16 %v807, %v803
      %v840 = vpack.c.bf16 %v808, %v804
      %v841 = vld [vmem:[%s5] sm:$0xff]
      %v842 = vld [vmem:[%s5 + $0x8] sm:$0xff]
      %v843 = vld [vmem:[%s5 + $0x10] sm:$0xff]
      %v844 = vld [vmem:[%s5 + $0x18] sm:$0xff]
      %v845 = vld [vmem:[%s5 + $0x20] sm:$0xff]
      %v846 = vld [vmem:[%s5 + $0x28] sm:$0xff]
      %v847 = vld [vmem:[%s5 + $0x30] sm:$0xff]
      %v848 = vld [vmem:[%s5 + $0x38] sm:$0xff]
      %v849 = vld [vmem:[%s5 + $0x40] sm:$0xff]
      %v850 = vld [vmem:[%s5 + $0x48] sm:$0xff]
      %v851 = vld [vmem:[%s5 + $0x50] sm:$0xff]
      %v852 = vld [vmem:[%s5 + $0x58] sm:$0xff]
      %v853 = vld [vmem:[%s5 + $0x60] sm:$0xff]
      %v854 = vld [vmem:[%s5 + $0x68] sm:$0xff]
      %v855 = vld [vmem:[%s5 + $0x70] sm:$0xff]
      %v856 = vld [vmem:[%s5 + $0x78] sm:$0xff]
      %v857 = vld [vmem:[%s5 + $0x80] sm:$0xff]
      %v858 = vld [vmem:[%s5 + $0x88] sm:$0xff]
      %v859 = vld [vmem:[%s5 + $0x90] sm:$0xff]
      %v860 = vld [vmem:[%s5 + $0x98] sm:$0xff]
      %v861 = vld [vmem:[%s5 + $0xa0] sm:$0xff]
      %v862 = vld [vmem:[%s5 + $0xa8] sm:$0xff]
      %v863 = vld [vmem:[%s5 + $0xb0] sm:$0xff]
      %v864 = vld [vmem:[%s5 + $0xb8] sm:$0xff]
      %v865 = vld [vmem:[%s5 + $0xc0] sm:$0xff]
      %v866 = vld [vmem:[%s5 + $0xc8] sm:$0xff]
      %v867 = vld [vmem:[%s5 + $0xd0] sm:$0xff]
      %v868 = vld [vmem:[%s5 + $0xd8] sm:$0xff]
      %v869 = vld [vmem:[%s5 + $0xe0] sm:$0xff]
      %v870 = vld [vmem:[%s5 + $0xe8] sm:$0xff]
      %v871 = vld [vmem:[%s5 + $0xf0] sm:$0xff]
      %v872 = vld [vmem:[%s5 + $0xf8] sm:$0xff]
      %v873 = vld [vmem:[%s5 + $0x100] sm:$0xff]
      %v874 = vld [vmem:[%s5 + $0x108] sm:$0xff]
      %v875 = vld [vmem:[%s5 + $0x110] sm:$0xff]
      %v876 = vld [vmem:[%s5 + $0x118] sm:$0xff]
      %v877 = vld [vmem:[%s5 + $0x120] sm:$0xff]
      %v878 = vld [vmem:[%s5 + $0x128] sm:$0xff]
      %v879 = vld [vmem:[%s5 + $0x130] sm:$0xff]
      %v880 = vld [vmem:[%s5 + $0x138] sm:$0xff]
      %v881 = vld [vmem:[%s5 + $0x140] sm:$0xff]
      %v882 = vld [vmem:[%s5 + $0x148] sm:$0xff]
      %v883 = vld [vmem:[%s5 + $0x150] sm:$0xff]
      %v884 = vld [vmem:[%s5 + $0x158] sm:$0xff]
      %v885 = vld [vmem:[%s5 + $0x160] sm:$0xff]
      %v886 = vld [vmem:[%s5 + $0x168] sm:$0xff]
      %v887 = vld [vmem:[%s5 + $0x170] sm:$0xff]
      %v888 = vld [vmem:[%s5 + $0x178] sm:$0xff]
      %v889 = vld [vmem:[%s5 + $0x180] sm:$0xff]
      %v890 = vld [vmem:[%s5 + $0x188] sm:$0xff]
      %v891 = vld [vmem:[%s5 + $0x190] sm:$0xff]
      %v892 = vld [vmem:[%s5 + $0x198] sm:$0xff]
      %v893 = vld [vmem:[%s5 + $0x1a0] sm:$0xff]
      %v894 = vld [vmem:[%s5 + $0x1a8] sm:$0xff]
      %v895 = vld [vmem:[%s5 + $0x1b0] sm:$0xff]
      %v896 = vld [vmem:[%s5 + $0x1b8] sm:$0xff]
      %v897 = vld [vmem:[%s5 + $0x1c0] sm:$0xff]
      %v898 = vld [vmem:[%s5 + $0x1c8] sm:$0xff]
      %v899 = vld [vmem:[%s5 + $0x1d0] sm:$0xff]
      %v900 = vld [vmem:[%s5 + $0x1d8] sm:$0xff]
      %v901 = vld [vmem:[%s5 + $0x1e0] sm:$0xff]
      %v902 = vld [vmem:[%s5 + $0x1e8] sm:$0xff]
      %v903 = vld [vmem:[%s5 + $0x1f0] sm:$0xff]
      %v904 = vld [vmem:[%s5 + $0x1f8] sm:$0xff]
      %v905 = vld [vmem:[%s6] sm:$0x3]
      %v907 = vlaneseq
      %v908 = vshrl.u32 %v907, 7
      %v909 = vsub.s32 0, %v908
      %v910 = vrot.slane %v905, %v909
      %v911 = vlaneseq
      %v912 = vshrl.u32 %v911, 7
      %v913 = vsub.s32 1, %v912
      %v914 = vrot.slane %v905, %v913
      %v981 = vunpack.c.l.b16 %v841
      %v982 = vunpack.c.h.b16 %v841
      %v983 = vunpack.c.l.b16 %v842
      %v984 = vunpack.c.h.b16 %v842
      %v985 = vunpack.c.l.b16 %v843
      %v986 = vunpack.c.h.b16 %v843
      %v987 = vunpack.c.l.b16 %v844
      %v988 = vunpack.c.h.b16 %v844
      %v989 = vunpack.c.l.b16 %v845
      %v990 = vunpack.c.h.b16 %v845
      %v991 = vunpack.c.l.b16 %v846
      %v992 = vunpack.c.h.b16 %v846
      %v993 = vunpack.c.l.b16 %v847
      %v994 = vunpack.c.h.b16 %v847
      %v995 = vunpack.c.l.b16 %v848
      %v996 = vunpack.c.h.b16 %v848
      %v997 = vunpack.c.l.b16 %v849
      %v998 = vunpack.c.h.b16 %v849
      %v999 = vunpack.c.l.b16 %v850
      %v1000 = vunpack.c.h.b16 %v850
      %v1001 = vunpack.c.l.b16 %v851
      %v1002 = vunpack.c.h.b16 %v851
      %v1003 = vunpack.c.l.b16 %v852
      %v1004 = vunpack.c.h.b16 %v852
      %v1005 = vunpack.c.l.b16 %v853
      %v1006 = vunpack.c.h.b16 %v853
      %v1007 = vunpack.c.l.b16 %v854
      %v1008 = vunpack.c.h.b16 %v854
      %v1009 = vunpack.c.l.b16 %v855
      %v1010 = vunpack.c.h.b16 %v855
      %v1011 = vunpack.c.l.b16 %v856
      %v1012 = vunpack.c.h.b16 %v856
      %v1013 = vunpack.c.l.b16 %v857
      %v1014 = vunpack.c.h.b16 %v857
      %v1015 = vunpack.c.l.b16 %v858
      %v1016 = vunpack.c.h.b16 %v858
      %v1017 = vunpack.c.l.b16 %v859
      %v1018 = vunpack.c.h.b16 %v859
      %v1019 = vunpack.c.l.b16 %v860
      %v1020 = vunpack.c.h.b16 %v860
      %v1021 = vunpack.c.l.b16 %v861
      %v1022 = vunpack.c.h.b16 %v861
      %v1023 = vunpack.c.l.b16 %v862
      %v1024 = vunpack.c.h.b16 %v862
      %v1025 = vunpack.c.l.b16 %v863
      %v1026 = vunpack.c.h.b16 %v863
      %v1027 = vunpack.c.l.b16 %v864
      %v1028 = vunpack.c.h.b16 %v864
      %v1029 = vunpack.c.l.b16 %v865
      %v1030 = vunpack.c.h.b16 %v865
      %v1031 = vunpack.c.l.b16 %v866
      %v1032 = vunpack.c.h.b16 %v866
      %v1033 = vunpack.c.l.b16 %v867
      %v1034 = vunpack.c.h.b16 %v867
      %v1035 = vunpack.c.l.b16 %v868
      %v1036 = vunpack.c.h.b16 %v868
      %v1037 = vunpack.c.l.b16 %v869
      %v1038 = vunpack.c.h.b16 %v869
      %v1039 = vunpack.c.l.b16 %v870
      %v1040 = vunpack.c.h.b16 %v870
      %v1041 = vunpack.c.l.b16 %v871
      %v1042 = vunpack.c.h.b16 %v871
      %v1043 = vunpack.c.l.b16 %v872
      %v1044 = vunpack.c.h.b16 %v872
      %v1045 = vunpack.c.l.b16 %v873
      %v1046 = vunpack.c.h.b16 %v873
      %v1047 = vunpack.c.l.b16 %v874
      %v1048 = vunpack.c.h.b16 %v874
      %v1049 = vunpack.c.l.b16 %v875
      %v1050 = vunpack.c.h.b16 %v875
      %v1051 = vunpack.c.l.b16 %v876
      %v1052 = vunpack.c.h.b16 %v876
      %v1053 = vunpack.c.l.b16 %v877
      %v1054 = vunpack.c.h.b16 %v877
      %v1055 = vunpack.c.l.b16 %v878
      %v1056 = vunpack.c.h.b16 %v878
      %v1057 = vunpack.c.l.b16 %v879
      %v1058 = vunpack.c.h.b16 %v879
      %v1059 = vunpack.c.l.b16 %v880
      %v1060 = vunpack.c.h.b16 %v880
      %v1061 = vunpack.c.l.b16 %v881
      %v1062 = vunpack.c.h.b16 %v881
      %v1063 = vunpack.c.l.b16 %v882
      %v1064 = vunpack.c.h.b16 %v882
      %v1065 = vunpack.c.l.b16 %v883
      %v1066 = vunpack.c.h.b16 %v883
      %v1067 = vunpack.c.l.b16 %v884
      %v1068 = vunpack.c.h.b16 %v884
      %v1069 = vunpack.c.l.b16 %v885
      %v1070 = vunpack.c.h.b16 %v885
      %v1071 = vunpack.c.l.b16 %v886
      %v1072 = vunpack.c.h.b16 %v886
      %v1073 = vunpack.c.l.b16 %v887
      %v1074 = vunpack.c.h.b16 %v887
      %v1075 = vunpack.c.l.b16 %v888
      %v1076 = vunpack.c.h.b16 %v888
      %v1077 = vunpack.c.l.b16 %v889
      %v1078 = vunpack.c.h.b16 %v889
      %v1079 = vunpack.c.l.b16 %v890
      %v1080 = vunpack.c.h.b16 %v890
      %v1081 = vunpack.c.l.b16 %v891
      %v1082 = vunpack.c.h.b16 %v891
      %v1083 = vunpack.c.l.b16 %v892
      %v1084 = vunpack.c.h.b16 %v892
      %v1085 = vunpack.c.l.b16 %v893
      %v1086 = vunpack.c.h.b16 %v893
      %v1087 = vunpack.c.l.b16 %v894
      %v1088 = vunpack.c.h.b16 %v894
      %v1089 = vunpack.c.l.b16 %v895
      %v1090 = vunpack.c.h.b16 %v895
      %v1091 = vunpack.c.l.b16 %v896
      %v1092 = vunpack.c.h.b16 %v896
      %v1093 = vunpack.c.l.b16 %v897
      %v1094 = vunpack.c.h.b16 %v897
      %v1095 = vunpack.c.l.b16 %v898
      %v1096 = vunpack.c.h.b16 %v898
      %v1097 = vunpack.c.l.b16 %v899
      %v1098 = vunpack.c.h.b16 %v899
      %v1099 = vunpack.c.l.b16 %v900
      %v1100 = vunpack.c.h.b16 %v900
      %v1101 = vunpack.c.l.b16 %v901
      %v1102 = vunpack.c.h.b16 %v901
      %v1103 = vunpack.c.l.b16 %v902
      %v1104 = vunpack.c.h.b16 %v902
      %v1105 = vunpack.c.l.b16 %v903
      %v1106 = vunpack.c.h.b16 %v903
      %v1107 = vunpack.c.l.b16 %v904
      %v1108 = vunpack.c.h.b16 %v904
      %v1109 = vpack.c.b16 %v983, %v981
      %v1110 = vpack.c.b16 %v984, %v982
      %v1111 = vpack.c.b16 %v987, %v985
      %v1112 = vpack.c.b16 %v988, %v986
      %v1113 = vpack.c.b16 %v991, %v989
      %v1114 = vpack.c.b16 %v992, %v990
      %v1115 = vpack.c.b16 %v995, %v993
      %v1116 = vpack.c.b16 %v996, %v994
      %v1117 = vpack.c.b16 %v999, %v997
      %v1118 = vpack.c.b16 %v1000, %v998
      %v1119 = vpack.c.b16 %v1003, %v1001
      %v1120 = vpack.c.b16 %v1004, %v1002
      %v1121 = vpack.c.b16 %v1007, %v1005
      %v1122 = vpack.c.b16 %v1008, %v1006
      %v1123 = vpack.c.b16 %v1011, %v1009
      %v1124 = vpack.c.b16 %v1012, %v1010
      %v1125 = vpack.c.b16 %v1015, %v1013
      %v1126 = vpack.c.b16 %v1016, %v1014
      %v1127 = vpack.c.b16 %v1019, %v1017
      %v1128 = vpack.c.b16 %v1020, %v1018
      %v1129 = vpack.c.b16 %v1023, %v1021
      %v1130 = vpack.c.b16 %v1024, %v1022
      %v1131 = vpack.c.b16 %v1027, %v1025
      %v1132 = vpack.c.b16 %v1028, %v1026
      %v1133 = vpack.c.b16 %v1031, %v1029
      %v1134 = vpack.c.b16 %v1032, %v1030
      %v1135 = vpack.c.b16 %v1035, %v1033
      %v1136 = vpack.c.b16 %v1036, %v1034
      %v1137 = vpack.c.b16 %v1039, %v1037
      %v1138 = vpack.c.b16 %v1040, %v1038
      %v1139 = vpack.c.b16 %v1043, %v1041
      %v1140 = vpack.c.b16 %v1044, %v1042
      %v1141 = vpack.c.b16 %v1047, %v1045
      %v1142 = vpack.c.b16 %v1048, %v1046
      %v1143 = vpack.c.b16 %v1051, %v1049
      %v1144 = vpack.c.b16 %v1052, %v1050
      %v1145 = vpack.c.b16 %v1055, %v1053
      %v1146 = vpack.c.b16 %v1056, %v1054
      %v1147 = vpack.c.b16 %v1059, %v1057
      %v1148 = vpack.c.b16 %v1060, %v1058
      %v1149 = vpack.c.b16 %v1063, %v1061
      %v1150 = vpack.c.b16 %v1064, %v1062
      %v1151 = vpack.c.b16 %v1067, %v1065
      %v1152 = vpack.c.b16 %v1068, %v1066
      %v1153 = vpack.c.b16 %v1071, %v1069
      %v1154 = vpack.c.b16 %v1072, %v1070
      %v1155 = vpack.c.b16 %v1075, %v1073
      %v1156 = vpack.c.b16 %v1076, %v1074
      %v1157 = vpack.c.b16 %v1079, %v1077
      %v1158 = vpack.c.b16 %v1080, %v1078
      %v1159 = vpack.c.b16 %v1083, %v1081
      %v1160 = vpack.c.b16 %v1084, %v1082
      %v1161 = vpack.c.b16 %v1087, %v1085
      %v1162 = vpack.c.b16 %v1088, %v1086
      %v1163 = vpack.c.b16 %v1091, %v1089
      %v1164 = vpack.c.b16 %v1092, %v1090
      %v1165 = vpack.c.b16 %v1095, %v1093
      %v1166 = vpack.c.b16 %v1096, %v1094
      %v1167 = vpack.c.b16 %v1099, %v1097
      %v1168 = vpack.c.b16 %v1100, %v1098
      %v1169 = vpack.c.b16 %v1103, %v1101
      %v1170 = vpack.c.b16 %v1104, %v1102
      %v1171 = vpack.c.b16 %v1107, %v1105
      %v1172 = vpack.c.b16 %v1108, %v1106
      %1237 = vmatprep.subr.bf16.mxu0 %v1124
      %1238 = vmatpush1.bf16.msra.mxu0 %v1123
      %1239 = vmatprep.subr.bf16.mxu0 %v1122
      %1240 = vmatpush1.bf16.msra.mxu0 %v1121
      %1241 = vmatprep.subr.bf16.mxu0 %v1120
      %1242 = vmatpush1.bf16.msra.mxu0 %v1119
      %1243 = vmatprep.subr.bf16.mxu0 %v1118
      %1244 = vmatpush1.bf16.msra.mxu0 %v1117
      %1245 = vmatprep.subr.bf16.mxu0 %v1116
      %1246 = vmatpush1.bf16.msra.mxu0 %v1115
      %1247 = vmatprep.subr.bf16.mxu0 %v1114
      %1248 = vmatpush1.bf16.msra.mxu0 %v1113
      %1249 = vmatprep.subr.bf16.mxu0 %v1112
      %1250 = vmatpush1.bf16.msra.mxu0 %v1111
      %1251 = vmatprep.subr.bf16.mxu0 %v1110
      %1252 = vmatpush1.bf16.msra.mxu0 %v1109
      %1253 = vmatprep.subr.bf16.mxu0 %v1140
      %1254 = vmatpush2.bf16.msra.mxu0 %v1139
      %1255 = vmatprep.subr.bf16.mxu0 %v1138
      %1256 = vmatpush2.bf16.msra.mxu0 %v1137
      %1257 = vmatprep.subr.bf16.mxu0 %v1136
      %1258 = vmatpush2.bf16.msra.mxu0 %v1135
      %1259 = vmatprep.subr.bf16.mxu0 %v1134
      %1260 = vmatpush2.bf16.msra.mxu0 %v1133
      %1261 = vmatprep.subr.bf16.mxu0 %v1132
      %1262 = vmatpush2.bf16.msra.mxu0 %v1131
      %1263 = vmatprep.subr.bf16.mxu0 %v1130
      %1264 = vmatpush2.bf16.msra.mxu0 %v1129
      %1265 = vmatprep.subr.bf16.mxu0 %v1128
      %1266 = vmatpush2.bf16.msra.mxu0 %v1127
      %1267 = vmatprep.subr.bf16.mxu0 %v1126
      %1268 = vmatpush2.bf16.msra.mxu0 %v1125
      %1269 = vmatprep.mubr.bf16.mxu0 %v810
      %1270 = vmatmul.mubr.bf16.gmra.mxu0 %v809
      %v1271 = vpop.f32.mrf.mxu0
      %v1272 = vadd.f32 %v910, %v1271
      %v1273 = vpop.f32.mrf.mxu0
      %v1274 = vadd.f32 %v914, %v1273
      %v1275 = vpop.f32.mrf.mxu0
      %v1276 = vadd.f32 %v910, %v1275
      %v1277 = vpop.f32.mrf.mxu0
      %v1278 = vadd.f32 %v914, %v1277
      %1279 = vmatprep.mubr.bf16.mxu0 %v814
      %1280 = vmatmul.mubr.bf16.gmra.mxu0 %v813
      %v1281 = vpop.f32.mrf.mxu0
      %v1282 = vadd.f32 %v910, %v1281
      %v1283 = vpop.f32.mrf.mxu0
      %v1284 = vadd.f32 %v914, %v1283
      %v1285 = vpop.f32.mrf.mxu0
      %v1286 = vadd.f32 %v910, %v1285
      %v1287 = vpop.f32.mrf.mxu0
      %v1288 = vadd.f32 %v914, %v1287
      %1289 = vmatprep.mubr.bf16.mxu0 %v818
      %1290 = vmatmul.mubr.bf16.gmra.mxu0 %v817
      %v1291 = vpop.f32.mrf.mxu0
      %v1292 = vadd.f32 %v910, %v1291
      %v1293 = vpop.f32.mrf.mxu0
      %v1294 = vadd.f32 %v914, %v1293
      %v1295 = vpop.f32.mrf.mxu0
      %v1296 = vadd.f32 %v910, %v1295
      %v1297 = vpop.f32.mrf.mxu0
      %v1298 = vadd.f32 %v914, %v1297
      %1299 = vmatprep.mubr.bf16.mxu0 %v822
      %1300 = vmatmul.mubr.bf16.gmra.mxu0 %v821
      %v1301 = vpop.f32.mrf.mxu0
      %v1302 = vadd.f32 %v910, %v1301
      %v1303 = vpop.f32.mrf.mxu0
      %v1304 = vadd.f32 %v914, %v1303
      %v1305 = vpop.f32.mrf.mxu0
      %v1306 = vadd.f32 %v910, %v1305
      %v1307 = vpop.f32.mrf.mxu0
      %v1308 = vadd.f32 %v914, %v1307
      %1309 = vmatprep.mubr.bf16.mxu0 %v826
      %1310 = vmatmul.mubr.bf16.gmra.mxu0 %v825
      %v1311 = vpop.f32.mrf.mxu0
      %v1312 = vadd.f32 %v910, %v1311
      %v1313 = vpop.f32.mrf.mxu0
      %v1314 = vadd.f32 %v914, %v1313
      %v1315 = vpop.f32.mrf.mxu0
      %v1316 = vadd.f32 %v910, %v1315
      %v1317 = vpop.f32.mrf.mxu0
      %v1318 = vadd.f32 %v914, %v1317
      %1319 = vmatprep.mubr.bf16.mxu0 %v830
      %1320 = vmatmul.mubr.bf16.gmra.mxu0 %v829
      %v1321 = vpop.f32.mrf.mxu0
      %v1322 = vadd.f32 %v910, %v1321
      %v1323 = vpop.f32.mrf.mxu0
      %v1324 = vadd.f32 %v914, %v1323
      %v1325 = vpop.f32.mrf.mxu0
      %v1326 = vadd.f32 %v910, %v1325
      %v1327 = vpop.f32.mrf.mxu0
      %v1328 = vadd.f32 %v914, %v1327
      %1329 = vmatprep.mubr.bf16.mxu0 %v834
      %1330 = vmatmul.mubr.bf16.gmra.mxu0 %v833
      %v1331 = vpop.f32.mrf.mxu0
      %v1332 = vadd.f32 %v910, %v1331
      %v1333 = vpop.f32.mrf.mxu0
      %v1334 = vadd.f32 %v914, %v1333
      %v1335 = vpop.f32.mrf.mxu0
      %v1336 = vadd.f32 %v910, %v1335
      %v1337 = vpop.f32.mrf.mxu0
      %v1338 = vadd.f32 %v914, %v1337
      %1339 = vmatprep.mubr.bf16.mxu0 %v838
      %1340 = vmatmul.mubr.bf16.gmra.mxu0 %v837
      %v1341 = vpop.f32.mrf.mxu0
      %v1342 = vadd.f32 %v910, %v1341
      %v1343 = vpop.f32.mrf.mxu0
      %v1344 = vadd.f32 %v914, %v1343
      %v1345 = vpop.f32.mrf.mxu0
      %v1346 = vadd.f32 %v910, %v1345
      %v1347 = vpop.f32.mrf.mxu0
      %v1348 = vadd.f32 %v914, %v1347
      %1349 = vdwg.mxu0
      %1350 = vmatprep.subr.bf16.mxu0 %v1156
      %1351 = vmatpush1.bf16.msra.mxu0 %v1155
      %1352 = vmatprep.subr.bf16.mxu0 %v1154
      %1353 = vmatpush1.bf16.msra.mxu0 %v1153
      %1354 = vmatprep.subr.bf16.mxu0 %v1152
      %1355 = vmatpush1.bf16.msra.mxu0 %v1151
      %1356 = vmatprep.subr.bf16.mxu0 %v1150
      %1357 = vmatpush1.bf16.msra.mxu0 %v1149
      %1358 = vmatprep.subr.bf16.mxu0 %v1148
      %1359 = vmatpush1.bf16.msra.mxu0 %v1147
      %1360 = vmatprep.subr.bf16.mxu0 %v1146
      %1361 = vmatpush1.bf16.msra.mxu0 %v1145
      %1362 = vmatprep.subr.bf16.mxu0 %v1144
      %1363 = vmatpush1.bf16.msra.mxu0 %v1143
      %1364 = vmatprep.subr.bf16.mxu0 %v1142
      %1365 = vmatpush1.bf16.msra.mxu0 %v1141
      %1366 = vmatprep.subr.bf16.mxu0 %v1172
      %1367 = vmatpush2.bf16.msra.mxu0 %v1171
      %1368 = vmatprep.subr.bf16.mxu0 %v1170
      %1369 = vmatpush2.bf16.msra.mxu0 %v1169
      %1370 = vmatprep.subr.bf16.mxu0 %v1168
      %1371 = vmatpush2.bf16.msra.mxu0 %v1167
      %1372 = vmatprep.subr.bf16.mxu0 %v1166
      %1373 = vmatpush2.bf16.msra.mxu0 %v1165
      %1374 = vmatprep.subr.bf16.mxu0 %v1164
      %1375 = vmatpush2.bf16.msra.mxu0 %v1163
      %1376 = vmatprep.subr.bf16.mxu0 %v1162
      %1377 = vmatpush2.bf16.msra.mxu0 %v1161
      %1378 = vmatprep.subr.bf16.mxu0 %v1160
      %1379 = vmatpush2.bf16.msra.mxu0 %v1159
      %1380 = vmatprep.subr.bf16.mxu0 %v1158
      %1381 = vmatpush2.bf16.msra.mxu0 %v1157
      %1382 = vmatprep.mubr.bf16.mxu0 %v812
      %1383 = vmatmul.mubr.bf16.gmra.mxu0 %v811
      %v1384 = vpop.f32.mrf.mxu0
      %v1385 = vadd.f32 %v1272, %v1384
      %v1386 = vpop.f32.mrf.mxu0
      %v1387 = vadd.f32 %v1274, %v1386
      %v1388 = vpop.f32.mrf.mxu0
      %v1389 = vadd.f32 %v1276, %v1388
      %v1390 = vpop.f32.mrf.mxu0
      %v1391 = vadd.f32 %v1278, %v1390
      %1392 = vmatprep.mubr.bf16.mxu0 %v816
      %1393 = vmatmul.mubr.bf16.gmra.mxu0 %v815
      %v1394 = vpop.f32.mrf.mxu0
      %v1395 = vadd.f32 %v1282, %v1394
      %v1396 = vpop.f32.mrf.mxu0
      %v1397 = vadd.f32 %v1284, %v1396
      %v1398 = vpop.f32.mrf.mxu0
      %v1399 = vadd.f32 %v1286, %v1398
      %v1400 = vpop.f32.mrf.mxu0
      %v1401 = vadd.f32 %v1288, %v1400
      %1402 = vmatprep.mubr.bf16.mxu0 %v820
      %1403 = vmatmul.mubr.bf16.gmra.mxu0 %v819
      %v1404 = vpop.f32.mrf.mxu0
      %v1405 = vadd.f32 %v1292, %v1404
      %v1406 = vpop.f32.mrf.mxu0
      %v1407 = vadd.f32 %v1294, %v1406
      %v1408 = vpop.f32.mrf.mxu0
      %v1409 = vadd.f32 %v1296, %v1408
      %v1410 = vpop.f32.mrf.mxu0
      %v1411 = vadd.f32 %v1298, %v1410
      %1412 = vmatprep.mubr.bf16.mxu0 %v824
      %1413 = vmatmul.mubr.bf16.gmra.mxu0 %v823
      %v1414 = vpop.f32.mrf.mxu0
      %v1415 = vadd.f32 %v1302, %v1414
      %v1416 = vpop.f32.mrf.mxu0
      %v1417 = vadd.f32 %v1304, %v1416
      %v1418 = vpop.f32.mrf.mxu0
      %v1419 = vadd.f32 %v1306, %v1418
      %v1420 = vpop.f32.mrf.mxu0
      %v1421 = vadd.f32 %v1308, %v1420
      %1422 = vmatprep.mubr.bf16.mxu0 %v828
      %1423 = vmatmul.mubr.bf16.gmra.mxu0 %v827
      %v1424 = vpop.f32.mrf.mxu0
      %v1425 = vadd.f32 %v1312, %v1424
      %v1426 = vpop.f32.mrf.mxu0
      %v1427 = vadd.f32 %v1314, %v1426
      %v1428 = vpop.f32.mrf.mxu0
      %v1429 = vadd.f32 %v1316, %v1428
      %v1430 = vpop.f32.mrf.mxu0
      %v1431 = vadd.f32 %v1318, %v1430
      %1432 = vmatprep.mubr.bf16.mxu0 %v832
      %1433 = vmatmul.mubr.bf16.gmra.mxu0 %v831
      %v1434 = vpop.f32.mrf.mxu0
      %v1435 = vadd.f32 %v1322, %v1434
      %v1436 = vpop.f32.mrf.mxu0
      %v1437 = vadd.f32 %v1324, %v1436
      %v1438 = vpop.f32.mrf.mxu0
      %v1439 = vadd.f32 %v1326, %v1438
      %v1440 = vpop.f32.mrf.mxu0
      %v1441 = vadd.f32 %v1328, %v1440
      %1442 = vmatprep.mubr.bf16.mxu0 %v836
      %1443 = vmatmul.mubr.bf16.gmra.mxu0 %v835
      %v1444 = vpop.f32.mrf.mxu0
      %v1445 = vadd.f32 %v1332, %v1444
      %v1446 = vpop.f32.mrf.mxu0
      %v1447 = vadd.f32 %v1334, %v1446
      %v1448 = vpop.f32.mrf.mxu0
      %v1449 = vadd.f32 %v1336, %v1448
      %v1450 = vpop.f32.mrf.mxu0
      %v1451 = vadd.f32 %v1338, %v1450
      %1452 = vmatprep.mubr.bf16.mxu0 %v840
      %1453 = vmatmul.mubr.bf16.gmra.mxu0 %v839
      %v1454 = vpop.f32.mrf.mxu0
      %v1455 = vadd.f32 %v1342, %v1454
      %v1456 = vpop.f32.mrf.mxu0
      %v1457 = vadd.f32 %v1344, %v1456
      %v1458 = vpop.f32.mrf.mxu0
      %v1459 = vadd.f32 %v1346, %v1458
      %v1460 = vpop.f32.mrf.mxu0
      %v1461 = vadd.f32 %v1348, %v1460
      %1462 = vdwg.mxu0
      %v1463 = vtanh.pop %v1385
      %v1464 = vtanh.pop %v1387
      %v1465 = vtanh.pop %v1389
      %v1466 = vtanh.pop %v1391
      %v1467 = vtanh.pop %v1395
      %v1468 = vtanh.pop %v1397
      %v1469 = vtanh.pop %v1399
      %v1470 = vtanh.pop %v1401
      %v1471 = vtanh.pop %v1405
      %v1472 = vtanh.pop %v1407
      %v1473 = vtanh.pop %v1409
      %v1474 = vtanh.pop %v1411
      %v1475 = vtanh.pop %v1415
      %v1476 = vtanh.pop %v1417
      %v1477 = vtanh.pop %v1419
      %v1478 = vtanh.pop %v1421
      %v1479 = vtanh.pop %v1425
      %v1480 = vtanh.pop %v1427
      %v1481 = vtanh.pop %v1429
      %v1482 = vtanh.pop %v1431
      %v1483 = vtanh.pop %v1435
      %v1484 = vtanh.pop %v1437
      %v1485 = vtanh.pop %v1439
      %v1486 = vtanh.pop %v1441
      %v1487 = vtanh.pop %v1445
      %v1488 = vtanh.pop %v1447
      %v1489 = vtanh.pop %v1449
      %v1490 = vtanh.pop %v1451
      %v1491 = vtanh.pop %v1455
      %v1492 = vtanh.pop %v1457
      %v1493 = vtanh.pop %v1459
      %v1494 = vtanh.pop %v1461
      %1495 = vst [vmem:[%s285] sm:$0xff] %v1463
      %1496 = vst [vmem:[%s285 + $0x8] sm:$0xff] %v1464
      %1497 = vst [vmem:[%s285 + $0x10] sm:$0xff] %v1465
      %1498 = vst [vmem:[%s285 + $0x18] sm:$0xff] %v1466
      %1499 = vst [vmem:[%s285 + $0x20] sm:$0xff] %v1467
      %1500 = vst [vmem:[%s285 + $0x28] sm:$0xff] %v1468
      %1501 = vst [vmem:[%s285 + $0x30] sm:$0xff] %v1469
      %1502 = vst [vmem:[%s285 + $0x38] sm:$0xff] %v1470
      %1503 = vst [vmem:[%s285 + $0x40] sm:$0xff] %v1471
      %1504 = vst [vmem:[%s285 + $0x48] sm:$0xff] %v1472
      %1505 = vst [vmem:[%s285 + $0x50] sm:$0xff] %v1473
      %1506 = vst [vmem:[%s285 + $0x58] sm:$0xff] %v1474
      %1507 = vst [vmem:[%s285 + $0x60] sm:$0xff] %v1475
      %1508 = vst [vmem:[%s285 + $0x68] sm:$0xff] %v1476
      %1509 = vst [vmem:[%s285 + $0x70] sm:$0xff] %v1477
      %1510 = vst [vmem:[%s285 + $0x78] sm:$0xff] %v1478
      %1511 = vst [vmem:[%s285 + $0x80] sm:$0xff] %v1479
      %1512 = vst [vmem:[%s285 + $0x88] sm:$0xff] %v1480
      %1513 = vst [vmem:[%s285 + $0x90] sm:$0xff] %v1481
      %1514 = vst [vmem:[%s285 + $0x98] sm:$0xff] %v1482
      %1515 = vst [vmem:[%s285 + $0xa0] sm:$0xff] %v1483
      %1516 = vst [vmem:[%s285 + $0xa8] sm:$0xff] %v1484
      %1517 = vst [vmem:[%s285 + $0xb0] sm:$0xff] %v1485
      %1518 = vst [vmem:[%s285 + $0xb8] sm:$0xff] %v1486
      %1519 = vst [vmem:[%s285 + $0xc0] sm:$0xff] %v1487
      %1520 = vst [vmem:[%s285 + $0xc8] sm:$0xff] %v1488
      %1521 = vst [vmem:[%s285 + $0xd0] sm:$0xff] %v1489
      %1522 = vst [vmem:[%s285 + $0xd8] sm:$0xff] %v1490
      %1523 = vst [vmem:[%s285 + $0xe0] sm:$0xff] %v1491
      %1524 = vst [vmem:[%s285 + $0xe8] sm:$0xff] %v1492
      %1525 = vst [vmem:[%s285 + $0xf0] sm:$0xff] %v1493
      %1526 = vst [vmem:[%s285 + $0xf8] sm:$0xff] %v1494
      %s1527 = smul.u32 16, %s18
      %p1528 = scmp.lt.s32.totalorder %s1527, 31
      %s1529 = scalar_select %p1528, %s1527, 31
      %s1530 = smul.addr %s1529, 2
      %s1531 = smul.addr %s1530, 8
      %s1532 = scalar_lea.vmem %s7, %s1531
      // Predicated region
      $region49: #{decoder_forward.3} parent=47 // pred_check
        %p1533 = pneg %p188
      $region50: #{decoder_forward.3} parent=47 // pred_check_branch
        %1535 = sbr.rel (%p1533) target = $region52
      $region51: #{decoder_forward.3} parent=47 // pred_region
        %s1536 = smul.u32 16, %s18
      $region52: #{decoder_forward.3} parent=47 // pred_fallthru
        _
    $region48: #{decoder_forward.3} parent=5 // pred_fallthru
      _
    %p1537 = scmp.le.s32.totalorder 2, %s13
    // Predicated region
    $region53: #{decoder_forward.3} parent=5 // pred_check
      %p1538 = pneg %p1537
    $region54: #{decoder_forward.3} parent=5 // pred_check_branch
      %1540 = sbr.rel (%p1538) target = $region56
    $region55: #{decoder_forward.3} parent=5 // pred_region
      %s1541 = ssub.s32 %s13, 2
      // Predicated region
      $region57: #{decoder_forward.3} parent=55 // pred_check
        %p1542 = pneg %p194
      $region58: #{decoder_forward.3} parent=55 // pred_check_branch
        %1544 = sbr.rel (%p1542) target = $region60
      $region59: #{decoder_forward.3} parent=55 // pred_region
        %s1545 = smul.u32 16, %s19
        %p1546 = scmp.lt.s32.totalorder %s1545, 31
        %s1547 = scalar_select %p1546, %s1545, 31
        %s1548 = smul.addr %s1547, 2
        %s1549 = smul.addr %s1548, 8
        %s1550 = scalar_lea.vmem %s7, %s1549
      $region60: #{decoder_forward.3} parent=55 // pred_fallthru
        _
    $region56: #{decoder_forward.3} parent=5 // pred_fallthru
      _
  $region6: #{decoder_forward.3} parent=0 // loop_footer
    %s17 = sadd.s32 1, %s13
  $region7: #{decoder_forward.3} parent=0 // loop_footer_branch
    %12 = sbr.rel target = $region3
  $region8: #{decoder_forward.3} parent=0 // loop_exit
    _

// kernel: decoder_forward.2
$region0: #{decoder_forward.2}
  #allocation0 [shape = 'u32[]', space=smem, size = 0x4, offset = 0x4, fixed_abs, tag = 'smem constant byte address 0x4 - core index']
  #allocation1 [shape = 'u32[144,128]{1,0:T(1,128)}', space=vmem, size = 0x12000, scoped, tag = 'internal scratch']
  %s0 = inlined_call_operand.vmem [shape: f32[256,32], index: 0, kind: input, shape index: {}]
  %s1 = inlined_call_operand.vmem [shape: bf16[32,512], index: 1, kind: input, shape index: {}]
  %s2 = inlined_call_operand.vmem [shape: f32[1,512], index: 2, kind: input, shape index: {}]
  %s3 = inlined_call_operand.hbm [shape: bf16[512,512], index: 3, kind: input, shape index: {}]
  %s4 = inlined_call_operand.vmem [shape: f32[256,512], index: 4, kind: output, shape index: {0}]
  %s5 = inlined_call_operand.vmem [shape: f32[1,512], index: 5, kind: output, shape index: {1}]
  %s6 = inlined_call_operand.vmem [shape: f32[1,512], index: 6, kind: output, shape index: {2}]
  %7 = xla_tuple %s4, %s5, %s6
  %s8 = sld [smem:[#allocation0]]
  $region73: #{decoder_forward.2} parent=0
    _
  %s10 = ssub.s32 1, %s8
  %s11 = scalar_select 0, %s10, %s8
  $region1: #{decoder_forward.2} parent=0
    #allocation2 [shape = 'u8[524288]{0}', space=vmem, size = 0x80000, scoped, tag = 'input window, operand 3, single buffered']
    #allocation3 [shape = 's32[2]{0}', space=sflag, size = 0x8, scoped, tag = 'scoped memory for decoder_forward.2']
    %12 = vsyncpa [#allocation3], 0
    loop: start=0, step=1, limit=4
    $region2: #{decoder_forward.2} parent=1 // loop_pre_header
      _
    $region3: #{decoder_forward.2} parent=1 // loop_header
      %s14 = sphi 0, %s18
      %p15 = scmp.ge.s32.totalorder %s14, 4
      %s24 = sphi 0, %s26
      %s27 = sphi 0, %s24
      %s28 = sphi 0, %s27
      %s44 = sphi 0, %s28
      %s48 = sphi 0, %s48
      %s50 = sphi 0, %s48
      %s51 = sphi 0, %s50
      %s65 = sphi 0, %s51
      %s69 = sphi 0, %s69
      %s71 = sphi 0, %s69
      %s72 = sphi 0, %s71
      %s86 = sphi 0, %s72
      %s90 = sphi 0, %s90
      %s92 = sphi 0, %s90
      %s93 = sphi 0, %s92
      %s107 = sphi 0, %s93
      %s113 = sphi 0, %s115
      %s116 = sphi 0, %s113
      %s117 = sphi 0, %s116
      %s133 = sphi 0, %s117
      %s137 = sphi 0, %s137
      %s139 = sphi 0, %s137
      %s140 = sphi 0, %s139
      %s154 = sphi 0, %s140
      %s158 = sphi 0, %s158
      %s160 = sphi 0, %s158
      %s161 = sphi 0, %s160
      %s175 = sphi 0, %s161
    $region4: #{decoder_forward.2} parent=1 // loop_header_branch
      %17 = sbr.rel (%p15) target = $region8
    $region5: #{decoder_forward.2} parent=1 // loop_body
      %s19 = ssub.s32 %s14, 1
      %s20 = ssub.s32 %s14, 2
      %s21 = sadd.s32 %s14, 1
      %s22 = ssub.s32 %s14, %s21
      %p23 = scmp.eq.s32.totalorder %s22, 0
      %s25 = sadd.s32 %s24, 1
      %s26 = scalar_select %p23, %s24, %s25
      %p29 = pneg %p23
      %p30 = scmp.eq.s32.totalorder %s14, 1
      %p31 = por %p29, %p30
      %p32 = scmp.ne.s32.totalorder %s24, %s27
      %p33 = scmp.eq.s32.totalorder %s14, 0
      %p34 = por %p32, %p33
      %p35 = scmp.ne.s32.totalorder %s24, %s27
      %p36 = scmp.eq.s32.totalorder %s19, 1
      %p37 = por %p35, %p36
      %p38 = scmp.ne.s32.totalorder %s27, %s28
      %p39 = scmp.eq.s32.totalorder %s19, 0
      %p40 = por %p38, %p39
      %p41 = scmp.ne.s32.totalorder %s27, %s28
      %p42 = scmp.eq.s32.totalorder %s20, 1
      %p43 = por %p41, %p42
      %p45 = scmp.ne.s32.totalorder %s28, %s44
      %p46 = scmp.eq.s32.totalorder %s20, 0
      %p47 = por %p45, %p46
      %s49 = sadd.s32 %s48, 1
      %p52 = scmp.eq.s32.totalorder %s14, 1
      %p53 = scmp.ne.s32.totalorder %s48, %s50
      %p54 = scmp.eq.s32.totalorder %s14, 0
      %p55 = por %p53, %p54
      %p56 = scmp.ne.s32.totalorder %s48, %s50
      %p57 = scmp.eq.s32.totalorder %s19, 1
      %p58 = por %p56, %p57
      %p59 = scmp.ne.s32.totalorder %s50, %s51
      %p60 = scmp.eq.s32.totalorder %s19, 0
      %p61 = por %p59, %p60
      %p62 = scmp.ne.s32.totalorder %s50, %s51
      %p63 = scmp.eq.s32.totalorder %s20, 1
      %p64 = por %p62, %p63
      %p66 = scmp.ne.s32.totalorder %s51, %s65
      %p67 = scmp.eq.s32.totalorder %s20, 0
      %p68 = por %p66, %p67
      %s70 = sadd.s32 %s69, 1
      %p73 = scmp.eq.s32.totalorder %s14, 1
      %p74 = scmp.ne.s32.totalorder %s69, %s71
      %p75 = scmp.eq.s32.totalorder %s14, 0
      %p76 = por %p74, %p75
      %p77 = scmp.ne.s32.totalorder %s69, %s71
      %p78 = scmp.eq.s32.totalorder %s19, 1
      %p79 = por %p77, %p78
      %p80 = scmp.ne.s32.totalorder %s71, %s72
      %p81 = scmp.eq.s32.totalorder %s19, 0
      %p82 = por %p80, %p81
      %p83 = scmp.ne.s32.totalorder %s71, %s72
      %p84 = scmp.eq.s32.totalorder %s20, 1
      %p85 = por %p83, %p84
      %p87 = scmp.ne.s32.totalorder %s72, %s86
      %p88 = scmp.eq.s32.totalorder %s20, 0
      %p89 = por %p87, %p88
      %s91 = sadd.s32 %s90, 1
      %p94 = scmp.eq.s32.totalorder %s14, 1
      %p95 = scmp.ne.s32.totalorder %s90, %s92
      %p96 = scmp.eq.s32.totalorder %s14, 0
      %p97 = por %p95, %p96
      %p98 = scmp.ne.s32.totalorder %s90, %s92
      %p99 = scmp.eq.s32.totalorder %s19, 1
      %p100 = por %p98, %p99
      %p101 = scmp.ne.s32.totalorder %s92, %s93
      %p102 = scmp.eq.s32.totalorder %s19, 0
      %p103 = por %p101, %p102
      %p104 = scmp.ne.s32.totalorder %s92, %s93
      %p105 = scmp.eq.s32.totalorder %s20, 1
      %p106 = por %p104, %p105
      %p108 = scmp.ne.s32.totalorder %s93, %s107
      %p109 = scmp.eq.s32.totalorder %s20, 0
      %p110 = por %p108, %p109
      %s111 = ssub.s32 %s14, %s21
      %p112 = scmp.eq.s32.totalorder %s111, 0
      %s114 = sadd.s32 %s113, 1
      %s115 = scalar_select %p112, %s113, %s114
      %p118 = pneg %p112
      %p119 = scmp.eq.s32.totalorder %s14, 1
      %p120 = por %p118, %p119
      %p121 = scmp.ne.s32.totalorder %s113, %s116
      %p122 = scmp.eq.s32.totalorder %s14, 0
      %p123 = por %p121, %p122
      %p124 = scmp.ne.s32.totalorder %s113, %s116
      %p125 = scmp.eq.s32.totalorder %s19, 1
      %p126 = por %p124, %p125
      %p127 = scmp.ne.s32.totalorder %s116, %s117
      %p128 = scmp.eq.s32.totalorder %s19, 0
      %p129 = por %p127, %p128
      %p130 = scmp.ne.s32.totalorder %s116, %s117
      %p131 = scmp.eq.s32.totalorder %s20, 1
      %p132 = por %p130, %p131
      %p134 = scmp.ne.s32.totalorder %s117, %s133
      %p135 = scmp.eq.s32.totalorder %s20, 0
      %p136 = por %p134, %p135
      %s138 = sadd.s32 %s137, 1
      %p141 = scmp.eq.s32.totalorder %s14, 1
      %p142 = scmp.ne.s32.totalorder %s137, %s139
      %p143 = scmp.eq.s32.totalorder %s14, 0
      %p144 = por %p142, %p143
      %p145 = scmp.ne.s32.totalorder %s137, %s139
      %p146 = scmp.eq.s32.totalorder %s19, 1
      %p147 = por %p145, %p146
      %p148 = scmp.ne.s32.totalorder %s139, %s140
      %p149 = scmp.eq.s32.totalorder %s19, 0
      %p150 = por %p148, %p149
      %p151 = scmp.ne.s32.totalorder %s139, %s140
      %p152 = scmp.eq.s32.totalorder %s20, 1
      %p153 = por %p151, %p152
      %p155 = scmp.ne.s32.totalorder %s140, %s154
      %p156 = scmp.eq.s32.totalorder %s20, 0
      %p157 = por %p155, %p156
      %s159 = sadd.s32 %s158, 1
      %p162 = scmp.eq.s32.totalorder %s14, 1
      %p163 = scmp.ne.s32.totalorder %s158, %s160
      %p164 = scmp.eq.s32.totalorder %s14, 0
      %p165 = por %p163, %p164
      %p166 = scmp.ne.s32.totalorder %s158, %s160
      %p167 = scmp.eq.s32.totalorder %s19, 1
      %p168 = por %p166, %p167
      %p169 = scmp.ne.s32.totalorder %s160, %s161
      %p170 = scmp.eq.s32.totalorder %s19, 0
      %p171 = por %p169, %p170
      %p172 = scmp.ne.s32.totalorder %s160, %s161
      %p173 = scmp.eq.s32.totalorder %s20, 1
      %p174 = por %p172, %p173
      %p176 = scmp.ne.s32.totalorder %s161, %s175
      %p177 = scmp.eq.s32.totalorder %s20, 0
      %p178 = por %p176, %p177
      %p179 = scmp.le.s32.totalorder 1, %s14
      %p180 = scmp.lt.s32.totalorder %s14, 3
      %p181 = pnand %p179, %p180
      %p182 = pneg %p181
      // Predicated region
      $region9: #{decoder_forward.2} parent=5 // pred_check
        _
      $region10: #{decoder_forward.2} parent=5 // pred_check_branch
        %184 = sbr.rel (%p181) target = $region12
      $region11: #{decoder_forward.2} parent=5 // pred_region
        %s185 = ssub.s32 %s14, 1
        // Predicated region
        $region13: #{decoder_forward.2} parent=11 // pred_check
          %p186 = pneg %p61
        $region14: #{decoder_forward.2} parent=11 // pred_check_branch
          %188 = sbr.rel (%p186) target = $region16
        $region15: #{decoder_forward.2} parent=11 // pred_region
          _
        $region16: #{decoder_forward.2} parent=11 // pred_fallthru
          _
        // Predicated region
        $region17: #{decoder_forward.2} parent=11 // pred_check
          %p189 = pneg %p82
        $region18: #{decoder_forward.2} parent=11 // pred_check_branch
          %191 = sbr.rel (%p189) target = $region20
        $region19: #{decoder_forward.2} parent=11 // pred_region
          _
        $region20: #{decoder_forward.2} parent=11 // pred_fallthru
          _
        // Predicated region
        $region21: #{decoder_forward.2} parent=11 // pred_check
          %p192 = pneg %p103
        $region22: #{decoder_forward.2} parent=11 // pred_check_branch
          %194 = sbr.rel (%p192) target = $region24
        $region23: #{decoder_forward.2} parent=11 // pred_region
          %s196 = ssub.s32 16384, 16384
          %197 = vsyncadd [#allocation3], %s196
          %s198 = sshll.u32 [#allocation2], 4
          %s199 = int_to_ptr.vmem [resolvable:$true] %s198
          %204 = dma.hbm_to_vmem [thread:$0]  %s3, 16384, %s199, [#allocation3], 256, 256, 16
        $region24: #{decoder_forward.2} parent=11 // pred_fallthru
          _
      $region12: #{decoder_forward.2} parent=5 // pred_fallthru
        _
      %p205 = scmp.lt.s32.totalorder %s14, 2
      // Predicated region
      $region25: #{decoder_forward.2} parent=5 // pred_check
        %p206 = pneg %p205
      $region26: #{decoder_forward.2} parent=5 // pred_check_branch
        %208 = sbr.rel (%p206) target = $region28
      $region27: #{decoder_forward.2} parent=5 // pred_region
        // Predicated region
        $region29: #{decoder_forward.2} parent=27 // pred_check
          %p209 = pneg %p34
        $region30: #{decoder_forward.2} parent=27 // pred_check_branch
          %211 = sbr.rel (%p209) target = $region32
        $region31: #{decoder_forward.2} parent=27 // pred_region
          %s212 = smul.u32 16, %s14
          %p213 = scmp.lt.s32.totalorder %s212, 31
          %s214 = scalar_select %p213, %s212, 31
          %s215 = smul.addr %s214, 8
          %s216 = scalar_lea.vmem %s0, %s215
          %s217 = smul.u32 16, %s14
        $region32: #{decoder_forward.2} parent=27 // pred_fallthru
          _
      $region28: #{decoder_forward.2} parent=5 // pred_fallthru
        _
      %p218 = scmp.le.s32.totalorder 1, %s14
      %p219 = scmp.lt.s32.totalorder %s14, 3
      %p220 = pnand %p218, %p219
      %p221 = pneg %p220
      // Predicated region
      $region33: #{decoder_forward.2} parent=5 // pred_check
        _
      $region34: #{decoder_forward.2} parent=5 // pred_check_branch
        %223 = sbr.rel (%p220) target = $region36
      $region35: #{decoder_forward.2} parent=5 // pred_region
        %s224 = ssub.s32 %s14, 1
        // Predicated region
        $region37: #{decoder_forward.2} parent=35 // pred_check
          %p225 = pneg %p103
        $region38: #{decoder_forward.2} parent=35 // pred_check_branch
          %227 = sbr.rel (%p225) target = $region40
        $region39: #{decoder_forward.2} parent=35 // pred_region
          %228 = dma.done [#allocation3], 16384
        $region40: #{decoder_forward.2} parent=35 // pred_fallthru
          _
        %s229 = smul.u32 16, %s19
        %p230 = scmp.lt.s32.totalorder %s229, 31
        %s231 = scalar_select %p230, %s229, 31
        %s232 = smul.addr %s231, 8
        %s233 = scalar_lea.vmem %s0, %s232
        %p234 = pneg %p40
        %p235 = pneg %p37
        %p236 = pneg %p61
        %p237 = pneg %p58
        %p238 = pneg %p82
        %p239 = pneg %p79
        %p240 = pneg %p103
        %p241 = pneg %p100
        %p242 = pneg %p129
        %p243 = pneg %p126
        %s244 = smul.u32 16, %s19
        %p245 = scmp.lt.s32.totalorder %s244, 31
        %s246 = scalar_select %p245, %s244, 31
        %s247 = smul.addr %s246, 4
        %s248 = smul.addr %s247, 8
        %s249 = scalar_lea.vmem %s4, %s248
        %p250 = pneg %p150
        %p251 = pneg %p147
        %p252 = pneg %p171
        %p253 = pneg %p168
        %s254 = smul.u32 16, %s19
        %p255 = scmp.lt.s32.totalorder %s254, 31
        %s256 = scalar_select %p255, %s254, 31
        %s257 = smul.addr %s256, 8
        %s258 = scalar_lea.vmem %s0, %s257
        %s259 = smul.u32 16, %s19
        %s260 = smul.u32 16, %s19
        %p261 = scmp.lt.s32.totalorder %s260, 31
        %s262 = scalar_select %p261, %s260, 31
        %s263 = smul.addr %s262, 4
        %s264 = smul.addr %s263, 8
        %s265 = scalar_lea.vmem %s4, %s264
        %s266 = smul.u32 16, %s19
        %p268 = scmp.eq.s32.totalorder %s19, 0
        // Predicated region
        $region41: #{decoder_forward.2} parent=35 // pred_check
          %p269 = pneg %p268
        $region42: #{decoder_forward.2} parent=35 // pred_check_branch
          %271 = sbr.rel (%p269) target = $region44
        $region43: #{decoder_forward.2} parent=35 // pred_region
          %v272 = vlaneseq
          %vm273 = vcmp.ge.s32.totalorder %v272, 0
          %vm274 = vcmp.lt.s32.totalorder %v272, 512
          %vm275 = vmand %vm273, %vm274
          %276 = vst.msk [vmem:[%s5] sm:$0xf] %vm275, 0.0
          %277 = vst.msk [vmem:[%s6] sm:$0xf] %vm275, 0.0
        $region44: #{decoder_forward.2} parent=35 // pred_fallthru
          _
        %v278 = vld [vmem:[%s258] sm:$0xff]
        %v279 = vld [vmem:[%s258 + $0x8] sm:$0xff]
        %v280 = vld [vmem:[%s258 + $0x10] sm:$0xff]
        %v281 = vld [vmem:[%s258 + $0x18] sm:$0xff]
        %v282 = vld [vmem:[%s258 + $0x20] sm:$0xff]
        %v283 = vld [vmem:[%s258 + $0x28] sm:$0xff]
        %v284 = vld [vmem:[%s258 + $0x30] sm:$0xff]
        %v285 = vld [vmem:[%s258 + $0x38] sm:$0xff]
        %v286 = vld [vmem:[%s258 + $0x40] sm:$0xff]
        %v287 = vld [vmem:[%s258 + $0x48] sm:$0xff]
        %v288 = vld [vmem:[%s258 + $0x50] sm:$0xff]
        %v289 = vld [vmem:[%s258 + $0x58] sm:$0xff]
        %v290 = vld [vmem:[%s258 + $0x60] sm:$0xff]
        %v291 = vld [vmem:[%s258 + $0x68] sm:$0xff]
        %v292 = vld [vmem:[%s258 + $0x70] sm:$0xff]
        %v293 = vld [vmem:[%s258 + $0x78] sm:$0xff]
        %v294 = vpack.c.bf16 %v279, %v278
        %v295 = vpack.c.bf16 %v281, %v280
        %v296 = vpack.c.bf16 %v283, %v282
        %v297 = vpack.c.bf16 %v285, %v284
        %v298 = vpack.c.bf16 %v287, %v286
        %v299 = vpack.c.bf16 %v289, %v288
        %v300 = vpack.c.bf16 %v291, %v290
        %v301 = vpack.c.bf16 %v293, %v292
        %v302 = vld [vmem:[%s1] sm:$0xff]
        %v303 = vld [vmem:[%s1 + $0x8] sm:$0xff]
        %v304 = vld [vmem:[%s1 + $0x10] sm:$0xff]
        %v305 = vld [vmem:[%s1 + $0x18] sm:$0xff]
        %v306 = vld [vmem:[%s1 + $0x20] sm:$0xff]
        %v307 = vld [vmem:[%s1 + $0x28] sm:$0xff]
        %v308 = vld [vmem:[%s1 + $0x30] sm:$0xff]
        %v309 = vld [vmem:[%s1 + $0x38] sm:$0xff]
        %v310 = vld [vmem:[%s2] sm:$0xf]
        %v312 = vlaneseq
        %v313 = vshrl.u32 %v312, 7
        %v314 = vsub.s32 0, %v313
        %v315 = vrot.slane %v310, %v314
        %v316 = vlaneseq
        %v317 = vshrl.u32 %v316, 7
        %v318 = vsub.s32 1, %v317
        %v319 = vrot.slane %v310, %v318
        %v320 = vlaneseq
        %v321 = vshrl.u32 %v320, 7
        %v322 = vsub.s32 2, %v321
        %v323 = vrot.slane %v310, %v322
        %v324 = vlaneseq
        %v325 = vshrl.u32 %v324, 7
        %v326 = vsub.s32 3, %v325
        %v327 = vrot.slane %v310, %v326
        %v340 = vunpack.c.l.b16 %v302
        %v341 = vunpack.c.h.b16 %v302
        %v342 = vunpack.c.l.b16 %v303
        %v343 = vunpack.c.h.b16 %v303
        %v344 = vunpack.c.l.b16 %v304
        %v345 = vunpack.c.h.b16 %v304
        %v346 = vunpack.c.l.b16 %v305
        %v347 = vunpack.c.h.b16 %v305
        %v348 = vunpack.c.l.b16 %v306
        %v349 = vunpack.c.h.b16 %v306
        %v350 = vunpack.c.l.b16 %v307
        %v351 = vunpack.c.h.b16 %v307
        %v352 = vunpack.c.l.b16 %v308
        %v353 = vunpack.c.h.b16 %v308
        %v354 = vunpack.c.l.b16 %v309
        %v355 = vunpack.c.h.b16 %v309
        %v356 = vpack.c.b16 %v344, %v340
        %v357 = vpack.c.b16 %v345, %v341
        %v358 = vpack.c.b16 %v346, %v342
        %v359 = vpack.c.b16 %v347, %v343
        %v360 = vpack.c.b16 %v352, %v348
        %v361 = vpack.c.b16 %v353, %v349
        %v362 = vpack.c.b16 %v354, %v350
        %v363 = vpack.c.b16 %v355, %v351
        %vm372 = vcmask 261120
        %v374 = vsel %vm372, %v294, 0
        %v377 = vsel %vm372, %v295, 0
        %v380 = vsel %vm372, %v296, 0
        %v383 = vsel %vm372, %v297, 0
        %v386 = vsel %vm372, %v298, 0
        %v389 = vsel %vm372, %v299, 0
        %v392 = vsel %vm372, %v300, 0
        %v395 = vsel %vm372, %v301, 0
        %397 = vmatprep.subr.bf16.mxu0 0
        %398 = vmatpush1.bf16.msra.mxu0 0
        %399 = vmatprep.subr.bf16.mxu0 0
        %400 = vmatpush1.bf16.msra.mxu0 0
        %401 = vmatprep.subr.bf16.mxu0 0
        %402 = vmatpush1.bf16.msra.mxu0 0
        %403 = vmatprep.subr.bf16.mxu0 0
        %404 = vmatpush1.bf16.msra.mxu0 0
        %405 = vmatprep.subr.bf16.mxu0 0
        %406 = vmatpush1.bf16.msra.mxu0 0
        %407 = vmatprep.subr.bf16.mxu0 0
        %408 = vmatpush1.bf16.msra.mxu0 0
        %409 = vmatprep.subr.bf16.mxu0 %v361
        %410 = vmatpush1.bf16.msra.mxu0 %v360
        %411 = vmatprep.subr.bf16.mxu0 %v357
        %412 = vmatpush1.bf16.msra.mxu0 %v356
        %413 = vmatprep.subr.bf16.mxu0 0
        %414 = vmatpush2.bf16.msra.mxu0 0
        %415 = vmatprep.subr.bf16.mxu0 0
        %416 = vmatpush2.bf16.msra.mxu0 0
        %417 = vmatprep.subr.bf16.mxu0 0
        %418 = vmatpush2.bf16.msra.mxu0 0
        %419 = vmatprep.subr.bf16.mxu0 0
        %420 = vmatpush2.bf16.msra.mxu0 0
        %421 = vmatprep.subr.bf16.mxu0 0
        %422 = vmatpush2.bf16.msra.mxu0 0
        %423 = vmatprep.subr.bf16.mxu0 0
        %424 = vmatpush2.bf16.msra.mxu0 0
        %425 = vmatprep.subr.bf16.mxu0 0
        %426 = vmatpush2.bf16.msra.mxu0 0
        %427 = vmatprep.subr.bf16.mxu0 0
        %428 = vmatpush2.bf16.msra.mxu0 0
        %429 = vmatprep.mubr.bf16.mxu0 0
        %430 = vmatmul.mubr.bf16.gmra.mxu0 %v374
        %v431 = vpop.f32.mrf.mxu0
        %v432 = vadd.f32 %v315, %v431
        %v433 = vpop.f32.mrf.mxu0
        %v434 = vadd.f32 %v319, %v433
        %v435 = vpop.f32.mrf.mxu0
        %v436 = vadd.f32 %v315, %v435
        %v437 = vpop.f32.mrf.mxu0
        %v438 = vadd.f32 %v319, %v437
        %439 = vmatprep.mubr.bf16.mxu0 0
        %440 = vmatmul.mubr.bf16.gmra.mxu0 %v377
        %v441 = vpop.f32.mrf.mxu0
        %v442 = vadd.f32 %v315, %v441
        %v443 = vpop.f32.mrf.mxu0
        %v444 = vadd.f32 %v319, %v443
        %v445 = vpop.f32.mrf.mxu0
        %v446 = vadd.f32 %v315, %v445
        %v447 = vpop.f32.mrf.mxu0
        %v448 = vadd.f32 %v319, %v447
        %449 = vmatprep.mubr.bf16.mxu0 0
        %450 = vmatmul.mubr.bf16.gmra.mxu0 %v380
        %v451 = vpop.f32.mrf.mxu0
        %v452 = vadd.f32 %v315, %v451
        %v453 = vpop.f32.mrf.mxu0
        %v454 = vadd.f32 %v319, %v453
        %v455 = vpop.f32.mrf.mxu0
        %v456 = vadd.f32 %v315, %v455
        %v457 = vpop.f32.mrf.mxu0
        %v458 = vadd.f32 %v319, %v457
        %459 = vmatprep.mubr.bf16.mxu0 0
        %460 = vmatmul.mubr.bf16.gmra.mxu0 %v383
        %v461 = vpop.f32.mrf.mxu0
        %v462 = vadd.f32 %v315, %v461
        %v463 = vpop.f32.mrf.mxu0
        %v464 = vadd.f32 %v319, %v463
        %v465 = vpop.f32.mrf.mxu0
        %v466 = vadd.f32 %v315, %v465
        %v467 = vpop.f32.mrf.mxu0
        %v468 = vadd.f32 %v319, %v467
        %469 = vmatprep.mubr.bf16.mxu0 0
        %470 = vmatmul.mubr.bf16.gmra.mxu0 %v386
        %v471 = vpop.f32.mrf.mxu0
        %v472 = vadd.f32 %v315, %v471
        %v473 = vpop.f32.mrf.mxu0
        %v474 = vadd.f32 %v319, %v473
        %v475 = vpop.f32.mrf.mxu0
        %v476 = vadd.f32 %v315, %v475
        %v477 = vpop.f32.mrf.mxu0
        %v478 = vadd.f32 %v319, %v477
        %479 = vmatprep.mubr.bf16.mxu0 0
        %480 = vmatmul.mubr.bf16.gmra.mxu0 %v389
        %v481 = vpop.f32.mrf.mxu0
        %v482 = vadd.f32 %v315, %v481
        %v483 = vpop.f32.mrf.mxu0
        %v484 = vadd.f32 %v319, %v483
        %v485 = vpop.f32.mrf.mxu0
        %v486 = vadd.f32 %v315, %v485
        %v487 = vpop.f32.mrf.mxu0
        %v488 = vadd.f32 %v319, %v487
        %489 = vmatprep.mubr.bf16.mxu0 0
        %490 = vmatmul.mubr.bf16.gmra.mxu0 %v392
        %v491 = vpop.f32.mrf.mxu0
        %v492 = vadd.f32 %v315, %v491
        %v493 = vpop.f32.mrf.mxu0
        %v494 = vadd.f32 %v319, %v493
        %v495 = vpop.f32.mrf.mxu0
        %v496 = vadd.f32 %v315, %v495
        %v497 = vpop.f32.mrf.mxu0
        %v498 = vadd.f32 %v319, %v497
        %499 = vmatprep.mubr.bf16.mxu0 0
        %500 = vmatmul.mubr.bf16.gmra.mxu0 %v395
        %v501 = vpop.f32.mrf.mxu0
        %v502 = vadd.f32 %v315, %v501
        %v503 = vpop.f32.mrf.mxu0
        %v504 = vadd.f32 %v319, %v503
        %v505 = vpop.f32.mrf.mxu0
        %v506 = vadd.f32 %v315, %v505
        %v507 = vpop.f32.mrf.mxu0
        %v508 = vadd.f32 %v319, %v507
        %509 = vdwg.mxu0
        %510 = vmatprep.subr.bf16.mxu0 0
        %511 = vmatpush1.bf16.msra.mxu0 0
        %512 = vmatprep.subr.bf16.mxu0 0
        %513 = vmatpush1.bf16.msra.mxu0 0
        %514 = vmatprep.subr.bf16.mxu0 0
        %515 = vmatpush1.bf16.msra.mxu0 0
        %516 = vmatprep.subr.bf16.mxu0 0
        %517 = vmatpush1.bf16.msra.mxu0 0
        %518 = vmatprep.subr.bf16.mxu0 0
        %519 = vmatpush1.bf16.msra.mxu0 0
        %520 = vmatprep.subr.bf16.mxu0 0
        %521 = vmatpush1.bf16.msra.mxu0 0
        %522 = vmatprep.subr.bf16.mxu0 %v363
        %523 = vmatpush1.bf16.msra.mxu0 %v362
        %524 = vmatprep.subr.bf16.mxu0 %v359
        %525 = vmatpush1.bf16.msra.mxu0 %v358
        %526 = vmatprep.subr.bf16.mxu0 0
        %527 = vmatpush2.bf16.msra.mxu0 0
        %528 = vmatprep.subr.bf16.mxu0 0
        %529 = vmatpush2.bf16.msra.mxu0 0
        %530 = vmatprep.subr.bf16.mxu0 0
        %531 = vmatpush2.bf16.msra.mxu0 0
        %532 = vmatprep.subr.bf16.mxu0 0
        %533 = vmatpush2.bf16.msra.mxu0 0
        %534 = vmatprep.subr.bf16.mxu0 0
        %535 = vmatpush2.bf16.msra.mxu0 0
        %536 = vmatprep.subr.bf16.mxu0 0
        %537 = vmatpush2.bf16.msra.mxu0 0
        %538 = vmatprep.subr.bf16.mxu0 0
        %539 = vmatpush2.bf16.msra.mxu0 0
        %540 = vmatprep.subr.bf16.mxu0 0
        %541 = vmatpush2.bf16.msra.mxu0 0
        %542 = vmatprep.mubr.bf16.mxu0 0
        %543 = vmatmul.mubr.bf16.gmra.mxu0 %v374
        %v544 = vpop.f32.mrf.mxu0
        %v545 = vadd.f32 %v323, %v544
        %v546 = vpop.f32.mrf.mxu0
        %v547 = vadd.f32 %v327, %v546
        %v548 = vpop.f32.mrf.mxu0
        %v549 = vadd.f32 %v323, %v548
        %v550 = vpop.f32.mrf.mxu0
        %v551 = vadd.f32 %v327, %v550
        %552 = vmatprep.mubr.bf16.mxu0 0
        %553 = vmatmul.mubr.bf16.gmra.mxu0 %v377
        %v554 = vpop.f32.mrf.mxu0
        %v555 = vadd.f32 %v323, %v554
        %v556 = vpop.f32.mrf.mxu0
        %v557 = vadd.f32 %v327, %v556
        %v558 = vpop.f32.mrf.mxu0
        %v559 = vadd.f32 %v323, %v558
        %v560 = vpop.f32.mrf.mxu0
        %v561 = vadd.f32 %v327, %v560
        %562 = vmatprep.mubr.bf16.mxu0 0
        %563 = vmatmul.mubr.bf16.gmra.mxu0 %v380
        %v564 = vpop.f32.mrf.mxu0
        %v565 = vadd.f32 %v323, %v564
        %v566 = vpop.f32.mrf.mxu0
        %v567 = vadd.f32 %v327, %v566
        %v568 = vpop.f32.mrf.mxu0
        %v569 = vadd.f32 %v323, %v568
        %v570 = vpop.f32.mrf.mxu0
        %v571 = vadd.f32 %v327, %v570
        %572 = vmatprep.mubr.bf16.mxu0 0
        %573 = vmatmul.mubr.bf16.gmra.mxu0 %v383
        %v574 = vpop.f32.mrf.mxu0
        %v575 = vadd.f32 %v323, %v574
        %v576 = vpop.f32.mrf.mxu0
        %v577 = vadd.f32 %v327, %v576
        %v578 = vpop.f32.mrf.mxu0
        %v579 = vadd.f32 %v323, %v578
        %v580 = vpop.f32.mrf.mxu0
        %v581 = vadd.f32 %v327, %v580
        %582 = vmatprep.mubr.bf16.mxu0 0
        %583 = vmatmul.mubr.bf16.gmra.mxu0 %v386
        %v584 = vpop.f32.mrf.mxu0
        %v585 = vadd.f32 %v323, %v584
        %v586 = vpop.f32.mrf.mxu0
        %v587 = vadd.f32 %v327, %v586
        %v588 = vpop.f32.mrf.mxu0
        %v589 = vadd.f32 %v323, %v588
        %v590 = vpop.f32.mrf.mxu0
        %v591 = vadd.f32 %v327, %v590
        %592 = vmatprep.mubr.bf16.mxu0 0
        %593 = vmatmul.mubr.bf16.gmra.mxu0 %v389
        %v594 = vpop.f32.mrf.mxu0
        %v595 = vadd.f32 %v323, %v594
        %v596 = vpop.f32.mrf.mxu0
        %v597 = vadd.f32 %v327, %v596
        %v598 = vpop.f32.mrf.mxu0
        %v599 = vadd.f32 %v323, %v598
        %v600 = vpop.f32.mrf.mxu0
        %v601 = vadd.f32 %v327, %v600
        %602 = vmatprep.mubr.bf16.mxu0 0
        %603 = vmatmul.mubr.bf16.gmra.mxu0 %v392
        %v604 = vpop.f32.mrf.mxu0
        %v605 = vadd.f32 %v323, %v604
        %v606 = vpop.f32.mrf.mxu0
        %v607 = vadd.f32 %v327, %v606
        %v608 = vpop.f32.mrf.mxu0
        %v609 = vadd.f32 %v323, %v608
        %v610 = vpop.f32.mrf.mxu0
        %v611 = vadd.f32 %v327, %v610
        %612 = vmatprep.mubr.bf16.mxu0 0
        %613 = vmatmul.mubr.bf16.gmra.mxu0 %v395
        %v614 = vpop.f32.mrf.mxu0
        %v615 = vadd.f32 %v323, %v614
        %v616 = vpop.f32.mrf.mxu0
        %v617 = vadd.f32 %v327, %v616
        %v618 = vpop.f32.mrf.mxu0
        %v619 = vadd.f32 %v323, %v618
        %v620 = vpop.f32.mrf.mxu0
        %v621 = vadd.f32 %v327, %v620
        %622 = vdwg.mxu0
        %vm623 = vcmp.gt.f32.partialorder %v432, 0.0
        %vm624 = vcmp.gt.f32.partialorder %v434, 0.0
        %vm625 = vcmp.gt.f32.partialorder %v545, 0.0
        %vm626 = vcmp.gt.f32.partialorder %v547, 0.0
        %vm627 = vcmp.gt.f32.partialorder %v436, 0.0
        %vm628 = vcmp.gt.f32.partialorder %v438, 0.0
        %vm629 = vcmp.gt.f32.partialorder %v549, 0.0
        %vm630 = vcmp.gt.f32.partialorder %v551, 0.0
        %vm631 = vcmp.gt.f32.partialorder %v442, 0.0
        %vm632 = vcmp.gt.f32.partialorder %v444, 0.0
        %vm633 = vcmp.gt.f32.partialorder %v555, 0.0
        %vm634 = vcmp.gt.f32.partialorder %v557, 0.0
        %vm635 = vcmp.gt.f32.partialorder %v446, 0.0
        %vm636 = vcmp.gt.f32.partialorder %v448, 0.0
        %vm637 = vcmp.gt.f32.partialorder %v559, 0.0
        %vm638 = vcmp.gt.f32.partialorder %v561, 0.0
        %vm639 = vcmp.gt.f32.partialorder %v452, 0.0
        %vm640 = vcmp.gt.f32.partialorder %v454, 0.0
        %vm641 = vcmp.gt.f32.partialorder %v565, 0.0
        %vm642 = vcmp.gt.f32.partialorder %v567, 0.0
        %vm643 = vcmp.gt.f32.partialorder %v456, 0.0
        %vm644 = vcmp.gt.f32.partialorder %v458, 0.0
        %vm645 = vcmp.gt.f32.partialorder %v569, 0.0
        %vm646 = vcmp.gt.f32.partialorder %v571, 0.0
        %vm647 = vcmp.gt.f32.partialorder %v462, 0.0
        %vm648 = vcmp.gt.f32.partialorder %v464, 0.0
        %vm649 = vcmp.gt.f32.partialorder %v575, 0.0
        %vm650 = vcmp.gt.f32.partialorder %v577, 0.0
        %vm651 = vcmp.gt.f32.partialorder %v466, 0.0
        %vm652 = vcmp.gt.f32.partialorder %v468, 0.0
        %vm653 = vcmp.gt.f32.partialorder %v579, 0.0
        %vm654 = vcmp.gt.f32.partialorder %v581, 0.0
        %vm655 = vcmp.gt.f32.partialorder %v472, 0.0
        %vm656 = vcmp.gt.f32.partialorder %v474, 0.0
        %vm657 = vcmp.gt.f32.partialorder %v585, 0.0
        %vm658 = vcmp.gt.f32.partialorder %v587, 0.0
        %vm659 = vcmp.gt.f32.partialorder %v476, 0.0
        %vm660 = vcmp.gt.f32.partialorder %v478, 0.0
        %vm661 = vcmp.gt.f32.partialorder %v589, 0.0
        %vm662 = vcmp.gt.f32.partialorder %v591, 0.0
        %vm663 = vcmp.gt.f32.partialorder %v482, 0.0
        %vm664 = vcmp.gt.f32.partialorder %v484, 0.0
        %vm665 = vcmp.gt.f32.partialorder %v595, 0.0
        %vm666 = vcmp.gt.f32.partialorder %v597, 0.0
        %vm667 = vcmp.gt.f32.partialorder %v486, 0.0
        %vm668 = vcmp.gt.f32.partialorder %v488, 0.0
        %vm669 = vcmp.gt.f32.partialorder %v599, 0.0
        %vm670 = vcmp.gt.f32.partialorder %v601, 0.0
        %vm671 = vcmp.gt.f32.partialorder %v492, 0.0
        %vm672 = vcmp.gt.f32.partialorder %v494, 0.0
        %vm673 = vcmp.gt.f32.partialorder %v605, 0.0
        %vm674 = vcmp.gt.f32.partialorder %v607, 0.0
        %vm675 = vcmp.gt.f32.partialorder %v496, 0.0
        %vm676 = vcmp.gt.f32.partialorder %v498, 0.0
        %vm677 = vcmp.gt.f32.partialorder %v609, 0.0
        %vm678 = vcmp.gt.f32.partialorder %v611, 0.0
        %vm679 = vcmp.gt.f32.partialorder %v502, 0.0
        %vm680 = vcmp.gt.f32.partialorder %v504, 0.0
        %vm681 = vcmp.gt.f32.partialorder %v615, 0.0
        %vm682 = vcmp.gt.f32.partialorder %v617, 0.0
        %vm683 = vcmp.gt.f32.partialorder %v506, 0.0
        %vm684 = vcmp.gt.f32.partialorder %v508, 0.0
        %vm685 = vcmp.gt.f32.partialorder %v619, 0.0
        %vm686 = vcmp.gt.f32.partialorder %v621, 0.0
        %v687 = vmul.f32 %v432, 0.2
        %v688 = vmul.f32 %v434, 0.2
        %v689 = vmul.f32 %v545, 0.2
        %v690 = vmul.f32 %v547, 0.2
        %v691 = vmul.f32 %v436, 0.2
        %v692 = vmul.f32 %v438, 0.2
        %v693 = vmul.f32 %v549, 0.2
        %v694 = vmul.f32 %v551, 0.2
        %v695 = vmul.f32 %v442, 0.2
        %v696 = vmul.f32 %v444, 0.2
        %v697 = vmul.f32 %v555, 0.2
        %v698 = vmul.f32 %v557, 0.2
        %v699 = vmul.f32 %v446, 0.2
        %v700 = vmul.f32 %v448, 0.2
        %v701 = vmul.f32 %v559, 0.2
        %v702 = vmul.f32 %v561, 0.2
        %v703 = vmul.f32 %v452, 0.2
        %v704 = vmul.f32 %v454, 0.2
        %v705 = vmul.f32 %v565, 0.2
        %v706 = vmul.f32 %v567, 0.2
        %v707 = vmul.f32 %v456, 0.2
        %v708 = vmul.f32 %v458, 0.2
        %v709 = vmul.f32 %v569, 0.2
        %v710 = vmul.f32 %v571, 0.2
        %v711 = vmul.f32 %v462, 0.2
        %v712 = vmul.f32 %v464, 0.2
        %v713 = vmul.f32 %v575, 0.2
        %v714 = vmul.f32 %v577, 0.2
        %v715 = vmul.f32 %v466, 0.2
        %v716 = vmul.f32 %v468, 0.2
        %v717 = vmul.f32 %v579, 0.2
        %v718 = vmul.f32 %v581, 0.2
        %v719 = vmul.f32 %v472, 0.2
        %v720 = vmul.f32 %v474, 0.2
        %v721 = vmul.f32 %v585, 0.2
        %v722 = vmul.f32 %v587, 0.2
        %v723 = vmul.f32 %v476, 0.2
        %v724 = vmul.f32 %v478, 0.2
        %v725 = vmul.f32 %v589, 0.2
        %v726 = vmul.f32 %v591, 0.2
        %v727 = vmul.f32 %v482, 0.2
        %v728 = vmul.f32 %v484, 0.2
        %v729 = vmul.f32 %v595, 0.2
        %v730 = vmul.f32 %v597, 0.2
        %v731 = vmul.f32 %v486, 0.2
        %v732 = vmul.f32 %v488, 0.2
        %v733 = vmul.f32 %v599, 0.2
        %v734 = vmul.f32 %v601, 0.2
        %v735 = vmul.f32 %v492, 0.2
        %v736 = vmul.f32 %v494, 0.2
        %v737 = vmul.f32 %v605, 0.2
        %v738 = vmul.f32 %v607, 0.2
        %v739 = vmul.f32 %v496, 0.2
        %v740 = vmul.f32 %v498, 0.2
        %v741 = vmul.f32 %v609, 0.2
        %v742 = vmul.f32 %v611, 0.2
        %v743 = vmul.f32 %v502, 0.2
        %v744 = vmul.f32 %v504, 0.2
        %v745 = vmul.f32 %v615, 0.2
        %v746 = vmul.f32 %v617, 0.2
        %v747 = vmul.f32 %v506, 0.2
        %v748 = vmul.f32 %v508, 0.2
        %v749 = vmul.f32 %v619, 0.2
        %v750 = vmul.f32 %v621, 0.2
        %v751 = vsel %vm623, %v432, %v687
        %v752 = vsel %vm624, %v434, %v688
        %v753 = vsel %vm625, %v545, %v689
        %v754 = vsel %vm626, %v547, %v690
        %v755 = vsel %vm627, %v436, %v691
        %v756 = vsel %vm628, %v438, %v692
        %v757 = vsel %vm629, %v549, %v693
        %v758 = vsel %vm630, %v551, %v694
        %v759 = vsel %vm631, %v442, %v695
        %v760 = vsel %vm632, %v444, %v696
        %v761 = vsel %vm633, %v555, %v697
        %v762 = vsel %vm634, %v557, %v698
        %v763 = vsel %vm635, %v446, %v699
        %v764 = vsel %vm636, %v448, %v700
        %v765 = vsel %vm637, %v559, %v701
        %v766 = vsel %vm638, %v561, %v702
        %v767 = vsel %vm639, %v452, %v703
        %v768 = vsel %vm640, %v454, %v704
        %v769 = vsel %vm641, %v565, %v705
        %v770 = vsel %vm642, %v567, %v706
        %v771 = vsel %vm643, %v456, %v707
        %v772 = vsel %vm644, %v458, %v708
        %v773 = vsel %vm645, %v569, %v709
        %v774 = vsel %vm646, %v571, %v710
        %v775 = vsel %vm647, %v462, %v711
        %v776 = vsel %vm648, %v464, %v712
        %v777 = vsel %vm649, %v575, %v713
        %v778 = vsel %vm650, %v577, %v714
        %v779 = vsel %vm651, %v466, %v715
        %v780 = vsel %vm652, %v468, %v716
        %v781 = vsel %vm653, %v579, %v717
        %v782 = vsel %vm654, %v581, %v718
        %v783 = vsel %vm655, %v472, %v719
        %v784 = vsel %vm656, %v474, %v720
        %v785 = vsel %vm657, %v585, %v721
        %v786 = vsel %vm658, %v587, %v722
        %v787 = vsel %vm659, %v476, %v723
        %v788 = vsel %vm660, %v478, %v724
        %v789 = vsel %vm661, %v589, %v725
        %v790 = vsel %vm662, %v591, %v726
        %v791 = vsel %vm663, %v482, %v727
        %v792 = vsel %vm664, %v484, %v728
        %v793 = vsel %vm665, %v595, %v729
        %v794 = vsel %vm666, %v597, %v730
        %v795 = vsel %vm667, %v486, %v731
        %v796 = vsel %vm668, %v488, %v732
        %v797 = vsel %vm669, %v599, %v733
        %v798 = vsel %vm670, %v601, %v734
        %v799 = vsel %vm671, %v492, %v735
        %v800 = vsel %vm672, %v494, %v736
        %v801 = vsel %vm673, %v605, %v737
        %v802 = vsel %vm674, %v607, %v738
        %v803 = vsel %vm675, %v496, %v739
        %v804 = vsel %vm676, %v498, %v740
        %v805 = vsel %vm677, %v609, %v741
        %v806 = vsel %vm678, %v611, %v742
        %v807 = vsel %vm679, %v502, %v743
        %v808 = vsel %vm680, %v504, %v744
        %v809 = vsel %vm681, %v615, %v745
        %v810 = vsel %vm682, %v617, %v746
        %v811 = vsel %vm683, %v506, %v747
        %v812 = vsel %vm684, %v508, %v748
        %v813 = vsel %vm685, %v619, %v749
        %v814 = vsel %vm686, %v621, %v750
        %v815 = vpack.c.bf16 %v755, %v751
        %v816 = vpack.c.bf16 %v756, %v752
        %v817 = vpack.c.bf16 %v757, %v753
        %v818 = vpack.c.bf16 %v758, %v754
        %v819 = vpack.c.bf16 %v763, %v759
        %v820 = vpack.c.bf16 %v764, %v760
        %v821 = vpack.c.bf16 %v765, %v761
        %v822 = vpack.c.bf16 %v766, %v762
        %v823 = vpack.c.bf16 %v771, %v767
        %v824 = vpack.c.bf16 %v772, %v768
        %v825 = vpack.c.bf16 %v773, %v769
        %v826 = vpack.c.bf16 %v774, %v770
        %v827 = vpack.c.bf16 %v779, %v775
        %v828 = vpack.c.bf16 %v780, %v776
        %v829 = vpack.c.bf16 %v781, %v777
        %v830 = vpack.c.bf16 %v782, %v778
        %v831 = vpack.c.bf16 %v787, %v783
        %v832 = vpack.c.bf16 %v788, %v784
        %v833 = vpack.c.bf16 %v789, %v785
        %v834 = vpack.c.bf16 %v790, %v786
        %v835 = vpack.c.bf16 %v795, %v791
        %v836 = vpack.c.bf16 %v796, %v792
        %v837 = vpack.c.bf16 %v797, %v793
        %v838 = vpack.c.bf16 %v798, %v794
        %v839 = vpack.c.bf16 %v803, %v799
        %v840 = vpack.c.bf16 %v804, %v800
        %v841 = vpack.c.bf16 %v805, %v801
        %v842 = vpack.c.bf16 %v806, %v802
        %v843 = vpack.c.bf16 %v811, %v807
        %v844 = vpack.c.bf16 %v812, %v808
        %v845 = vpack.c.bf16 %v813, %v809
        %v846 = vpack.c.bf16 %v814, %v810
        %v847 = vld [vmem:[#allocation2] sm:$0xff]
        %v848 = vld [vmem:[#allocation2 + $0x8] sm:$0xff]
        %v849 = vld [vmem:[#allocation2 + $0x10] sm:$0xff]
        %v850 = vld [vmem:[#allocation2 + $0x18] sm:$0xff]
        %v851 = vld [vmem:[#allocation2 + $0x20] sm:$0xff]
        %v852 = vld [vmem:[#allocation2 + $0x28] sm:$0xff]
        %v853 = vld [vmem:[#allocation2 + $0x30] sm:$0xff]
        %v854 = vld [vmem:[#allocation2 + $0x38] sm:$0xff]
        %v855 = vld [vmem:[#allocation2 + $0x40] sm:$0xff]
        %v856 = vld [vmem:[#allocation2 + $0x48] sm:$0xff]
        %v857 = vld [vmem:[#allocation2 + $0x50] sm:$0xff]
        %v858 = vld [vmem:[#allocation2 + $0x58] sm:$0xff]
        %v859 = vld [vmem:[#allocation2 + $0x60] sm:$0xff]
        %v860 = vld [vmem:[#allocation2 + $0x68] sm:$0xff]
        %v861 = vld [vmem:[#allocation2 + $0x70] sm:$0xff]
        %v862 = vld [vmem:[#allocation2 + $0x78] sm:$0xff]
        %v863 = vld [vmem:[#allocation2 + $0x80] sm:$0xff]
        %v864 = vld [vmem:[#allocation2 + $0x88] sm:$0xff]
        %v865 = vld [vmem:[#allocation2 + $0x90] sm:$0xff]
        %v866 = vld [vmem:[#allocation2 + $0x98] sm:$0xff]
        %v867 = vld [vmem:[#allocation2 + $0xa0] sm:$0xff]
        %v868 = vld [vmem:[#allocation2 + $0xa8] sm:$0xff]
        %v869 = vld [vmem:[#allocation2 + $0xb0] sm:$0xff]
        %v870 = vld [vmem:[#allocation2 + $0xb8] sm:$0xff]
        %v871 = vld [vmem:[#allocation2 + $0xc0] sm:$0xff]
        %v872 = vld [vmem:[#allocation2 + $0xc8] sm:$0xff]
        %v873 = vld [vmem:[#allocation2 + $0xd0] sm:$0xff]
        %v874 = vld [vmem:[#allocation2 + $0xd8] sm:$0xff]
        %v875 = vld [vmem:[#allocation2 + $0xe0] sm:$0xff]
        %v876 = vld [vmem:[#allocation2 + $0xe8] sm:$0xff]
        %v877 = vld [vmem:[#allocation2 + $0xf0] sm:$0xff]
        %v878 = vld [vmem:[#allocation2 + $0xf8] sm:$0xff]
        %v879 = vld [vmem:[#allocation2 + $0x100] sm:$0xff]
        %v880 = vld [vmem:[#allocation2 + $0x108] sm:$0xff]
        %v881 = vld [vmem:[#allocation2 + $0x110] sm:$0xff]
        %v882 = vld [vmem:[#allocation2 + $0x118] sm:$0xff]
        %v883 = vld [vmem:[#allocation2 + $0x120] sm:$0xff]
        %v884 = vld [vmem:[#allocation2 + $0x128] sm:$0xff]
        %v885 = vld [vmem:[#allocation2 + $0x130] sm:$0xff]
        %v886 = vld [vmem:[#allocation2 + $0x138] sm:$0xff]
        %v887 = vld [vmem:[#allocation2 + $0x140] sm:$0xff]
        %v888 = vld [vmem:[#allocation2 + $0x148] sm:$0xff]
        %v889 = vld [vmem:[#allocation2 + $0x150] sm:$0xff]
        %v890 = vld [vmem:[#allocation2 + $0x158] sm:$0xff]
        %v891 = vld [vmem:[#allocation2 + $0x160] sm:$0xff]
        %v892 = vld [vmem:[#allocation2 + $0x168] sm:$0xff]
        %v893 = vld [vmem:[#allocation2 + $0x170] sm:$0xff]
        %v894 = vld [vmem:[#allocation2 + $0x178] sm:$0xff]
        %v895 = vld [vmem:[#allocation2 + $0x180] sm:$0xff]
        %v896 = vld [vmem:[#allocation2 + $0x188] sm:$0xff]
        %v897 = vld [vmem:[#allocation2 + $0x190] sm:$0xff]
        %v898 = vld [vmem:[#allocation2 + $0x198] sm:$0xff]
        %v899 = vld [vmem:[#allocation2 + $0x1a0] sm:$0xff]
        %v900 = vld [vmem:[#allocation2 + $0x1a8] sm:$0xff]
        %v901 = vld [vmem:[#allocation2 + $0x1b0] sm:$0xff]
        %v902 = vld [vmem:[#allocation2 + $0x1b8] sm:$0xff]
        %v903 = vld [vmem:[#allocation2 + $0x1c0] sm:$0xff]
        %v904 = vld [vmem:[#allocation2 + $0x1c8] sm:$0xff]
        %v905 = vld [vmem:[#allocation2 + $0x1d0] sm:$0xff]
        %v906 = vld [vmem:[#allocation2 + $0x1d8] sm:$0xff]
        %v907 = vld [vmem:[#allocation2 + $0x1e0] sm:$0xff]
        %v908 = vld [vmem:[#allocation2 + $0x1e8] sm:$0xff]
        %v909 = vld [vmem:[#allocation2 + $0x1f0] sm:$0xff]
        %v910 = vld [vmem:[#allocation2 + $0x1f8] sm:$0xff]
        %v911 = vld [vmem:[#allocation2 + $0x200] sm:$0xff]
        %v912 = vld [vmem:[#allocation2 + $0x208] sm:$0xff]
        %v913 = vld [vmem:[#allocation2 + $0x210] sm:$0xff]
        %v914 = vld [vmem:[#allocation2 + $0x218] sm:$0xff]
        %v915 = vld [vmem:[#allocation2 + $0x220] sm:$0xff]
        %v916 = vld [vmem:[#allocation2 + $0x228] sm:$0xff]
        %v917 = vld [vmem:[#allocation2 + $0x230] sm:$0xff]
        %v918 = vld [vmem:[#allocation2 + $0x238] sm:$0xff]
        %v919 = vld [vmem:[#allocation2 + $0x240] sm:$0xff]
        %v920 = vld [vmem:[#allocation2 + $0x248] sm:$0xff]
        %v921 = vld [vmem:[#allocation2 + $0x250] sm:$0xff]
        %v922 = vld [vmem:[#allocation2 + $0x258] sm:$0xff]
        %v923 = vld [vmem:[#allocation2 + $0x260] sm:$0xff]
        %v924 = vld [vmem:[#allocation2 + $0x268] sm:$0xff]
        %v925 = vld [vmem:[#allocation2 + $0x270] sm:$0xff]
        %v926 = vld [vmem:[#allocation2 + $0x278] sm:$0xff]
        %v927 = vld [vmem:[#allocation2 + $0x280] sm:$0xff]
        %v928 = vld [vmem:[#allocation2 + $0x288] sm:$0xff]
        %v929 = vld [vmem:[#allocation2 + $0x290] sm:$0xff]
        %v930 = vld [vmem:[#allocation2 + $0x298] sm:$0xff]
        %v931 = vld [vmem:[#allocation2 + $0x2a0] sm:$0xff]
        %v932 = vld [vmem:[#allocation2 + $0x2a8] sm:$0xff]
        %v933 = vld [vmem:[#allocation2 + $0x2b0] sm:$0xff]
        %v934 = vld [vmem:[#allocation2 + $0x2b8] sm:$0xff]
        %v935 = vld [vmem:[#allocation2 + $0x2c0] sm:$0xff]
        %v936 = vld [vmem:[#allocation2 + $0x2c8] sm:$0xff]
        %v937 = vld [vmem:[#allocation2 + $0x2d0] sm:$0xff]
        %v938 = vld [vmem:[#allocation2 + $0x2d8] sm:$0xff]
        %v939 = vld [vmem:[#allocation2 + $0x2e0] sm:$0xff]
        %v940 = vld [vmem:[#allocation2 + $0x2e8] sm:$0xff]
        %v941 = vld [vmem:[#allocation2 + $0x2f0] sm:$0xff]
        %v942 = vld [vmem:[#allocation2 + $0x2f8] sm:$0xff]
        %v943 = vld [vmem:[#allocation2 + $0x300] sm:$0xff]
        %v944 = vld [vmem:[#allocation2 + $0x308] sm:$0xff]
        %v945 = vld [vmem:[#allocation2 + $0x310] sm:$0xff]
        %v946 = vld [vmem:[#allocation2 + $0x318] sm:$0xff]
        %v947 = vld [vmem:[#allocation2 + $0x320] sm:$0xff]
        %v948 = vld [vmem:[#allocation2 + $0x328] sm:$0xff]
        %v949 = vld [vmem:[#allocation2 + $0x330] sm:$0xff]
        %v950 = vld [vmem:[#allocation2 + $0x338] sm:$0xff]
        %v951 = vld [vmem:[#allocation2 + $0x340] sm:$0xff]
        %v952 = vld [vmem:[#allocation2 + $0x348] sm:$0xff]
        %v953 = vld [vmem:[#allocation2 + $0x350] sm:$0xff]
        %v954 = vld [vmem:[#allocation2 + $0x358] sm:$0xff]
        %v955 = vld [vmem:[#allocation2 + $0x360] sm:$0xff]
        %v956 = vld [vmem:[#allocation2 + $0x368] sm:$0xff]
        %v957 = vld [vmem:[#allocation2 + $0x370] sm:$0xff]
        %v958 = vld [vmem:[#allocation2 + $0x378] sm:$0xff]
        %v959 = vld [vmem:[#allocation2 + $0x380] sm:$0xff]
        %v960 = vld [vmem:[#allocation2 + $0x388] sm:$0xff]
        %v961 = vld [vmem:[#allocation2 + $0x390] sm:$0xff]
        %v962 = vld [vmem:[#allocation2 + $0x398] sm:$0xff]
        %v963 = vld [vmem:[#allocation2 + $0x3a0] sm:$0xff]
        %v964 = vld [vmem:[#allocation2 + $0x3a8] sm:$0xff]
        %v965 = vld [vmem:[#allocation2 + $0x3b0] sm:$0xff]
        %v966 = vld [vmem:[#allocation2 + $0x3b8] sm:$0xff]
        %v967 = vld [vmem:[#allocation2 + $0x3c0] sm:$0xff]
        %v968 = vld [vmem:[#allocation2 + $0x3c8] sm:$0xff]
        %v969 = vld [vmem:[#allocation2 + $0x3d0] sm:$0xff]
        %v970 = vld [vmem:[#allocation2 + $0x3d8] sm:$0xff]
        %v971 = vld [vmem:[#allocation2 + $0x3e0] sm:$0xff]
        %v972 = vld [vmem:[#allocation2 + $0x3e8] sm:$0xff]
        %v973 = vld [vmem:[#allocation2 + $0x3f0] sm:$0xff]
        %v974 = vld [vmem:[#allocation2 + $0x3f8] sm:$0xff]
        %v1103 = vunpack.c.l.b16 %v847
        %v1104 = vunpack.c.h.b16 %v847
        %v1105 = vunpack.c.l.b16 %v848
        %v1106 = vunpack.c.h.b16 %v848
        %v1107 = vunpack.c.l.b16 %v849
        %v1108 = vunpack.c.h.b16 %v849
        %v1109 = vunpack.c.l.b16 %v850
        %v1110 = vunpack.c.h.b16 %v850
        %v1111 = vunpack.c.l.b16 %v851
        %v1112 = vunpack.c.h.b16 %v851
        %v1113 = vunpack.c.l.b16 %v852
        %v1114 = vunpack.c.h.b16 %v852
        %v1115 = vunpack.c.l.b16 %v853
        %v1116 = vunpack.c.h.b16 %v853
        %v1117 = vunpack.c.l.b16 %v854
        %v1118 = vunpack.c.h.b16 %v854
        %v1119 = vunpack.c.l.b16 %v855
        %v1120 = vunpack.c.h.b16 %v855
        %v1121 = vunpack.c.l.b16 %v856
        %v1122 = vunpack.c.h.b16 %v856
        %v1123 = vunpack.c.l.b16 %v857
        %v1124 = vunpack.c.h.b16 %v857
        %v1125 = vunpack.c.l.b16 %v858
        %v1126 = vunpack.c.h.b16 %v858
        %v1127 = vunpack.c.l.b16 %v859
        %v1128 = vunpack.c.h.b16 %v859
        %v1129 = vunpack.c.l.b16 %v860
        %v1130 = vunpack.c.h.b16 %v860
        %v1131 = vunpack.c.l.b16 %v861
        %v1132 = vunpack.c.h.b16 %v861
        %v1133 = vunpack.c.l.b16 %v862
        %v1134 = vunpack.c.h.b16 %v862
        %v1135 = vunpack.c.l.b16 %v863
        %v1136 = vunpack.c.h.b16 %v863
        %v1137 = vunpack.c.l.b16 %v864
        %v1138 = vunpack.c.h.b16 %v864
        %v1139 = vunpack.c.l.b16 %v865
        %v1140 = vunpack.c.h.b16 %v865
        %v1141 = vunpack.c.l.b16 %v866
        %v1142 = vunpack.c.h.b16 %v866
        %v1143 = vunpack.c.l.b16 %v867
        %v1144 = vunpack.c.h.b16 %v867
        %v1145 = vunpack.c.l.b16 %v868
        %v1146 = vunpack.c.h.b16 %v868
        %v1147 = vunpack.c.l.b16 %v869
        %v1148 = vunpack.c.h.b16 %v869
        %v1149 = vunpack.c.l.b16 %v870
        %v1150 = vunpack.c.h.b16 %v870
        %v1151 = vunpack.c.l.b16 %v871
        %v1152 = vunpack.c.h.b16 %v871
        %v1153 = vunpack.c.l.b16 %v872
        %v1154 = vunpack.c.h.b16 %v872
        %v1155 = vunpack.c.l.b16 %v873
        %v1156 = vunpack.c.h.b16 %v873
        %v1157 = vunpack.c.l.b16 %v874
        %v1158 = vunpack.c.h.b16 %v874
        %v1159 = vunpack.c.l.b16 %v875
        %v1160 = vunpack.c.h.b16 %v875
        %v1161 = vunpack.c.l.b16 %v876
        %v1162 = vunpack.c.h.b16 %v876
        %v1163 = vunpack.c.l.b16 %v877
        %v1164 = vunpack.c.h.b16 %v877
        %v1165 = vunpack.c.l.b16 %v878
        %v1166 = vunpack.c.h.b16 %v878
        %v1167 = vunpack.c.l.b16 %v879
        %v1168 = vunpack.c.h.b16 %v879
        %v1169 = vunpack.c.l.b16 %v880
        %v1170 = vunpack.c.h.b16 %v880
        %v1171 = vunpack.c.l.b16 %v881
        %v1172 = vunpack.c.h.b16 %v881
        %v1173 = vunpack.c.l.b16 %v882
        %v1174 = vunpack.c.h.b16 %v882
        %v1175 = vunpack.c.l.b16 %v883
        %v1176 = vunpack.c.h.b16 %v883
        %v1177 = vunpack.c.l.b16 %v884
        %v1178 = vunpack.c.h.b16 %v884
        %v1179 = vunpack.c.l.b16 %v885
        %v1180 = vunpack.c.h.b16 %v885
        %v1181 = vunpack.c.l.b16 %v886
        %v1182 = vunpack.c.h.b16 %v886
        %v1183 = vunpack.c.l.b16 %v887
        %v1184 = vunpack.c.h.b16 %v887
        %v1185 = vunpack.c.l.b16 %v888
        %v1186 = vunpack.c.h.b16 %v888
        %v1187 = vunpack.c.l.b16 %v889
        %v1188 = vunpack.c.h.b16 %v889
        %v1189 = vunpack.c.l.b16 %v890
        %v1190 = vunpack.c.h.b16 %v890
        %v1191 = vunpack.c.l.b16 %v891
        %v1192 = vunpack.c.h.b16 %v891
        %v1193 = vunpack.c.l.b16 %v892
        %v1194 = vunpack.c.h.b16 %v892
        %v1195 = vunpack.c.l.b16 %v893
        %v1196 = vunpack.c.h.b16 %v893
        %v1197 = vunpack.c.l.b16 %v894
        %v1198 = vunpack.c.h.b16 %v894
        %v1199 = vunpack.c.l.b16 %v895
        %v1200 = vunpack.c.h.b16 %v895
        %v1201 = vunpack.c.l.b16 %v896
        %v1202 = vunpack.c.h.b16 %v896
        %v1203 = vunpack.c.l.b16 %v897
        %v1204 = vunpack.c.h.b16 %v897
        %v1205 = vunpack.c.l.b16 %v898
        %v1206 = vunpack.c.h.b16 %v898
        %v1207 = vunpack.c.l.b16 %v899
        %v1208 = vunpack.c.h.b16 %v899
        %v1209 = vunpack.c.l.b16 %v900
        %v1210 = vunpack.c.h.b16 %v900
        %v1211 = vunpack.c.l.b16 %v901
        %v1212 = vunpack.c.h.b16 %v901
        %v1213 = vunpack.c.l.b16 %v902
        %v1214 = vunpack.c.h.b16 %v902
        %v1215 = vunpack.c.l.b16 %v903
        %v1216 = vunpack.c.h.b16 %v903
        %v1217 = vunpack.c.l.b16 %v904
        %v1218 = vunpack.c.h.b16 %v904
        %v1219 = vunpack.c.l.b16 %v905
        %v1220 = vunpack.c.h.b16 %v905
        %v1221 = vunpack.c.l.b16 %v906
        %v1222 = vunpack.c.h.b16 %v906
        %v1223 = vunpack.c.l.b16 %v907
        %v1224 = vunpack.c.h.b16 %v907
        %v1225 = vunpack.c.l.b16 %v908
        %v1226 = vunpack.c.h.b16 %v908
        %v1227 = vunpack.c.l.b16 %v909
        %v1228 = vunpack.c.h.b16 %v909
        %v1229 = vunpack.c.l.b16 %v910
        %v1230 = vunpack.c.h.b16 %v910
        %v1231 = vunpack.c.l.b16 %v911
        %v1232 = vunpack.c.h.b16 %v911
        %v1233 = vunpack.c.l.b16 %v912
        %v1234 = vunpack.c.h.b16 %v912
        %v1235 = vunpack.c.l.b16 %v913
        %v1236 = vunpack.c.h.b16 %v913
        %v1237 = vunpack.c.l.b16 %v914
        %v1238 = vunpack.c.h.b16 %v914
        %v1239 = vunpack.c.l.b16 %v915
        %v1240 = vunpack.c.h.b16 %v915
        %v1241 = vunpack.c.l.b16 %v916
        %v1242 = vunpack.c.h.b16 %v916
        %v1243 = vunpack.c.l.b16 %v917
        %v1244 = vunpack.c.h.b16 %v917
        %v1245 = vunpack.c.l.b16 %v918
        %v1246 = vunpack.c.h.b16 %v918
        %v1247 = vunpack.c.l.b16 %v919
        %v1248 = vunpack.c.h.b16 %v919
        %v1249 = vunpack.c.l.b16 %v920
        %v1250 = vunpack.c.h.b16 %v920
        %v1251 = vunpack.c.l.b16 %v921
        %v1252 = vunpack.c.h.b16 %v921
        %v1253 = vunpack.c.l.b16 %v922
        %v1254 = vunpack.c.h.b16 %v922
        %v1255 = vunpack.c.l.b16 %v923
        %v1256 = vunpack.c.h.b16 %v923
        %v1257 = vunpack.c.l.b16 %v924
        %v1258 = vunpack.c.h.b16 %v924
        %v1259 = vunpack.c.l.b16 %v925
        %v1260 = vunpack.c.h.b16 %v925
        %v1261 = vunpack.c.l.b16 %v926
        %v1262 = vunpack.c.h.b16 %v926
        %v1263 = vunpack.c.l.b16 %v927
        %v1264 = vunpack.c.h.b16 %v927
        %v1265 = vunpack.c.l.b16 %v928
        %v1266 = vunpack.c.h.b16 %v928
        %v1267 = vunpack.c.l.b16 %v929
        %v1268 = vunpack.c.h.b16 %v929
        %v1269 = vunpack.c.l.b16 %v930
        %v1270 = vunpack.c.h.b16 %v930
        %v1271 = vunpack.c.l.b16 %v931
        %v1272 = vunpack.c.h.b16 %v931
        %v1273 = vunpack.c.l.b16 %v932
        %v1274 = vunpack.c.h.b16 %v932
        %v1275 = vunpack.c.l.b16 %v933
        %v1276 = vunpack.c.h.b16 %v933
        %v1277 = vunpack.c.l.b16 %v934
        %v1278 = vunpack.c.h.b16 %v934
        %v1279 = vunpack.c.l.b16 %v935
        %v1280 = vunpack.c.h.b16 %v935
        %v1281 = vunpack.c.l.b16 %v936
        %v1282 = vunpack.c.h.b16 %v936
        %v1283 = vunpack.c.l.b16 %v937
        %v1284 = vunpack.c.h.b16 %v937
        %v1285 = vunpack.c.l.b16 %v938
        %v1286 = vunpack.c.h.b16 %v938
        %v1287 = vunpack.c.l.b16 %v939
        %v1288 = vunpack.c.h.b16 %v939
        %v1289 = vunpack.c.l.b16 %v940
        %v1290 = vunpack.c.h.b16 %v940
        %v1291 = vunpack.c.l.b16 %v941
        %v1292 = vunpack.c.h.b16 %v941
        %v1293 = vunpack.c.l.b16 %v942
        %v1294 = vunpack.c.h.b16 %v942
        %v1295 = vunpack.c.l.b16 %v943
        %v1296 = vunpack.c.h.b16 %v943
        %v1297 = vunpack.c.l.b16 %v944
        %v1298 = vunpack.c.h.b16 %v944
        %v1299 = vunpack.c.l.b16 %v945
        %v1300 = vunpack.c.h.b16 %v945
        %v1301 = vunpack.c.l.b16 %v946
        %v1302 = vunpack.c.h.b16 %v946
        %v1303 = vunpack.c.l.b16 %v947
        %v1304 = vunpack.c.h.b16 %v947
        %v1305 = vunpack.c.l.b16 %v948
        %v1306 = vunpack.c.h.b16 %v948
        %v1307 = vunpack.c.l.b16 %v949
        %v1308 = vunpack.c.h.b16 %v949
        %v1309 = vunpack.c.l.b16 %v950
        %v1310 = vunpack.c.h.b16 %v950
        %v1311 = vunpack.c.l.b16 %v951
        %v1312 = vunpack.c.h.b16 %v951
        %v1313 = vunpack.c.l.b16 %v952
        %v1314 = vunpack.c.h.b16 %v952
        %v1315 = vunpack.c.l.b16 %v953
        %v1316 = vunpack.c.h.b16 %v953
        %v1317 = vunpack.c.l.b16 %v954
        %v1318 = vunpack.c.h.b16 %v954
        %v1319 = vunpack.c.l.b16 %v955
        %v1320 = vunpack.c.h.b16 %v955
        %v1321 = vunpack.c.l.b16 %v956
        %v1322 = vunpack.c.h.b16 %v956
        %v1323 = vunpack.c.l.b16 %v957
        %v1324 = vunpack.c.h.b16 %v957
        %v1325 = vunpack.c.l.b16 %v958
        %v1326 = vunpack.c.h.b16 %v958
        %v1327 = vunpack.c.l.b16 %v959
        %v1328 = vunpack.c.h.b16 %v959
        %v1329 = vunpack.c.l.b16 %v960
        %v1330 = vunpack.c.h.b16 %v960
        %v1331 = vunpack.c.l.b16 %v961
        %v1332 = vunpack.c.h.b16 %v961
        %v1333 = vunpack.c.l.b16 %v962
        %v1334 = vunpack.c.h.b16 %v962
        %v1335 = vunpack.c.l.b16 %v963
        %v1336 = vunpack.c.h.b16 %v963
        %v1337 = vunpack.c.l.b16 %v964
        %v1338 = vunpack.c.h.b16 %v964
        %v1339 = vunpack.c.l.b16 %v965
        %v1340 = vunpack.c.h.b16 %v965
        %v1341 = vunpack.c.l.b16 %v966
        %v1342 = vunpack.c.h.b16 %v966
        %v1343 = vunpack.c.l.b16 %v967
        %v1344 = vunpack.c.h.b16 %v967
        %v1345 = vunpack.c.l.b16 %v968
        %v1346 = vunpack.c.h.b16 %v968
        %v1347 = vunpack.c.l.b16 %v969
        %v1348 = vunpack.c.h.b16 %v969
        %v1349 = vunpack.c.l.b16 %v970
        %v1350 = vunpack.c.h.b16 %v970
        %v1351 = vunpack.c.l.b16 %v971
        %v1352 = vunpack.c.h.b16 %v971
        %v1353 = vunpack.c.l.b16 %v972
        %v1354 = vunpack.c.h.b16 %v972
        %v1355 = vunpack.c.l.b16 %v973
        %v1356 = vunpack.c.h.b16 %v973
        %v1357 = vunpack.c.l.b16 %v974
        %v1358 = vunpack.c.h.b16 %v974
        %v1359 = vpack.c.b16 %v1107, %v1103
        %v1360 = vpack.c.b16 %v1108, %v1104
        %v1361 = vpack.c.b16 %v1109, %v1105
        %v1362 = vpack.c.b16 %v1110, %v1106
        %v1363 = vpack.c.b16 %v1115, %v1111
        %v1364 = vpack.c.b16 %v1116, %v1112
        %v1365 = vpack.c.b16 %v1117, %v1113
        %v1366 = vpack.c.b16 %v1118, %v1114
        %v1367 = vpack.c.b16 %v1123, %v1119
        %v1368 = vpack.c.b16 %v1124, %v1120
        %v1369 = vpack.c.b16 %v1125, %v1121
        %v1370 = vpack.c.b16 %v1126, %v1122
        %v1371 = vpack.c.b16 %v1131, %v1127
        %v1372 = vpack.c.b16 %v1132, %v1128
        %v1373 = vpack.c.b16 %v1133, %v1129
        %v1374 = vpack.c.b16 %v1134, %v1130
        %v1375 = vpack.c.b16 %v1139, %v1135
        %v1376 = vpack.c.b16 %v1140, %v1136
        %v1377 = vpack.c.b16 %v1141, %v1137
        %v1378 = vpack.c.b16 %v1142, %v1138
        %v1379 = vpack.c.b16 %v1147, %v1143
        %v1380 = vpack.c.b16 %v1148, %v1144
        %v1381 = vpack.c.b16 %v1149, %v1145
        %v1382 = vpack.c.b16 %v1150, %v1146
        %v1383 = vpack.c.b16 %v1155, %v1151
        %v1384 = vpack.c.b16 %v1156, %v1152
        %v1385 = vpack.c.b16 %v1157, %v1153
        %v1386 = vpack.c.b16 %v1158, %v1154
        %v1387 = vpack.c.b16 %v1163, %v1159
        %v1388 = vpack.c.b16 %v1164, %v1160
        %v1389 = vpack.c.b16 %v1165, %v1161
        %v1390 = vpack.c.b16 %v1166, %v1162
        %v1391 = vpack.c.b16 %v1171, %v1167
        %v1392 = vpack.c.b16 %v1172, %v1168
        %v1393 = vpack.c.b16 %v1173, %v1169
        %v1394 = vpack.c.b16 %v1174, %v1170
        %v1395 = vpack.c.b16 %v1179, %v1175
        %v1396 = vpack.c.b16 %v1180, %v1176
        %v1397 = vpack.c.b16 %v1181, %v1177
        %v1398 = vpack.c.b16 %v1182, %v1178
        %v1399 = vpack.c.b16 %v1187, %v1183
        %v1400 = vpack.c.b16 %v1188, %v1184
        %v1401 = vpack.c.b16 %v1189, %v1185
        %v1402 = vpack.c.b16 %v1190, %v1186
        %v1403 = vpack.c.b16 %v1195, %v1191
        %v1404 = vpack.c.b16 %v1196, %v1192
        %v1405 = vpack.c.b16 %v1197, %v1193
        %v1406 = vpack.c.b16 %v1198, %v1194
        %v1407 = vpack.c.b16 %v1203, %v1199
        %v1408 = vpack.c.b16 %v1204, %v1200
        %v1409 = vpack.c.b16 %v1205, %v1201
        %v1410 = vpack.c.b16 %v1206, %v1202
        %v1411 = vpack.c.b16 %v1211, %v1207
        %v1412 = vpack.c.b16 %v1212, %v1208
        %v1413 = vpack.c.b16 %v1213, %v1209
        %v1414 = vpack.c.b16 %v1214, %v1210
        %v1415 = vpack.c.b16 %v1219, %v1215
        %v1416 = vpack.c.b16 %v1220, %v1216
        %v1417 = vpack.c.b16 %v1221, %v1217
        %v1418 = vpack.c.b16 %v1222, %v1218
        %v1419 = vpack.c.b16 %v1227, %v1223
        %v1420 = vpack.c.b16 %v1228, %v1224
        %v1421 = vpack.c.b16 %v1229, %v1225
        %v1422 = vpack.c.b16 %v1230, %v1226
        %v1423 = vpack.c.b16 %v1235, %v1231
        %v1424 = vpack.c.b16 %v1236, %v1232
        %v1425 = vpack.c.b16 %v1237, %v1233
        %v1426 = vpack.c.b16 %v1238, %v1234
        %v1427 = vpack.c.b16 %v1243, %v1239
        %v1428 = vpack.c.b16 %v1244, %v1240
        %v1429 = vpack.c.b16 %v1245, %v1241
        %v1430 = vpack.c.b16 %v1246, %v1242
        %v1431 = vpack.c.b16 %v1251, %v1247
        %v1432 = vpack.c.b16 %v1252, %v1248
        %v1433 = vpack.c.b16 %v1253, %v1249
        %v1434 = vpack.c.b16 %v1254, %v1250
        %v1435 = vpack.c.b16 %v1259, %v1255
        %v1436 = vpack.c.b16 %v1260, %v1256
        %v1437 = vpack.c.b16 %v1261, %v1257
        %v1438 = vpack.c.b16 %v1262, %v1258
        %v1439 = vpack.c.b16 %v1267, %v1263
        %v1440 = vpack.c.b16 %v1268, %v1264
        %v1441 = vpack.c.b16 %v1269, %v1265
        %v1442 = vpack.c.b16 %v1270, %v1266
        %v1443 = vpack.c.b16 %v1275, %v1271
        %v1444 = vpack.c.b16 %v1276, %v1272
        %v1445 = vpack.c.b16 %v1277, %v1273
        %v1446 = vpack.c.b16 %v1278, %v1274
        %v1447 = vpack.c.b16 %v1283, %v1279
        %v1448 = vpack.c.b16 %v1284, %v1280
        %v1449 = vpack.c.b16 %v1285, %v1281
        %v1450 = vpack.c.b16 %v1286, %v1282
        %v1451 = vpack.c.b16 %v1291, %v1287
        %v1452 = vpack.c.b16 %v1292, %v1288
        %v1453 = vpack.c.b16 %v1293, %v1289
        %v1454 = vpack.c.b16 %v1294, %v1290
        %v1455 = vpack.c.b16 %v1299, %v1295
        %v1456 = vpack.c.b16 %v1300, %v1296
        %v1457 = vpack.c.b16 %v1301, %v1297
        %v1458 = vpack.c.b16 %v1302, %v1298
        %v1459 = vpack.c.b16 %v1307, %v1303
        %v1460 = vpack.c.b16 %v1308, %v1304
        %v1461 = vpack.c.b16 %v1309, %v1305
        %v1462 = vpack.c.b16 %v1310, %v1306
        %v1463 = vpack.c.b16 %v1315, %v1311
        %v1464 = vpack.c.b16 %v1316, %v1312
        %v1465 = vpack.c.b16 %v1317, %v1313
        %v1466 = vpack.c.b16 %v1318, %v1314
        %v1467 = vpack.c.b16 %v1323, %v1319
        %v1468 = vpack.c.b16 %v1324, %v1320
        %v1469 = vpack.c.b16 %v1325, %v1321
        %v1470 = vpack.c.b16 %v1326, %v1322
        %v1471 = vpack.c.b16 %v1331, %v1327
        %v1472 = vpack.c.b16 %v1332, %v1328
        %v1473 = vpack.c.b16 %v1333, %v1329
        %v1474 = vpack.c.b16 %v1334, %v1330
        %v1475 = vpack.c.b16 %v1339, %v1335
        %v1476 = vpack.c.b16 %v1340, %v1336
        %v1477 = vpack.c.b16 %v1341, %v1337
        %v1478 = vpack.c.b16 %v1342, %v1338
        %v1479 = vpack.c.b16 %v1347, %v1343
        %v1480 = vpack.c.b16 %v1348, %v1344
        %v1481 = vpack.c.b16 %v1349, %v1345
        %v1482 = vpack.c.b16 %v1350, %v1346
        %v1483 = vpack.c.b16 %v1355, %v1351
        %v1484 = vpack.c.b16 %v1356, %v1352
        %v1485 = vpack.c.b16 %v1357, %v1353
        %v1486 = vpack.c.b16 %v1358, %v1354
        %1615 = vmatprep.subr.bf16.mxu0 %v1388
        %1616 = vmatpush1.bf16.msra.mxu0 %v1387
        %1617 = vmatprep.subr.bf16.mxu0 %v1384
        %1618 = vmatpush1.bf16.msra.mxu0 %v1383
        %1619 = vmatprep.subr.bf16.mxu0 %v1380
        %1620 = vmatpush1.bf16.msra.mxu0 %v1379
        %1621 = vmatprep.subr.bf16.mxu0 %v1376
        %1622 = vmatpush1.bf16.msra.mxu0 %v1375
        %1623 = vmatprep.subr.bf16.mxu0 %v1372
        %1624 = vmatpush1.bf16.msra.mxu0 %v1371
        %1625 = vmatprep.subr.bf16.mxu0 %v1368
        %1626 = vmatpush1.bf16.msra.mxu0 %v1367
        %1627 = vmatprep.subr.bf16.mxu0 %v1364
        %1628 = vmatpush1.bf16.msra.mxu0 %v1363
        %1629 = vmatprep.subr.bf16.mxu0 %v1360
        %1630 = vmatpush1.bf16.msra.mxu0 %v1359
        %1631 = vmatprep.subr.bf16.mxu0 %v1420
        %1632 = vmatpush2.bf16.msra.mxu0 %v1419
        %1633 = vmatprep.subr.bf16.mxu0 %v1416
        %1634 = vmatpush2.bf16.msra.mxu0 %v1415
        %1635 = vmatprep.subr.bf16.mxu0 %v1412
        %1636 = vmatpush2.bf16.msra.mxu0 %v1411
        %1637 = vmatprep.subr.bf16.mxu0 %v1408
        %1638 = vmatpush2.bf16.msra.mxu0 %v1407
        %1639 = vmatprep.subr.bf16.mxu0 %v1404
        %1640 = vmatpush2.bf16.msra.mxu0 %v1403
        %1641 = vmatprep.subr.bf16.mxu0 %v1400
        %1642 = vmatpush2.bf16.msra.mxu0 %v1399
        %1643 = vmatprep.subr.bf16.mxu0 %v1396
        %1644 = vmatpush2.bf16.msra.mxu0 %v1395
        %1645 = vmatprep.subr.bf16.mxu0 %v1392
        %1646 = vmatpush2.bf16.msra.mxu0 %v1391
        %1647 = vmatprep.mubr.bf16.mxu0 %v816
        %1648 = vmatmul.mubr.bf16.gmra.mxu0 %v815
        %v1649 = vpop.f32.mrf.mxu0
        %v1650 = vadd.f32 0.0, %v1649
        %v1651 = vpop.f32.mrf.mxu0
        %v1652 = vadd.f32 0.0, %v1651
        %v1653 = vpop.f32.mrf.mxu0
        %v1654 = vadd.f32 0.0, %v1653
        %v1655 = vpop.f32.mrf.mxu0
        %v1656 = vadd.f32 0.0, %v1655
        %1657 = vmatprep.mubr.bf16.mxu0 %v820
        %1658 = vmatmul.mubr.bf16.gmra.mxu0 %v819
        %v1659 = vpop.f32.mrf.mxu0
        %v1660 = vadd.f32 0.0, %v1659
        %v1661 = vpop.f32.mrf.mxu0
        %v1662 = vadd.f32 0.0, %v1661
        %v1663 = vpop.f32.mrf.mxu0
        %v1664 = vadd.f32 0.0, %v1663
        %v1665 = vpop.f32.mrf.mxu0
        %v1666 = vadd.f32 0.0, %v1665
        %1667 = vmatprep.mubr.bf16.mxu0 %v824
        %1668 = vmatmul.mubr.bf16.gmra.mxu0 %v823
        %v1669 = vpop.f32.mrf.mxu0
        %v1670 = vadd.f32 0.0, %v1669
        %v1671 = vpop.f32.mrf.mxu0
        %v1672 = vadd.f32 0.0, %v1671
        %v1673 = vpop.f32.mrf.mxu0
        %v1674 = vadd.f32 0.0, %v1673
        %v1675 = vpop.f32.mrf.mxu0
        %v1676 = vadd.f32 0.0, %v1675
        %1677 = vmatprep.mubr.bf16.mxu0 %v828
        %1678 = vmatmul.mubr.bf16.gmra.mxu0 %v827
        %v1679 = vpop.f32.mrf.mxu0
        %v1680 = vadd.f32 0.0, %v1679
        %v1681 = vpop.f32.mrf.mxu0
        %v1682 = vadd.f32 0.0, %v1681
        %v1683 = vpop.f32.mrf.mxu0
        %v1684 = vadd.f32 0.0, %v1683
        %v1685 = vpop.f32.mrf.mxu0
        %v1686 = vadd.f32 0.0, %v1685
        %1687 = vmatprep.mubr.bf16.mxu0 %v832
        %1688 = vmatmul.mubr.bf16.gmra.mxu0 %v831
        %v1689 = vpop.f32.mrf.mxu0
        %v1690 = vadd.f32 0.0, %v1689
        %v1691 = vpop.f32.mrf.mxu0
        %v1692 = vadd.f32 0.0, %v1691
        %v1693 = vpop.f32.mrf.mxu0
        %v1694 = vadd.f32 0.0, %v1693
        %v1695 = vpop.f32.mrf.mxu0
        %v1696 = vadd.f32 0.0, %v1695
        %1697 = vmatprep.mubr.bf16.mxu0 %v836
        %1698 = vmatmul.mubr.bf16.gmra.mxu0 %v835
        %v1699 = vpop.f32.mrf.mxu0
        %v1700 = vadd.f32 0.0, %v1699
        %v1701 = vpop.f32.mrf.mxu0
        %v1702 = vadd.f32 0.0, %v1701
        %v1703 = vpop.f32.mrf.mxu0
        %v1704 = vadd.f32 0.0, %v1703
        %v1705 = vpop.f32.mrf.mxu0
        %v1706 = vadd.f32 0.0, %v1705
        %1707 = vmatprep.mubr.bf16.mxu0 %v840
        %1708 = vmatmul.mubr.bf16.gmra.mxu0 %v839
        %v1709 = vpop.f32.mrf.mxu0
        %v1710 = vadd.f32 0.0, %v1709
        %v1711 = vpop.f32.mrf.mxu0
        %v1712 = vadd.f32 0.0, %v1711
        %v1713 = vpop.f32.mrf.mxu0
        %v1714 = vadd.f32 0.0, %v1713
        %v1715 = vpop.f32.mrf.mxu0
        %v1716 = vadd.f32 0.0, %v1715
        %1717 = vmatprep.mubr.bf16.mxu0 %v844
        %1718 = vmatmul.mubr.bf16.gmra.mxu0 %v843
        %v1719 = vpop.f32.mrf.mxu0
        %v1720 = vadd.f32 0.0, %v1719
        %v1721 = vpop.f32.mrf.mxu0
        %v1722 = vadd.f32 0.0, %v1721
        %v1723 = vpop.f32.mrf.mxu0
        %v1724 = vadd.f32 0.0, %v1723
        %v1725 = vpop.f32.mrf.mxu0
        %v1726 = vadd.f32 0.0, %v1725
        %1727 = vdwg.mxu0
        %1728 = vmatprep.subr.bf16.mxu0 %v1452
        %1729 = vmatpush1.bf16.msra.mxu0 %v1451
        %1730 = vmatprep.subr.bf16.mxu0 %v1448
        %1731 = vmatpush1.bf16.msra.mxu0 %v1447
        %1732 = vmatprep.subr.bf16.mxu0 %v1444
        %1733 = vmatpush1.bf16.msra.mxu0 %v1443
        %1734 = vmatprep.subr.bf16.mxu0 %v1440
        %1735 = vmatpush1.bf16.msra.mxu0 %v1439
        %1736 = vmatprep.subr.bf16.mxu0 %v1436
        %1737 = vmatpush1.bf16.msra.mxu0 %v1435
        %1738 = vmatprep.subr.bf16.mxu0 %v1432
        %1739 = vmatpush1.bf16.msra.mxu0 %v1431
        %1740 = vmatprep.subr.bf16.mxu0 %v1428
        %1741 = vmatpush1.bf16.msra.mxu0 %v1427
        %1742 = vmatprep.subr.bf16.mxu0 %v1424
        %1743 = vmatpush1.bf16.msra.mxu0 %v1423
        %1744 = vmatprep.subr.bf16.mxu0 %v1484
        %1745 = vmatpush2.bf16.msra.mxu0 %v1483
        %1746 = vmatprep.subr.bf16.mxu0 %v1480
        %1747 = vmatpush2.bf16.msra.mxu0 %v1479
        %1748 = vmatprep.subr.bf16.mxu0 %v1476
        %1749 = vmatpush2.bf16.msra.mxu0 %v1475
        %1750 = vmatprep.subr.bf16.mxu0 %v1472
        %1751 = vmatpush2.bf16.msra.mxu0 %v1471
        %1752 = vmatprep.subr.bf16.mxu0 %v1468
        %1753 = vmatpush2.bf16.msra.mxu0 %v1467
        %1754 = vmatprep.subr.bf16.mxu0 %v1464
        %1755 = vmatpush2.bf16.msra.mxu0 %v1463
        %1756 = vmatprep.subr.bf16.mxu0 %v1460
        %1757 = vmatpush2.bf16.msra.mxu0 %v1459
        %1758 = vmatprep.subr.bf16.mxu0 %v1456
        %1759 = vmatpush2.bf16.msra.mxu0 %v1455
        %1760 = vmatprep.mubr.bf16.mxu0 %v818
        %1761 = vmatmul.mubr.bf16.gmra.mxu0 %v817
        %v1762 = vpop.f32.mrf.mxu0
        %v1763 = vadd.f32 %v1650, %v1762
        %v1764 = vpop.f32.mrf.mxu0
        %v1765 = vadd.f32 %v1652, %v1764
        %v1766 = vpop.f32.mrf.mxu0
        %v1767 = vadd.f32 %v1654, %v1766
        %v1768 = vpop.f32.mrf.mxu0
        %v1769 = vadd.f32 %v1656, %v1768
        %1770 = vmatprep.mubr.bf16.mxu0 %v822
        %1771 = vmatmul.mubr.bf16.gmra.mxu0 %v821
        %v1772 = vpop.f32.mrf.mxu0
        %v1773 = vadd.f32 %v1660, %v1772
        %v1774 = vpop.f32.mrf.mxu0
        %v1775 = vadd.f32 %v1662, %v1774
        %v1776 = vpop.f32.mrf.mxu0
        %v1777 = vadd.f32 %v1664, %v1776
        %v1778 = vpop.f32.mrf.mxu0
        %v1779 = vadd.f32 %v1666, %v1778
        %1780 = vmatprep.mubr.bf16.mxu0 %v826
        %1781 = vmatmul.mubr.bf16.gmra.mxu0 %v825
        %v1782 = vpop.f32.mrf.mxu0
        %v1783 = vadd.f32 %v1670, %v1782
        %v1784 = vpop.f32.mrf.mxu0
        %v1785 = vadd.f32 %v1672, %v1784
        %v1786 = vpop.f32.mrf.mxu0
        %v1787 = vadd.f32 %v1674, %v1786
        %v1788 = vpop.f32.mrf.mxu0
        %v1789 = vadd.f32 %v1676, %v1788
        %1790 = vmatprep.mubr.bf16.mxu0 %v830
        %1791 = vmatmul.mubr.bf16.gmra.mxu0 %v829
        %v1792 = vpop.f32.mrf.mxu0
        %v1793 = vadd.f32 %v1680, %v1792
        %v1794 = vpop.f32.mrf.mxu0
        %v1795 = vadd.f32 %v1682, %v1794
        %v1796 = vpop.f32.mrf.mxu0
        %v1797 = vadd.f32 %v1684, %v1796
        %v1798 = vpop.f32.mrf.mxu0
        %v1799 = vadd.f32 %v1686, %v1798
        %1800 = vmatprep.mubr.bf16.mxu0 %v834
        %1801 = vmatmul.mubr.bf16.gmra.mxu0 %v833
        %v1802 = vpop.f32.mrf.mxu0
        %v1803 = vadd.f32 %v1690, %v1802
        %v1804 = vpop.f32.mrf.mxu0
        %v1805 = vadd.f32 %v1692, %v1804
        %v1806 = vpop.f32.mrf.mxu0
        %v1807 = vadd.f32 %v1694, %v1806
        %v1808 = vpop.f32.mrf.mxu0
        %v1809 = vadd.f32 %v1696, %v1808
        %1810 = vmatprep.mubr.bf16.mxu0 %v838
        %1811 = vmatmul.mubr.bf16.gmra.mxu0 %v837
        %v1812 = vpop.f32.mrf.mxu0
        %v1813 = vadd.f32 %v1700, %v1812
        %v1814 = vpop.f32.mrf.mxu0
        %v1815 = vadd.f32 %v1702, %v1814
        %v1816 = vpop.f32.mrf.mxu0
        %v1817 = vadd.f32 %v1704, %v1816
        %v1818 = vpop.f32.mrf.mxu0
        %v1819 = vadd.f32 %v1706, %v1818
        %1820 = vmatprep.mubr.bf16.mxu0 %v842
        %1821 = vmatmul.mubr.bf16.gmra.mxu0 %v841
        %v1822 = vpop.f32.mrf.mxu0
        %v1823 = vadd.f32 %v1710, %v1822
        %v1824 = vpop.f32.mrf.mxu0
        %v1825 = vadd.f32 %v1712, %v1824
        %v1826 = vpop.f32.mrf.mxu0
        %v1827 = vadd.f32 %v1714, %v1826
        %v1828 = vpop.f32.mrf.mxu0
        %v1829 = vadd.f32 %v1716, %v1828
        %1830 = vmatprep.mubr.bf16.mxu0 %v846
        %1831 = vmatmul.mubr.bf16.gmra.mxu0 %v845
        %v1832 = vpop.f32.mrf.mxu0
        %v1833 = vadd.f32 %v1720, %v1832
        %v1834 = vpop.f32.mrf.mxu0
        %v1835 = vadd.f32 %v1722, %v1834
        %v1836 = vpop.f32.mrf.mxu0
        %v1837 = vadd.f32 %v1724, %v1836
        %v1838 = vpop.f32.mrf.mxu0
        %v1839 = vadd.f32 %v1726, %v1838
        %1840 = vdwg.mxu0
        %1841 = vmatprep.subr.bf16.mxu0 %v1390
        %1842 = vmatpush1.bf16.msra.mxu0 %v1389
        %1843 = vmatprep.subr.bf16.mxu0 %v1386
        %1844 = vmatpush1.bf16.msra.mxu0 %v1385
        %1845 = vmatprep.subr.bf16.mxu0 %v1382
        %1846 = vmatpush1.bf16.msra.mxu0 %v1381
        %1847 = vmatprep.subr.bf16.mxu0 %v1378
        %1848 = vmatpush1.bf16.msra.mxu0 %v1377
        %1849 = vmatprep.subr.bf16.mxu0 %v1374
        %1850 = vmatpush1.bf16.msra.mxu0 %v1373
        %1851 = vmatprep.subr.bf16.mxu0 %v1370
        %1852 = vmatpush1.bf16.msra.mxu0 %v1369
        %1853 = vmatprep.subr.bf16.mxu0 %v1366
        %1854 = vmatpush1.bf16.msra.mxu0 %v1365
        %1855 = vmatprep.subr.bf16.mxu0 %v1362
        %1856 = vmatpush1.bf16.msra.mxu0 %v1361
        %1857 = vmatprep.subr.bf16.mxu0 %v1422
        %1858 = vmatpush2.bf16.msra.mxu0 %v1421
        %1859 = vmatprep.subr.bf16.mxu0 %v1418
        %1860 = vmatpush2.bf16.msra.mxu0 %v1417
        %1861 = vmatprep.subr.bf16.mxu0 %v1414
        %1862 = vmatpush2.bf16.msra.mxu0 %v1413
        %1863 = vmatprep.subr.bf16.mxu0 %v1410
        %1864 = vmatpush2.bf16.msra.mxu0 %v1409
        %1865 = vmatprep.subr.bf16.mxu0 %v1406
        %1866 = vmatpush2.bf16.msra.mxu0 %v1405
        %1867 = vmatprep.subr.bf16.mxu0 %v1402
        %1868 = vmatpush2.bf16.msra.mxu0 %v1401
        %1869 = vmatprep.subr.bf16.mxu0 %v1398
        %1870 = vmatpush2.bf16.msra.mxu0 %v1397
        %1871 = vmatprep.subr.bf16.mxu0 %v1394
        %1872 = vmatpush2.bf16.msra.mxu0 %v1393
        %1873 = vmatprep.mubr.bf16.mxu0 %v816
        %1874 = vmatmul.mubr.bf16.gmra.mxu0 %v815
        %v1875 = vpop.f32.mrf.mxu0
        %v1876 = vadd.f32 0.0, %v1875
        %v1877 = vpop.f32.mrf.mxu0
        %v1878 = vadd.f32 0.0, %v1877
        %v1879 = vpop.f32.mrf.mxu0
        %v1880 = vadd.f32 0.0, %v1879
        %v1881 = vpop.f32.mrf.mxu0
        %v1882 = vadd.f32 0.0, %v1881
        %1883 = vmatprep.mubr.bf16.mxu0 %v820
        %1884 = vmatmul.mubr.bf16.gmra.mxu0 %v819
        %v1885 = vpop.f32.mrf.mxu0
        %v1886 = vadd.f32 0.0, %v1885
        %v1887 = vpop.f32.mrf.mxu0
        %v1888 = vadd.f32 0.0, %v1887
        %v1889 = vpop.f32.mrf.mxu0
        %v1890 = vadd.f32 0.0, %v1889
        %v1891 = vpop.f32.mrf.mxu0
        %v1892 = vadd.f32 0.0, %v1891
        %1893 = vmatprep.mubr.bf16.mxu0 %v824
        %1894 = vmatmul.mubr.bf16.gmra.mxu0 %v823
        %v1895 = vpop.f32.mrf.mxu0
        %v1896 = vadd.f32 0.0, %v1895
        %v1897 = vpop.f32.mrf.mxu0
        %v1898 = vadd.f32 0.0, %v1897
        %v1899 = vpop.f32.mrf.mxu0
        %v1900 = vadd.f32 0.0, %v1899
        %v1901 = vpop.f32.mrf.mxu0
        %v1902 = vadd.f32 0.0, %v1901
        %1903 = vmatprep.mubr.bf16.mxu0 %v828
        %1904 = vmatmul.mubr.bf16.gmra.mxu0 %v827
        %v1905 = vpop.f32.mrf.mxu0
        %v1906 = vadd.f32 0.0, %v1905
        %v1907 = vpop.f32.mrf.mxu0
        %v1908 = vadd.f32 0.0, %v1907
        %v1909 = vpop.f32.mrf.mxu0
        %v1910 = vadd.f32 0.0, %v1909
        %v1911 = vpop.f32.mrf.mxu0
        %v1912 = vadd.f32 0.0, %v1911
        %1913 = vmatprep.mubr.bf16.mxu0 %v832
        %1914 = vmatmul.mubr.bf16.gmra.mxu0 %v831
        %v1915 = vpop.f32.mrf.mxu0
        %v1916 = vadd.f32 0.0, %v1915
        %v1917 = vpop.f32.mrf.mxu0
        %v1918 = vadd.f32 0.0, %v1917
        %v1919 = vpop.f32.mrf.mxu0
        %v1920 = vadd.f32 0.0, %v1919
        %v1921 = vpop.f32.mrf.mxu0
        %v1922 = vadd.f32 0.0, %v1921
        %1923 = vmatprep.mubr.bf16.mxu0 %v836
        %1924 = vmatmul.mubr.bf16.gmra.mxu0 %v835
        %v1925 = vpop.f32.mrf.mxu0
        %v1926 = vadd.f32 0.0, %v1925
        %v1927 = vpop.f32.mrf.mxu0
        %v1928 = vadd.f32 0.0, %v1927
        %v1929 = vpop.f32.mrf.mxu0
        %v1930 = vadd.f32 0.0, %v1929
        %v1931 = vpop.f32.mrf.mxu0
        %v1932 = vadd.f32 0.0, %v1931
        %1933 = vmatprep.mubr.bf16.mxu0 %v840
        %1934 = vmatmul.mubr.bf16.gmra.mxu0 %v839
        %v1935 = vpop.f32.mrf.mxu0
        %v1936 = vadd.f32 0.0, %v1935
        %v1937 = vpop.f32.mrf.mxu0
        %v1938 = vadd.f32 0.0, %v1937
        %v1939 = vpop.f32.mrf.mxu0
        %v1940 = vadd.f32 0.0, %v1939
        %v1941 = vpop.f32.mrf.mxu0
        %v1942 = vadd.f32 0.0, %v1941
        %1943 = vmatprep.mubr.bf16.mxu0 %v844
        %1944 = vmatmul.mubr.bf16.gmra.mxu0 %v843
        %v1945 = vpop.f32.mrf.mxu0
        %v1946 = vadd.f32 0.0, %v1945
        %v1947 = vpop.f32.mrf.mxu0
        %v1948 = vadd.f32 0.0, %v1947
        %v1949 = vpop.f32.mrf.mxu0
        %v1950 = vadd.f32 0.0, %v1949
        %v1951 = vpop.f32.mrf.mxu0
        %v1952 = vadd.f32 0.0, %v1951
        %1953 = vdwg.mxu0
        %1954 = vmatprep.subr.bf16.mxu0 %v1454
        %1955 = vmatpush1.bf16.msra.mxu0 %v1453
        %1956 = vmatprep.subr.bf16.mxu0 %v1450
        %1957 = vmatpush1.bf16.msra.mxu0 %v1449
        %1958 = vmatprep.subr.bf16.mxu0 %v1446
        %1959 = vmatpush1.bf16.msra.mxu0 %v1445
        %1960 = vmatprep.subr.bf16.mxu0 %v1442
        %1961 = vmatpush1.bf16.msra.mxu0 %v1441
        %1962 = vmatprep.subr.bf16.mxu0 %v1438
        %1963 = vmatpush1.bf16.msra.mxu0 %v1437
        %1964 = vmatprep.subr.bf16.mxu0 %v1434
        %1965 = vmatpush1.bf16.msra.mxu0 %v1433
        %1966 = vmatprep.subr.bf16.mxu0 %v1430
        %1967 = vmatpush1.bf16.msra.mxu0 %v1429
        %1968 = vmatprep.subr.bf16.mxu0 %v1426
        %1969 = vmatpush1.bf16.msra.mxu0 %v1425
        %1970 = vmatprep.subr.bf16.mxu0 %v1486
        %1971 = vmatpush2.bf16.msra.mxu0 %v1485
        %1972 = vmatprep.subr.bf16.mxu0 %v1482
        %1973 = vmatpush2.bf16.msra.mxu0 %v1481
        %1974 = vmatprep.subr.bf16.mxu0 %v1478
        %1975 = vmatpush2.bf16.msra.mxu0 %v1477
        %1976 = vmatprep.subr.bf16.mxu0 %v1474
        %1977 = vmatpush2.bf16.msra.mxu0 %v1473
        %1978 = vmatprep.subr.bf16.mxu0 %v1470
        %1979 = vmatpush2.bf16.msra.mxu0 %v1469
        %1980 = vmatprep.subr.bf16.mxu0 %v1466
        %1981 = vmatpush2.bf16.msra.mxu0 %v1465
        %1982 = vmatprep.subr.bf16.mxu0 %v1462
        %1983 = vmatpush2.bf16.msra.mxu0 %v1461
        %1984 = vmatprep.subr.bf16.mxu0 %v1458
        %1985 = vmatpush2.bf16.msra.mxu0 %v1457
        %1986 = vmatprep.mubr.bf16.mxu0 %v818
        %1987 = vmatmul.mubr.bf16.gmra.mxu0 %v817
        %v1988 = vpop.f32.mrf.mxu0
        %v1989 = vadd.f32 %v1876, %v1988
        %v1990 = vpop.f32.mrf.mxu0
        %v1991 = vadd.f32 %v1878, %v1990
        %v1992 = vpop.f32.mrf.mxu0
        %v1993 = vadd.f32 %v1880, %v1992
        %v1994 = vpop.f32.mrf.mxu0
        %v1995 = vadd.f32 %v1882, %v1994
        %1996 = vmatprep.mubr.bf16.mxu0 %v822
        %1997 = vmatmul.mubr.bf16.gmra.mxu0 %v821
        %v1998 = vpop.f32.mrf.mxu0
        %v1999 = vadd.f32 %v1886, %v1998
        %v2000 = vpop.f32.mrf.mxu0
        %v2001 = vadd.f32 %v1888, %v2000
        %v2002 = vpop.f32.mrf.mxu0
        %v2003 = vadd.f32 %v1890, %v2002
        %v2004 = vpop.f32.mrf.mxu0
        %v2005 = vadd.f32 %v1892, %v2004
        %2006 = vmatprep.mubr.bf16.mxu0 %v826
        %2007 = vmatmul.mubr.bf16.gmra.mxu0 %v825
        %v2008 = vpop.f32.mrf.mxu0
        %v2009 = vadd.f32 %v1896, %v2008
        %v2010 = vpop.f32.mrf.mxu0
        %v2011 = vadd.f32 %v1898, %v2010
        %v2012 = vpop.f32.mrf.mxu0
        %v2013 = vadd.f32 %v1900, %v2012
        %v2014 = vpop.f32.mrf.mxu0
        %v2015 = vadd.f32 %v1902, %v2014
        %2016 = vmatprep.mubr.bf16.mxu0 %v830
        %2017 = vmatmul.mubr.bf16.gmra.mxu0 %v829
        %v2018 = vpop.f32.mrf.mxu0
        %v2019 = vadd.f32 %v1906, %v2018
        %v2020 = vpop.f32.mrf.mxu0
        %v2021 = vadd.f32 %v1908, %v2020
        %v2022 = vpop.f32.mrf.mxu0
        %v2023 = vadd.f32 %v1910, %v2022
        %v2024 = vpop.f32.mrf.mxu0
        %v2025 = vadd.f32 %v1912, %v2024
        %2026 = vmatprep.mubr.bf16.mxu0 %v834
        %2027 = vmatmul.mubr.bf16.gmra.mxu0 %v833
        %v2028 = vpop.f32.mrf.mxu0
        %v2029 = vadd.f32 %v1916, %v2028
        %v2030 = vpop.f32.mrf.mxu0
        %v2031 = vadd.f32 %v1918, %v2030
        %v2032 = vpop.f32.mrf.mxu0
        %v2033 = vadd.f32 %v1920, %v2032
        %v2034 = vpop.f32.mrf.mxu0
        %v2035 = vadd.f32 %v1922, %v2034
        %2036 = vmatprep.mubr.bf16.mxu0 %v838
        %2037 = vmatmul.mubr.bf16.gmra.mxu0 %v837
        %v2038 = vpop.f32.mrf.mxu0
        %v2039 = vadd.f32 %v1926, %v2038
        %v2040 = vpop.f32.mrf.mxu0
        %v2041 = vadd.f32 %v1928, %v2040
        %v2042 = vpop.f32.mrf.mxu0
        %v2043 = vadd.f32 %v1930, %v2042
        %v2044 = vpop.f32.mrf.mxu0
        %v2045 = vadd.f32 %v1932, %v2044
        %2046 = vmatprep.mubr.bf16.mxu0 %v842
        %2047 = vmatmul.mubr.bf16.gmra.mxu0 %v841
        %v2048 = vpop.f32.mrf.mxu0
        %v2049 = vadd.f32 %v1936, %v2048
        %v2050 = vpop.f32.mrf.mxu0
        %v2051 = vadd.f32 %v1938, %v2050
        %v2052 = vpop.f32.mrf.mxu0
        %v2053 = vadd.f32 %v1940, %v2052
        %v2054 = vpop.f32.mrf.mxu0
        %v2055 = vadd.f32 %v1942, %v2054
        %2056 = vmatprep.mubr.bf16.mxu0 %v846
        %2057 = vmatmul.mubr.bf16.gmra.mxu0 %v845
        %v2058 = vpop.f32.mrf.mxu0
        %v2059 = vadd.f32 %v1946, %v2058
        %v2060 = vpop.f32.mrf.mxu0
        %v2061 = vadd.f32 %v1948, %v2060
        %v2062 = vpop.f32.mrf.mxu0
        %v2063 = vadd.f32 %v1950, %v2062
        %v2064 = vpop.f32.mrf.mxu0
        %v2065 = vadd.f32 %v1952, %v2064
        %2066 = vdwg.mxu0
        %2067 = vst [vmem:[%s265] sm:$0xff] %v1763
        %2068 = vst [vmem:[%s265 + $0x8] sm:$0xff] %v1765
        %2069 = vst [vmem:[%s265 + $0x10] sm:$0xff] %v1989
        %2070 = vst [vmem:[%s265 + $0x18] sm:$0xff] %v1991
        %2071 = vst [vmem:[%s265 + $0x20] sm:$0xff] %v1767
        %2072 = vst [vmem:[%s265 + $0x28] sm:$0xff] %v1769
        %2073 = vst [vmem:[%s265 + $0x30] sm:$0xff] %v1993
        %2074 = vst [vmem:[%s265 + $0x38] sm:$0xff] %v1995
        %2075 = vst [vmem:[%s265 + $0x40] sm:$0xff] %v1773
        %2076 = vst [vmem:[%s265 + $0x48] sm:$0xff] %v1775
        %2077 = vst [vmem:[%s265 + $0x50] sm:$0xff] %v1999
        %2078 = vst [vmem:[%s265 + $0x58] sm:$0xff] %v2001
        %2079 = vst [vmem:[%s265 + $0x60] sm:$0xff] %v1777
        %2080 = vst [vmem:[%s265 + $0x68] sm:$0xff] %v1779
        %2081 = vst [vmem:[%s265 + $0x70] sm:$0xff] %v2003
        %2082 = vst [vmem:[%s265 + $0x78] sm:$0xff] %v2005
        %2083 = vst [vmem:[%s265 + $0x80] sm:$0xff] %v1783
        %2084 = vst [vmem:[%s265 + $0x88] sm:$0xff] %v1785
        %2085 = vst [vmem:[%s265 + $0x90] sm:$0xff] %v2009
        %2086 = vst [vmem:[%s265 + $0x98] sm:$0xff] %v2011
        %2087 = vst [vmem:[%s265 + $0xa0] sm:$0xff] %v1787
        %2088 = vst [vmem:[%s265 + $0xa8] sm:$0xff] %v1789
        %2089 = vst [vmem:[%s265 + $0xb0] sm:$0xff] %v2013
        %2090 = vst [vmem:[%s265 + $0xb8] sm:$0xff] %v2015
        %2091 = vst [vmem:[%s265 + $0xc0] sm:$0xff] %v1793
        %2092 = vst [vmem:[%s265 + $0xc8] sm:$0xff] %v1795
        %2093 = vst [vmem:[%s265 + $0xd0] sm:$0xff] %v2019
        %2094 = vst [vmem:[%s265 + $0xd8] sm:$0xff] %v2021
        %2095 = vst [vmem:[%s265 + $0xe0] sm:$0xff] %v1797
        %2096 = vst [vmem:[%s265 + $0xe8] sm:$0xff] %v1799
        %2097 = vst [vmem:[%s265 + $0xf0] sm:$0xff] %v2023
        %2098 = vst [vmem:[%s265 + $0xf8] sm:$0xff] %v2025
        %2099 = vst [vmem:[%s265 + $0x100] sm:$0xff] %v1803
        %2100 = vst [vmem:[%s265 + $0x108] sm:$0xff] %v1805
        %2101 = vst [vmem:[%s265 + $0x110] sm:$0xff] %v2029
        %2102 = vst [vmem:[%s265 + $0x118] sm:$0xff] %v2031
        %2103 = vst [vmem:[%s265 + $0x120] sm:$0xff] %v1807
        %2104 = vst [vmem:[%s265 + $0x128] sm:$0xff] %v1809
        %2105 = vst [vmem:[%s265 + $0x130] sm:$0xff] %v2033
        %2106 = vst [vmem:[%s265 + $0x138] sm:$0xff] %v2035
        %2107 = vst [vmem:[%s265 + $0x140] sm:$0xff] %v1813
        %2108 = vst [vmem:[%s265 + $0x148] sm:$0xff] %v1815
        %2109 = vst [vmem:[%s265 + $0x150] sm:$0xff] %v2039
        %2110 = vst [vmem:[%s265 + $0x158] sm:$0xff] %v2041
        %2111 = vst [vmem:[%s265 + $0x160] sm:$0xff] %v1817
        %2112 = vst [vmem:[%s265 + $0x168] sm:$0xff] %v1819
        %2113 = vst [vmem:[%s265 + $0x170] sm:$0xff] %v2043
        %2114 = vst [vmem:[%s265 + $0x178] sm:$0xff] %v2045
        %2115 = vst [vmem:[%s265 + $0x180] sm:$0xff] %v1823
        %2116 = vst [vmem:[%s265 + $0x188] sm:$0xff] %v1825
        %2117 = vst [vmem:[%s265 + $0x190] sm:$0xff] %v2049
        %2118 = vst [vmem:[%s265 + $0x198] sm:$0xff] %v2051
        %2119 = vst [vmem:[%s265 + $0x1a0] sm:$0xff] %v1827
        %2120 = vst [vmem:[%s265 + $0x1a8] sm:$0xff] %v1829
        %2121 = vst [vmem:[%s265 + $0x1b0] sm:$0xff] %v2053
        %2122 = vst [vmem:[%s265 + $0x1b8] sm:$0xff] %v2055
        %2123 = vst [vmem:[%s265 + $0x1c0] sm:$0xff] %v1833
        %2124 = vst [vmem:[%s265 + $0x1c8] sm:$0xff] %v1835
        %2125 = vst [vmem:[%s265 + $0x1d0] sm:$0xff] %v2059
        %2126 = vst [vmem:[%s265 + $0x1d8] sm:$0xff] %v2061
        %2127 = vst [vmem:[%s265 + $0x1e0] sm:$0xff] %v1837
        %2128 = vst [vmem:[%s265 + $0x1e8] sm:$0xff] %v1839
        %2129 = vst [vmem:[%s265 + $0x1f0] sm:$0xff] %v2063
        %2130 = vst [vmem:[%s265 + $0x1f8] sm:$0xff] %v2065
        %v2131 = vld [vmem:[%s5] sm:$0xf]
        %v2132 = vadd.f32 %v1763, %v1767
        %v2133 = vadd.f32 %v2132, %v1773
        %v2134 = vadd.f32 %v2133, %v1777
        %v2135 = vadd.f32 %v2134, %v1783
        %v2136 = vadd.f32 %v2135, %v1787
        %v2137 = vadd.f32 %v2136, %v1793
        %v2138 = vadd.f32 %v2137, %v1797
        %v2139 = vadd.f32 %v2138, %v1803
        %v2140 = vadd.f32 %v2139, %v1807
        %v2141 = vadd.f32 %v2140, %v1813
        %v2142 = vadd.f32 %v2141, %v1817
        %v2143 = vadd.f32 %v2142, %v1823
        %v2144 = vadd.f32 %v2143, %v1827
        %v2145 = vadd.f32 %v2144, %v1833
        %v2146 = vadd.f32 %v2145, %v1837
        %v2147 = vrot.slane %v2146, 4
        %v2148 = vadd.f32 %v2146, %v2147
        %v2149 = vrot.slane %v2148, 2
        %v2150 = vadd.f32 %v2148, %v2149
        %v2151 = vrot.slane %v2150, 1
        %v2152 = vadd.f32 %v2150, %v2151
        %v2153 = vadd.f32 %v1765, %v1769
        %v2154 = vadd.f32 %v2153, %v1775
        %v2155 = vadd.f32 %v2154, %v1779
        %v2156 = vadd.f32 %v2155, %v1785
        %v2157 = vadd.f32 %v2156, %v1789
        %v2158 = vadd.f32 %v2157, %v1795
        %v2159 = vadd.f32 %v2158, %v1799
        %v2160 = vadd.f32 %v2159, %v1805
        %v2161 = vadd.f32 %v2160, %v1809
        %v2162 = vadd.f32 %v2161, %v1815
        %v2163 = vadd.f32 %v2162, %v1819
        %v2164 = vadd.f32 %v2163, %v1825
        %v2165 = vadd.f32 %v2164, %v1829
        %v2166 = vadd.f32 %v2165, %v1835
        %v2167 = vadd.f32 %v2166, %v1839
        %v2168 = vrot.slane %v2167, 4
        %v2169 = vadd.f32 %v2167, %v2168
        %v2170 = vrot.slane %v2169, 2
        %v2171 = vadd.f32 %v2169, %v2170
        %v2172 = vrot.slane %v2171, 1
        %v2173 = vadd.f32 %v2171, %v2172
        %v2174 = vadd.f32 %v1989, %v1993
        %v2175 = vadd.f32 %v2174, %v1999
        %v2176 = vadd.f32 %v2175, %v2003
        %v2177 = vadd.f32 %v2176, %v2009
        %v2178 = vadd.f32 %v2177, %v2013
        %v2179 = vadd.f32 %v2178, %v2019
        %v2180 = vadd.f32 %v2179, %v2023
        %v2181 = vadd.f32 %v2180, %v2029
        %v2182 = vadd.f32 %v2181, %v2033
        %v2183 = vadd.f32 %v2182, %v2039
        %v2184 = vadd.f32 %v2183, %v2043
        %v2185 = vadd.f32 %v2184, %v2049
        %v2186 = vadd.f32 %v2185, %v2053
        %v2187 = vadd.f32 %v2186, %v2059
        %v2188 = vadd.f32 %v2187, %v2063
        %v2189 = vrot.slane %v2188, 4
        %v2190 = vadd.f32 %v2188, %v2189
        %v2191 = vrot.slane %v2190, 2
        %v2192 = vadd.f32 %v2190, %v2191
        %v2193 = vrot.slane %v2192, 1
        %v2194 = vadd.f32 %v2192, %v2193
        %v2195 = vadd.f32 %v1991, %v1995
        %v2196 = vadd.f32 %v2195, %v2001
        %v2197 = vadd.f32 %v2196, %v2005
        %v2198 = vadd.f32 %v2197, %v2011
        %v2199 = vadd.f32 %v2198, %v2015
        %v2200 = vadd.f32 %v2199, %v2021
        %v2201 = vadd.f32 %v2200, %v2025
        %v2202 = vadd.f32 %v2201, %v2031
        %v2203 = vadd.f32 %v2202, %v2035
        %v2204 = vadd.f32 %v2203, %v2041
        %v2205 = vadd.f32 %v2204, %v2045
        %v2206 = vadd.f32 %v2205, %v2051
        %v2207 = vadd.f32 %v2206, %v2055
        %v2208 = vadd.f32 %v2207, %v2061
        %v2209 = vadd.f32 %v2208, %v2065
        %v2210 = vrot.slane %v2209, 4
        %v2211 = vadd.f32 %v2209, %v2210
        %v2212 = vrot.slane %v2211, 2
        %v2213 = vadd.f32 %v2211, %v2212
        %v2214 = vrot.slane %v2213, 1
        %v2215 = vadd.f32 %v2213, %v2214
        %v2220 = vcombine.low %v2152, %v2173
        %v2221 = vcombine.low %v2194, %v2215
        %v2223 = vunpack.c.l.s4 1966171168
        %v2224 = vunpack.c.0.s8 %v2223
        %v2225 = vlaneseq
        %v2226 = vshrl.u32 %v2225, 7
        %v2227 = vsub.s32 %v2224, %v2226
        %v2228 = vrot.slane %v2220, %v2227
        %v2230 = vunpack.c.l.s4 1966171168
        %v2231 = vunpack.c.0.s8 %v2230
        %v2232 = vlaneseq
        %v2233 = vshrl.u32 %v2232, 7
        %v2234 = vsub.s32 %v2231, %v2233
        %v2235 = vrot.slane %v2221, %v2234
        %v2236 = vcombine.low %v2228, %v2235
        %v2238 = vunpack.c.l.s4 1966171168
        %v2239 = vunpack.c.0.s8 %v2238
        %v2240 = vlaneseq
        %v2241 = vshrl.u32 %v2240, 7
        %v2242 = vsub.s32 %v2239, %v2241
        %v2243 = vrot.slane %v2236, %v2242
        %v2245 = vadd.f32 %v2131, %v2243
        %v2246 = vlaneseq
        %vm2247 = vcmp.ge.s32.totalorder %v2246, 0
        %vm2248 = vcmp.lt.s32.totalorder %v2246, 512
        %vm2249 = vmand %vm2247, %vm2248
        %2250 = vst.msk [vmem:[%s5] sm:$0xf] %vm2249, %v2245
        %v2251 = vld [vmem:[%s6] sm:$0xf]
        %v2252 = vmul.f32 %v1763, %v1763
        %v2253 = vmul.f32 %v1765, %v1765
        %v2254 = vmul.f32 %v1989, %v1989
        %v2255 = vmul.f32 %v1991, %v1991
        %v2256 = vmul.f32 %v1767, %v1767
        %v2257 = vmul.f32 %v1769, %v1769
        %v2258 = vmul.f32 %v1993, %v1993
        %v2259 = vmul.f32 %v1995, %v1995
        %v2260 = vmul.f32 %v1773, %v1773
        %v2261 = vmul.f32 %v1775, %v1775
        %v2262 = vmul.f32 %v1999, %v1999
        %v2263 = vmul.f32 %v2001, %v2001
        %v2264 = vmul.f32 %v1777, %v1777
        %v2265 = vmul.f32 %v1779, %v1779
        %v2266 = vmul.f32 %v2003, %v2003
        %v2267 = vmul.f32 %v2005, %v2005
        %v2268 = vmul.f32 %v1783, %v1783
        %v2269 = vmul.f32 %v1785, %v1785
        %v2270 = vmul.f32 %v2009, %v2009
        %v2271 = vmul.f32 %v2011, %v2011
        %v2272 = vmul.f32 %v1787, %v1787
        %v2273 = vmul.f32 %v1789, %v1789
        %v2274 = vmul.f32 %v2013, %v2013
        %v2275 = vmul.f32 %v2015, %v2015
        %v2276 = vmul.f32 %v1793, %v1793
        %v2277 = vmul.f32 %v1795, %v1795
        %v2278 = vmul.f32 %v2019, %v2019
        %v2279 = vmul.f32 %v2021, %v2021
        %v2280 = vmul.f32 %v1797, %v1797
        %v2281 = vmul.f32 %v1799, %v1799
        %v2282 = vmul.f32 %v2023, %v2023
        %v2283 = vmul.f32 %v2025, %v2025
        %v2284 = vmul.f32 %v1803, %v1803
        %v2285 = vmul.f32 %v1805, %v1805
        %v2286 = vmul.f32 %v2029, %v2029
        %v2287 = vmul.f32 %v2031, %v2031
        %v2288 = vmul.f32 %v1807, %v1807
        %v2289 = vmul.f32 %v1809, %v1809
        %v2290 = vmul.f32 %v2033, %v2033
        %v2291 = vmul.f32 %v2035, %v2035
        %v2292 = vmul.f32 %v1813, %v1813
        %v2293 = vmul.f32 %v1815, %v1815
        %v2294 = vmul.f32 %v2039, %v2039
        %v2295 = vmul.f32 %v2041, %v2041
        %v2296 = vmul.f32 %v1817, %v1817
        %v2297 = vmul.f32 %v1819, %v1819
        %v2298 = vmul.f32 %v2043, %v2043
        %v2299 = vmul.f32 %v2045, %v2045
        %v2300 = vmul.f32 %v1823, %v1823
        %v2301 = vmul.f32 %v1825, %v1825
        %v2302 = vmul.f32 %v2049, %v2049
        %v2303 = vmul.f32 %v2051, %v2051
        %v2304 = vmul.f32 %v1827, %v1827
        %v2305 = vmul.f32 %v1829, %v1829
        %v2306 = vmul.f32 %v2053, %v2053
        %v2307 = vmul.f32 %v2055, %v2055
        %v2308 = vmul.f32 %v1833, %v1833
        %v2309 = vmul.f32 %v1835, %v1835
        %v2310 = vmul.f32 %v2059, %v2059
        %v2311 = vmul.f32 %v2061, %v2061
        %v2312 = vmul.f32 %v1837, %v1837
        %v2313 = vmul.f32 %v1839, %v1839
        %v2314 = vmul.f32 %v2063, %v2063
        %v2315 = vmul.f32 %v2065, %v2065
        %v2316 = vadd.f32 %v2252, %v2256
        %v2317 = vadd.f32 %v2316, %v2260
        %v2318 = vadd.f32 %v2317, %v2264
        %v2319 = vadd.f32 %v2318, %v2268
        %v2320 = vadd.f32 %v2319, %v2272
        %v2321 = vadd.f32 %v2320, %v2276
        %v2322 = vadd.f32 %v2321, %v2280
        %v2323 = vadd.f32 %v2322, %v2284
        %v2324 = vadd.f32 %v2323, %v2288
        %v2325 = vadd.f32 %v2324, %v2292
        %v2326 = vadd.f32 %v2325, %v2296
        %v2327 = vadd.f32 %v2326, %v2300
        %v2328 = vadd.f32 %v2327, %v2304
        %v2329 = vadd.f32 %v2328, %v2308
        %v2330 = vadd.f32 %v2329, %v2312
        %v2331 = vrot.slane %v2330, 4
        %v2332 = vadd.f32 %v2330, %v2331
        %v2333 = vrot.slane %v2332, 2
        %v2334 = vadd.f32 %v2332, %v2333
        %v2335 = vrot.slane %v2334, 1
        %v2336 = vadd.f32 %v2334, %v2335
        %v2337 = vadd.f32 %v2253, %v2257
        %v2338 = vadd.f32 %v2337, %v2261
        %v2339 = vadd.f32 %v2338, %v2265
        %v2340 = vadd.f32 %v2339, %v2269
        %v2341 = vadd.f32 %v2340, %v2273
        %v2342 = vadd.f32 %v2341, %v2277
        %v2343 = vadd.f32 %v2342, %v2281
        %v2344 = vadd.f32 %v2343, %v2285
        %v2345 = vadd.f32 %v2344, %v2289
        %v2346 = vadd.f32 %v2345, %v2293
        %v2347 = vadd.f32 %v2346, %v2297
        %v2348 = vadd.f32 %v2347, %v2301
        %v2349 = vadd.f32 %v2348, %v2305
        %v2350 = vadd.f32 %v2349, %v2309
        %v2351 = vadd.f32 %v2350, %v2313
        %v2352 = vrot.slane %v2351, 4
        %v2353 = vadd.f32 %v2351, %v2352
        %v2354 = vrot.slane %v2353, 2
        %v2355 = vadd.f32 %v2353, %v2354
        %v2356 = vrot.slane %v2355, 1
        %v2357 = vadd.f32 %v2355, %v2356
        %v2358 = vadd.f32 %v2254, %v2258
        %v2359 = vadd.f32 %v2358, %v2262
        %v2360 = vadd.f32 %v2359, %v2266
        %v2361 = vadd.f32 %v2360, %v2270
        %v2362 = vadd.f32 %v2361, %v2274
        %v2363 = vadd.f32 %v2362, %v2278
        %v2364 = vadd.f32 %v2363, %v2282
        %v2365 = vadd.f32 %v2364, %v2286
        %v2366 = vadd.f32 %v2365, %v2290
        %v2367 = vadd.f32 %v2366, %v2294
        %v2368 = vadd.f32 %v2367, %v2298
        %v2369 = vadd.f32 %v2368, %v2302
        %v2370 = vadd.f32 %v2369, %v2306
        %v2371 = vadd.f32 %v2370, %v2310
        %v2372 = vadd.f32 %v2371, %v2314
        %v2373 = vrot.slane %v2372, 4
        %v2374 = vadd.f32 %v2372, %v2373
        %v2375 = vrot.slane %v2374, 2
        %v2376 = vadd.f32 %v2374, %v2375
        %v2377 = vrot.slane %v2376, 1
        %v2378 = vadd.f32 %v2376, %v2377
        %v2379 = vadd.f32 %v2255, %v2259
        %v2380 = vadd.f32 %v2379, %v2263
        %v2381 = vadd.f32 %v2380, %v2267
        %v2382 = vadd.f32 %v2381, %v2271
        %v2383 = vadd.f32 %v2382, %v2275
        %v2384 = vadd.f32 %v2383, %v2279
        %v2385 = vadd.f32 %v2384, %v2283
        %v2386 = vadd.f32 %v2385, %v2287
        %v2387 = vadd.f32 %v2386, %v2291
        %v2388 = vadd.f32 %v2387, %v2295
        %v2389 = vadd.f32 %v2388, %v2299
        %v2390 = vadd.f32 %v2389, %v2303
        %v2391 = vadd.f32 %v2390, %v2307
        %v2392 = vadd.f32 %v2391, %v2311
        %v2393 = vadd.f32 %v2392, %v2315
        %v2394 = vrot.slane %v2393, 4
        %v2395 = vadd.f32 %v2393, %v2394
        %v2396 = vrot.slane %v2395, 2
        %v2397 = vadd.f32 %v2395, %v2396
        %v2398 = vrot.slane %v2397, 1
        %v2399 = vadd.f32 %v2397, %v2398
        %v2404 = vcombine.low %v2336, %v2357
        %v2405 = vcombine.low %v2378, %v2399
        %v2407 = vunpack.c.l.s4 1966171168
        %v2408 = vunpack.c.0.s8 %v2407
        %v2409 = vlaneseq
        %v2410 = vshrl.u32 %v2409, 7
        %v2411 = vsub.s32 %v2408, %v2410
        %v2412 = vrot.slane %v2404, %v2411
        %v2414 = vunpack.c.l.s4 1966171168
        %v2415 = vunpack.c.0.s8 %v2414
        %v2416 = vlaneseq
        %v2417 = vshrl.u32 %v2416, 7
        %v2418 = vsub.s32 %v2415, %v2417
        %v2419 = vrot.slane %v2405, %v2418
        %v2420 = vcombine.low %v2412, %v2419
        %v2422 = vunpack.c.l.s4 1966171168
        %v2423 = vunpack.c.0.s8 %v2422
        %v2424 = vlaneseq
        %v2425 = vshrl.u32 %v2424, 7
        %v2426 = vsub.s32 %v2423, %v2425
        %v2427 = vrot.slane %v2420, %v2426
        %v2429 = vadd.f32 %v2251, %v2427
        %2430 = vst.msk [vmem:[%s6] sm:$0xf] %vm2249, %v2429
        %s2431 = smul.u32 16, %s19
        %p2432 = scmp.lt.s32.totalorder %s2431, 31
        %s2433 = scalar_select %p2432, %s2431, 31
        %s2434 = smul.addr %s2433, 4
        %s2435 = smul.addr %s2434, 8
        %s2436 = scalar_lea.vmem %s4, %s2435
        // Predicated region
        $region45: #{decoder_forward.2} parent=35 // pred_check
          %p2437 = pneg %p126
        $region46: #{decoder_forward.2} parent=35 // pred_check_branch
          %2439 = sbr.rel (%p2437) target = $region48
        $region47: #{decoder_forward.2} parent=35 // pred_region
          %s2440 = smul.u32 16, %s19
        $region48: #{decoder_forward.2} parent=35 // pred_fallthru
          _
        // Predicated region
        $region49: #{decoder_forward.2} parent=35 // pred_check
          %p2441 = pneg %p147
        $region50: #{decoder_forward.2} parent=35 // pred_check_branch
          %2443 = sbr.rel (%p2441) target = $region52
        $region51: #{decoder_forward.2} parent=35 // pred_region
          _
        $region52: #{decoder_forward.2} parent=35 // pred_fallthru
          _
        // Predicated region
        $region53: #{decoder_forward.2} parent=35 // pred_check
          %p2444 = pneg %p168
        $region54: #{decoder_forward.2} parent=35 // pred_check_branch
          %2446 = sbr.rel (%p2444) target = $region56
        $region55: #{decoder_forward.2} parent=35 // pred_region
          _
        $region56: #{decoder_forward.2} parent=35 // pred_fallthru
          _
        // Predicated region
        $region57: #{decoder_forward.2} parent=35 // pred_check
          %p2447 = pneg %p147
        $region58: #{decoder_forward.2} parent=35 // pred_check_branch
          %2449 = sbr.rel (%p2447) target = $region60
        $region59: #{decoder_forward.2} parent=35 // pred_region
          _
        $region60: #{decoder_forward.2} parent=35 // pred_fallthru
          _
        // Predicated region
        $region61: #{decoder_forward.2} parent=35 // pred_check
          %p2450 = pneg %p168
        $region62: #{decoder_forward.2} parent=35 // pred_check_branch
          %2452 = sbr.rel (%p2450) target = $region64
        $region63: #{decoder_forward.2} parent=35 // pred_region
          _
        $region64: #{decoder_forward.2} parent=35 // pred_fallthru
          _
      $region36: #{decoder_forward.2} parent=5 // pred_fallthru
        _
      %p2453 = scmp.le.s32.totalorder 2, %s14
      // Predicated region
      $region65: #{decoder_forward.2} parent=5 // pred_check
        %p2454 = pneg %p2453
      $region66: #{decoder_forward.2} parent=5 // pred_check_branch
        %2456 = sbr.rel (%p2454) target = $region68
      $region67: #{decoder_forward.2} parent=5 // pred_region
        %s2457 = ssub.s32 %s14, 2
        // Predicated region
        $region69: #{decoder_forward.2} parent=67 // pred_check
          %p2458 = pneg %p132
        $region70: #{decoder_forward.2} parent=67 // pred_check_branch
          %2460 = sbr.rel (%p2458) target = $region72
        $region71: #{decoder_forward.2} parent=67 // pred_region
          %s2461 = smul.u32 16, %s20
          %p2462 = scmp.lt.s32.totalorder %s2461, 31
          %s2463 = scalar_select %p2462, %s2461, 31
          %s2464 = smul.addr %s2463, 4
          %s2465 = smul.addr %s2464, 8
          %s2466 = scalar_lea.vmem %s4, %s2465
        $region72: #{decoder_forward.2} parent=67 // pred_fallthru
          _
      $region68: #{decoder_forward.2} parent=5 // pred_fallthru
        _
    $region6: #{decoder_forward.2} parent=1 // loop_footer
      %s18 = sadd.s32 1, %s14
    $region7: #{decoder_forward.2} parent=1 // loop_footer_branch
      %13 = sbr.rel target = $region3
    $region8: #{decoder_forward.2} parent=1 // loop_exit
      _
    %2467 = vsyncpa [#allocation3], 1
    %s2468 = scalar_lea.sflag [#allocation3], 1
    %2469 = vsyncpa %s2468, 1

</llo_original>
